<compile_context>
chip_gen: v7x
topology: tpu7x:2x2x1
jax: 0.10.0
libtpu: 0.0.40
codegen_flags: <defaults>
</compile_context>

<pallas_src>
import numpy as np
import jax
import jax.numpy as jnp
from jax.experimental import pallas as pl
from jax.experimental.pallas import tpu as pltpu

N_GENES = 19264
PAD_TOKEN_ID = 19264            # pos_emb table has N_GENES + 2 rows
HIDDEN = 32
N_HEADS = 4
HEAD_DIM = HIDDEN // N_HEADS
FFN = 64
N_LAYERS = 2
N_CLASSES = 5
NEG_INF = -1e9
SEQ_BUCKET = 128                # gathered sequence length padded up to a multiple of this


# ----------------------------- fused layer kernel bodies -----------------------------

def _add_layernorm(x, r, g, b):
    h = x + r
    mu = jnp.mean(h, axis=-1, keepdims=True)
    var = jnp.mean(jnp.square(h - mu), axis=-1, keepdims=True)
    return (h - mu) * jax.lax.rsqrt(var + 1e-5) * g + b


def _layer_body(h, mask, wqkv, bqkv, wo, bo, ln1_g, ln1_b, w1, fb1, w2, fb2, ln2_g, ln2_b):
    """One post-norm transformer encoder layer on a single batch row.

    h: (S, D) residual stream; mask: (1, S) additive key-padding mask.
    """
    S = h.shape[0]
    scale = 1.0 / float(np.sqrt(HEAD_DIM))
    # Fused QKV projection: one lane-dense (S, 3D) matmul instead of three 32-wide ones.
    qkv = jnp.dot(h, wqkv, preferred_element_type=jnp.float32) + bqkv          # (S, 3D)
    attn = jnp.zeros((S, HIDDEN), jnp.float32)
    # TODO(synk): for realistic S (>~1k expressed genes) switch the (S,S) score to a
    # flash-style KV-tiled online softmax so it fits v5e's 16 MiB scoped VMEM.
    for hd in range(N_HEADS):                                                  # heads stay on lanes
        lo = hd * HEAD_DIM
        q = qkv[:, lo:lo + HEAD_DIM]
        k = qkv[:, HIDDEN + lo:HIDDEN + lo + HEAD_DIM]
        v = qkv[:, 2 * HIDDEN + lo:2 * HIDDEN + lo + HEAD_DIM]
        s = jnp.dot(q, k.T, preferred_element_type=jnp.float32) * scale        # (S, S)
        s = s + mask                                                           # key-padding mask
        s_max = jnp.max(s, axis=-1, keepdims=True)
        p = jnp.exp(s - s_max)
        p = p * pl.reciprocal(jnp.sum(p, axis=-1, keepdims=True), approx=True)  # EUP, frees VALU
        o_h = jnp.dot(p, v, preferred_element_type=jnp.float32)                # (S, Dh)
        # Concat-free output projection: concat_h(o_h) @ wo == sum_h o_h @ wo[rows of head h].
        attn = attn + jnp.dot(o_h, wo[lo:lo + HEAD_DIM, :],
                              preferred_element_type=jnp.float32)
    attn = attn + bo
    h = _add_layernorm(h, attn, ln1_g, ln1_b)
    ff = jnp.maximum(jnp.dot(h, w1, preferred_element_type=jnp.float32) + fb1, 0.0)
    ff = jnp.dot(ff, w2, preferred_element_type=jnp.float32) + fb2
    return _add_layernorm(h, ff, ln2_g, ln2_b)


def _encoder_layer_kernel(h_ref, mask_ref,
                          wqkv_ref, bqkv_ref, wo_ref, bo_ref, ln1g_ref, ln1b_ref,
                          w1_ref, b1_ref, w2_ref, b2_ref, ln2g_ref, ln2b_ref,
                          o_ref):
    o_ref[0] = _layer_body(h_ref[0], mask_ref[0],
                           wqkv_ref[...], bqkv_ref[...], wo_ref[...], bo_ref[...],
                           ln1g_ref[...], ln1b_ref[...],
                           w1_ref[...], b1_ref[...], w2_ref[...], b2_ref[...],
                           ln2g_ref[...], ln2b_ref[...])


def _embed_encoder_layer_kernel(vals_ref, pos_ref, mask_ref, tokw_ref, tokb_ref,
                                wqkv_ref, bqkv_ref, wo_ref, bo_ref, ln1g_ref, ln1b_ref,
                                w1_ref, b1_ref, w2_ref, b2_ref, ln2g_ref, ln2b_ref,
                                o_ref):
    # token_emb(value) + pos_emb fused into the first layer: (S,1)*(1,D) + (1,D) + (S,D).
    h = vals_ref[0] * tokw_ref[...] + tokb_ref[...] + pos_ref[0]
    o_ref[0] = _layer_body(h, mask_ref[0],
                           wqkv_ref[...], bqkv_ref[...], wo_ref[...], bo_ref[...],
                           ln1g_ref[...], ln1b_ref[...],
                           w1_ref[...], b1_ref[...], w2_ref[...], b2_ref[...],
                           ln2g_ref[...], ln2b_ref[...])


def _head_kernel(enc_ref, pmask_ref, mean_ref, var_ref, w1_ref, b1_ref, w2_ref, b2_ref, o_ref):
    enc = enc_ref[0]                                                   # (S, D)
    # Masked max-pool over sequence (padded rows excluded via additive -1e9 mask).
    pooled = jnp.max(enc + pmask_ref[0], axis=0, keepdims=True)        # (1, D)
    # BatchNorm1d(affine=False, eps=1e-6) with running statistics (inference mode).
    # TODO(synk): the PyTorch module in training mode would use batch statistics instead.
    h = (pooled - mean_ref[...]) * jax.lax.rsqrt(var_ref[...] + 1e-6)
    h = jnp.maximum(jnp.dot(h, w1_ref[...], preferred_element_type=jnp.float32) + b1_ref[...], 0.0)
    # TODO(synk): Dropout(p=0.5) treated as identity (inference).
    o_ref[0] = jnp.dot(h, w2_ref[...], preferred_element_type=jnp.float32) + b2_ref[...]


# ----------------------------- pallas_call wrappers -----------------------------

def _layer_weight_operands(layer):
    d, f = HIDDEN, FFN
    arrs = [layer["wqkv"], layer["bqkv"].reshape(1, 3 * d),
            layer["wo"], layer["bo"].reshape(1, d),
            layer["ln1_g"].reshape(1, d), layer["ln1_b"].reshape(1, d),
            layer["w1"], layer["b1"].reshape(1, f),
            layer["w2"], layer["b2"].reshape(1, d),
            layer["ln2_g"].reshape(1, d), layer["ln2_b"].reshape(1, d)]
    # Full-array blocks whose index never changes -> weights stay resident in VMEM.
    specs = [pl.BlockSpec(a.shape, lambda b: (0, 0)) for a in arrs]
    return arrs, specs


def encoder_layer(h, mask, layer):
    """h: (B, S, D); mask: (B, 1, S) additive. One fused transformer layer per pallas_call."""
    B, S, D = h.shape
    w_arrs, w_specs = _layer_weight_operands(layer)
    return pl.pallas_call(
        _encoder_layer_kernel,
        out_shape=jax.ShapeDtypeStruct((B, S, D), jnp.float32),
        grid=(B,),
        in_specs=[pl.BlockSpec((1, S, D), lambda b: (b, 0, 0)),
                  pl.BlockSpec((1, 1, S), lambda b: (b, 0, 0))] + w_specs,
        out_specs=pl.BlockSpec((1, S, D), lambda b: (b, 0, 0)),
        compiler_params=pltpu.CompilerParams(dimension_semantics=("parallel",)),
    )(h, mask, *w_arrs)


def embed_encoder_layer(vals, pos_emb, mask, tok_w, tok_b, layer):
    """vals: (B, S, 1); pos_emb: (B, S, D); mask: (B, 1, S). Embedding fused into layer 0."""
    B, S, D = pos_emb.shape
    w_arrs, w_specs = _layer_weight_operands(layer)
    return pl.pallas_call(
        _embed_encoder_layer_kernel,
        out_shape=jax.ShapeDtypeStruct((B, S, D), jnp.float32),
        grid=(B,),
        in_specs=[pl.BlockSpec((1, S, 1), lambda b: (b, 0, 0)),
                  pl.BlockSpec((1, S, D), lambda b: (b, 0, 0)),
                  pl.BlockSpec((1, 1, S), lambda b: (b, 0, 0)),
                  pl.BlockSpec((1, D), lambda b: (0, 0)),
                  pl.BlockSpec((1, D), lambda b: (0, 0))] + w_specs,
        out_specs=pl.BlockSpec((1, S, D), lambda b: (b, 0, 0)),
        compiler_params=pltpu.CompilerParams(dimension_semantics=("parallel",)),
    )(vals, pos_emb, mask, tok_w.reshape(1, D), tok_b.reshape(1, D), *w_arrs)


def classifier_head(enc, pool_mask, bn_mean, bn_var, w1, b1, w2, b2):
    """enc: (B, S, D), pool_mask: (B, S, 1) additive -> logits (B, C). Fused pool+BN+fc1."""
    B, S, D = enc.shape
    H1 = w1.shape[1]
    C = w2.shape[1]
    out = pl.pallas_call(
        _head_kernel,
        out_shape=jax.ShapeDtypeStruct((B, 1, C), jnp.float32),
        grid=(B,),
        in_specs=[pl.BlockSpec((1, S, D), lambda b: (b, 0, 0)),
                  pl.BlockSpec((1, S, 1), lambda b: (b, 0, 0)),
                  pl.BlockSpec((1, D), lambda b: (0, 0)),
                  pl.BlockSpec((1, D), lambda b: (0, 0)),
                  pl.BlockSpec((D, H1), lambda b: (0, 0)),
                  pl.BlockSpec((1, H1), lambda b: (0, 0)),
                  pl.BlockSpec((H1, C), lambda b: (0, 0)),
                  pl.BlockSpec((1, C), lambda b: (0, 0))],
        out_specs=pl.BlockSpec((1, 1, C), lambda b: (b, 0, 0)),
        compiler_params=pltpu.CompilerParams(dimension_semantics=("parallel",)),
    )(enc, pool_mask, bn_mean.reshape(1, D), bn_var.reshape(1, D),
      w1, b1.reshape(1, H1), w2, b2.reshape(1, C))
    return out.reshape(B, C)


# ----------------------------- JAX glue -----------------------------------

def gather_data(x, value_labels, pad_token_id, seq_bucket=SEQ_BUCKET):
    """scFoundation gatherData: pull expressed (>0) entries of each row to the front
    (original gene order), pad the sequence length up to a multiple of `seq_bucket`
    (lane-aligned blocks, fewer recompiles), return (values, gene_ids, padding_mask)."""
    B, G = x.shape
    counts = jnp.sum(value_labels, axis=1)
    # TODO(synk): host sync on the max count; a production path would use a fixed static bucket.
    max_num = int(jax.device_get(counts).max())
    S = min(G, seq_bucket * max(1, -(-max_num // seq_bucket)))
    order_key = jnp.where(value_labels, jnp.arange(G)[None, :], G)
    idx = jnp.argsort(order_key, axis=1)[:, :S]
    padding = jnp.arange(S)[None, :] >= counts[:, None]            # True where padded
    gathered = jnp.take_along_axis(x, idx, axis=1)
    # TODO(synk): the reference feeds pad_token_id through its auto-discretization token_emb;
    # with the synthetic linear token_emb we zero padded values instead.
    gathered = jnp.where(padding, 0.0, gathered)
    gene_ids = jnp.take_along_axis(
        jnp.broadcast_to(jnp.arange(G)[None, :], (B, G)), idx, axis=1)
    gene_ids = jnp.where(padding, pad_token_id, gene_ids)
    return gathered, gene_ids, padding


def init_params(key):
    ks = iter(jax.random.split(key, 32))

    def dense(k, i, o):
        return (jax.random.normal(k, (i, o), jnp.float32) / np.sqrt(i),
                jnp.zeros((o,), jnp.float32))

    p = {}
    p["tok_w"], p["tok_b"] = dense(next(ks), 1, HIDDEN)
    p["pos_table"] = jax.random.normal(next(ks), (N_GENES + 2, HIDDEN), jnp.float32) * 0.02
    layers = []
    for _ in range(N_LAYERS):
        l = {}
        l["wqkv"], l["bqkv"] = dense(next(ks), HIDDEN, 3 * HIDDEN)   # fused Q|K|V projection
        l["wo"], l["bo"] = dense(next(ks), HIDDEN, HIDDEN)
        l["ln1_g"] = jnp.ones((HIDDEN,), jnp.float32)
        l["ln1_b"] = jnp.zeros((HIDDEN,), jnp.float32)
        l["w1"], l["b1"] = dense(next(ks), HIDDEN, FFN)
        l["w2"], l["b2"] = dense(next(ks), FFN, HIDDEN)
        l["ln2_g"] = jnp.ones((HIDDEN,), jnp.float32)
        l["ln2_b"] = jnp.zeros((HIDDEN,), jnp.float32)
        layers.append(l)
    p["layers"] = layers
    # BatchNorm1d(affine=False) running statistics (PyTorch defaults).
    p["bn_mean"] = jnp.zeros((HIDDEN,), jnp.float32)
    p["bn_var"] = jnp.ones((HIDDEN,), jnp.float32)
    p["fc1_w"], p["fc1_b"] = dense(next(ks), HIDDEN, 512)
    p["fc2_w"], p["fc2_b"] = dense(next(ks), 512, N_CLASSES)
    return p


def forward(params, x):
    """x: (B, 19264) raw expression values -> logits (B, n_classes)."""
    value_labels = x > 0
    vals, pos_ids, x_padding = gather_data(x, value_labels, PAD_TOKEN_ID)
    B, S = vals.shape
    D = HIDDEN

    # position-embedding row gather (data-dependent) stays in plain JAX.
    pos_emb = jnp.take(params["pos_table"], pos_ids, axis=0)               # (B, S, D)
    add_mask = jnp.where(x_padding, NEG_INF, 0.0).astype(jnp.float32)      # (B, S)
    key_mask = add_mask.reshape(B, 1, S)

    layers = params["layers"]
    # token_emb + pos_emb fused into the first encoder layer (one pallas_call per layer).
    h = embed_encoder_layer(vals.reshape(B, S, 1).astype(jnp.float32), pos_emb, key_mask,
                            params["tok_w"], params["tok_b"], layers[0])
    for l in layers[1:]:
        h = encoder_layer(h, key_mask, l)

    # Masked max-pool over sequence + BatchNorm1d(affine=False, eps=1e-6) + fc1 head, one kernel.
    # TODO(synk): the reference max-pools over padded positions too; they are excluded here
    # because the synthetic token_emb has no learned pad embedding.
    logits = classifier_head(h, add_mask.reshape(B, S, 1),
                             params["bn_mean"], params["bn_var"],
                             params["fc1_w"], params["fc1_b"],
                             params["fc2_w"], params["fc2_b"])
    return logits


if __name__ == "__main__":
    key = jax.random.PRNGKey(0)
    kp, kg, kv = jax.random.split(key, 3)
    params = init_params(kp)

    B = 2
    n_expr = 12
    gene_idx = jax.random.choice(kg, N_GENES, shape=(B, n_expr), replace=False)
    expr_vals = jax.random.uniform(kv, (B, n_expr), minval=0.5, maxval=5.0)
    x = jnp.zeros((B, N_GENES), jnp.float32)
    x = x.at[jnp.arange(B)[:, None], gene_idx].set(expr_vals)
    # give row 1 fewer expressed genes so padding is exercised
    x = x.at[1, gene_idx[1, :4]].set(0.0)

    logits = forward(params, x)
    jax.block_until_ready(logits)
    assert logits.shape == (B, N_CLASSES), logits.shape
    assert bool(jnp.all(jnp.isfinite(logits)))
    print("KERNEL_OK")
</pallas_src>

<mosaic_0001>
module attributes {stable_mosaic.version = 11 : i64} {
  func.func @_embed_encoder_layer_kernel(%arg0: i32, %arg1: memref<1x128x1xf32, #tpu.memory_space<vmem>>, %arg2: memref<1x128x32xf32, #tpu.memory_space<vmem>>, %arg3: memref<1x1x128xf32, #tpu.memory_space<vmem>>, %arg4: memref<1x32xf32, #tpu.memory_space<vmem>>, %arg5: memref<1x32xf32, #tpu.memory_space<vmem>>, %arg6: memref<32x96xf32, #tpu.memory_space<vmem>>, %arg7: memref<1x96xf32, #tpu.memory_space<vmem>>, %arg8: memref<32x32xf32, #tpu.memory_space<vmem>>, %arg9: memref<1x32xf32, #tpu.memory_space<vmem>>, %arg10: memref<1x32xf32, #tpu.memory_space<vmem>>, %arg11: memref<1x32xf32, #tpu.memory_space<vmem>>, %arg12: memref<32x64xf32, #tpu.memory_space<vmem>>, %arg13: memref<1x64xf32, #tpu.memory_space<vmem>>, %arg14: memref<64x32xf32, #tpu.memory_space<vmem>>, %arg15: memref<1x32xf32, #tpu.memory_space<vmem>>, %arg16: memref<1x32xf32, #tpu.memory_space<vmem>>, %arg17: memref<1x32xf32, #tpu.memory_space<vmem>>, %arg18: memref<1x128x32xf32, #tpu.memory_space<vmem>>) attributes {dimension_semantics = [#tpu.dimension_semantics<parallel>], iteration_bounds = array<i64: 2>, scalar_prefetch = 0 : i64, scratch_operands = 0 : i64, tpu.core_type = #tpu.core_type<tc>, window_params = [{transform_indices = @transform_0, window_bounds = array<i64: 1, 128, 1>}, {transform_indices = @transform_1, window_bounds = array<i64: 1, 128, 32>}, {transform_indices = @transform_2, window_bounds = array<i64: 1, 1, 128>}, {pipeline_mode = #tpu.pipeline_mode<synchronous>, transform_indices = @transform_3, window_bounds = array<i64: 1, 32>}, {pipeline_mode = #tpu.pipeline_mode<synchronous>, transform_indices = @transform_4, window_bounds = array<i64: 1, 32>}, {pipeline_mode = #tpu.pipeline_mode<synchronous>, transform_indices = @transform_5, window_bounds = array<i64: 32, 96>}, {pipeline_mode = #tpu.pipeline_mode<synchronous>, transform_indices = @transform_6, window_bounds = array<i64: 1, 96>}, {pipeline_mode = #tpu.pipeline_mode<synchronous>, transform_indices = @transform_7, window_bounds = array<i64: 32, 32>}, {pipeline_mode = #tpu.pipeline_mode<synchronous>, transform_indices = @transform_8, window_bounds = array<i64: 1, 32>}, {pipeline_mode = #tpu.pipeline_mode<synchronous>, transform_indices = @transform_9, window_bounds = array<i64: 1, 32>}, {pipeline_mode = #tpu.pipeline_mode<synchronous>, transform_indices = @transform_10, window_bounds = array<i64: 1, 32>}, {pipeline_mode = #tpu.pipeline_mode<synchronous>, transform_indices = @transform_11, window_bounds = array<i64: 32, 64>}, {pipeline_mode = #tpu.pipeline_mode<synchronous>, transform_indices = @transform_12, window_bounds = array<i64: 1, 64>}, {pipeline_mode = #tpu.pipeline_mode<synchronous>, transform_indices = @transform_13, window_bounds = array<i64: 64, 32>}, {pipeline_mode = #tpu.pipeline_mode<synchronous>, transform_indices = @transform_14, window_bounds = array<i64: 1, 32>}, {pipeline_mode = #tpu.pipeline_mode<synchronous>, transform_indices = @transform_15, window_bounds = array<i64: 1, 32>}, {pipeline_mode = #tpu.pipeline_mode<synchronous>, transform_indices = @transform_16, window_bounds = array<i64: 1, 32>}, {transform_indices = @transform_17, window_bounds = array<i64: 1, 128, 32>}]} {
    %c0 = arith.constant 0 : index
    %c0_0 = arith.constant 0 : index
    %c0_1 = arith.constant 0 : index
    %0 = vector.load %arg1[%c0, %c0_0, %c0_1] : memref<1x128x1xf32, #tpu.memory_space<vmem>>, vector<1x128x1xf32>
    %1 = vector.shape_cast %0 : vector<1x128x1xf32> to vector<128x1xf32>
    %c0_2 = arith.constant 0 : index
    %c0_3 = arith.constant 0 : index
    %2 = vector.load %arg4[%c0_2, %c0_3] : memref<1x32xf32, #tpu.memory_space<vmem>>, vector<1x32xf32>
    %3 = vector.broadcast %1 : vector<128x1xf32> to vector<128x32xf32>
    %4 = vector.broadcast %2 : vector<1x32xf32> to vector<128x32xf32>
    %5 = arith.mulf %3, %4 : vector<128x32xf32>
    %c0_4 = arith.constant 0 : index
    %c0_5 = arith.constant 0 : index
    %6 = vector.load %arg5[%c0_4, %c0_5] : memref<1x32xf32, #tpu.memory_space<vmem>>, vector<1x32xf32>
    %7 = vector.broadcast %6 : vector<1x32xf32> to vector<128x32xf32>
    %8 = arith.addf %5, %7 : vector<128x32xf32>
    %c0_6 = arith.constant 0 : index
    %c0_7 = arith.constant 0 : index
    %c0_8 = arith.constant 0 : index
    %9 = vector.load %arg2[%c0_6, %c0_7, %c0_8] : memref<1x128x32xf32, #tpu.memory_space<vmem>>, vector<1x128x32xf32>
    %10 = vector.shape_cast %9 : vector<1x128x32xf32> to vector<128x32xf32>
    %11 = arith.addf %8, %10 : vector<128x32xf32>
    %c0_9 = arith.constant 0 : index
    %c0_10 = arith.constant 0 : index
    %c0_11 = arith.constant 0 : index
    %12 = vector.load %arg3[%c0_9, %c0_10, %c0_11] : memref<1x1x128xf32, #tpu.memory_space<vmem>>, vector<1x1x128xf32>
    %13 = vector.shape_cast %12 : vector<1x1x128xf32> to vector<1x128xf32>
    %c0_12 = arith.constant 0 : index
    %c0_13 = arith.constant 0 : index
    %14 = vector.load %arg6[%c0_12, %c0_13] : memref<32x96xf32, #tpu.memory_space<vmem>>, vector<32x96xf32>
    %c0_14 = arith.constant 0 : index
    %c0_15 = arith.constant 0 : index
    %15 = vector.load %arg7[%c0_14, %c0_15] : memref<1x96xf32, #tpu.memory_space<vmem>>, vector<1x96xf32>
    %c0_16 = arith.constant 0 : index
    %c0_17 = arith.constant 0 : index
    %16 = vector.load %arg8[%c0_16, %c0_17] : memref<32x32xf32, #tpu.memory_space<vmem>>, vector<32x32xf32>
    %c0_18 = arith.constant 0 : index
    %c0_19 = arith.constant 0 : index
    %17 = vector.load %arg9[%c0_18, %c0_19] : memref<1x32xf32, #tpu.memory_space<vmem>>, vector<1x32xf32>
    %c0_20 = arith.constant 0 : index
    %c0_21 = arith.constant 0 : index
    %18 = vector.load %arg10[%c0_20, %c0_21] : memref<1x32xf32, #tpu.memory_space<vmem>>, vector<1x32xf32>
    %c0_22 = arith.constant 0 : index
    %c0_23 = arith.constant 0 : index
    %19 = vector.load %arg11[%c0_22, %c0_23] : memref<1x32xf32, #tpu.memory_space<vmem>>, vector<1x32xf32>
    %c0_24 = arith.constant 0 : index
    %c0_25 = arith.constant 0 : index
    %20 = vector.load %arg12[%c0_24, %c0_25] : memref<32x64xf32, #tpu.memory_space<vmem>>, vector<32x64xf32>
    %c0_26 = arith.constant 0 : index
    %c0_27 = arith.constant 0 : index
    %21 = vector.load %arg13[%c0_26, %c0_27] : memref<1x64xf32, #tpu.memory_space<vmem>>, vector<1x64xf32>
    %c0_28 = arith.constant 0 : index
    %c0_29 = arith.constant 0 : index
    %22 = vector.load %arg14[%c0_28, %c0_29] : memref<64x32xf32, #tpu.memory_space<vmem>>, vector<64x32xf32>
    %c0_30 = arith.constant 0 : index
    %c0_31 = arith.constant 0 : index
    %23 = vector.load %arg15[%c0_30, %c0_31] : memref<1x32xf32, #tpu.memory_space<vmem>>, vector<1x32xf32>
    %c0_32 = arith.constant 0 : index
    %c0_33 = arith.constant 0 : index
    %24 = vector.load %arg16[%c0_32, %c0_33] : memref<1x32xf32, #tpu.memory_space<vmem>>, vector<1x32xf32>
    %c0_34 = arith.constant 0 : index
    %c0_35 = arith.constant 0 : index
    %25 = vector.load %arg17[%c0_34, %c0_35] : memref<1x32xf32, #tpu.memory_space<vmem>>, vector<1x32xf32>
    %cst = arith.constant dense<0.000000e+00> : vector<128x96xf32>
    %26 = tpu.matmul %11, %14, %cst {dimension_numbers = #tpu.dot_dimension_numbers<[1], [0], [0], [1], [0, 0, 1, 1], [], []>} : vector<128x32xf32>, vector<32x96xf32>, vector<128x96xf32> -> vector<128x96xf32>
    %27 = vector.broadcast %15 : vector<1x96xf32> to vector<128x96xf32>
    %28 = arith.addf %26, %27 : vector<128x96xf32>
    %cst_36 = arith.constant 0.000000e+00 : f32
    %29 = vector.broadcast %cst_36 : f32 to vector<128x32xf32>
    %30 = vector.extract_strided_slice %28 {offsets = [0, 0], sizes = [128, 8], strides = [1, 1]} : vector<128x96xf32> to vector<128x8xf32>
    %31 = vector.extract_strided_slice %28 {offsets = [0, 32], sizes = [128, 8], strides = [1, 1]} : vector<128x96xf32> to vector<128x8xf32>
    %32 = vector.extract_strided_slice %28 {offsets = [0, 64], sizes = [128, 8], strides = [1, 1]} : vector<128x96xf32> to vector<128x8xf32>
    %33 = tpu.transpose %31, [1, 0] : vector<128x8xf32> -> vector<8x128xf32>
    %cst_37 = arith.constant dense<0.000000e+00> : vector<128x128xf32>
    %34 = tpu.matmul %30, %33, %cst_37 {dimension_numbers = #tpu.dot_dimension_numbers<[1], [0], [0], [1], [0, 0, 1, 1], [], []>} : vector<128x8xf32>, vector<8x128xf32>, vector<128x128xf32> -> vector<128x128xf32>
    %cst_38 = arith.constant 0.353553385 : f32
    %35 = vector.broadcast %cst_38 : f32 to vector<128x128xf32>
    %36 = arith.mulf %34, %35 : vector<128x128xf32>
    %37 = vector.broadcast %13 : vector<1x128xf32> to vector<128x128xf32>
    %38 = arith.addf %36, %37 : vector<128x128xf32>
    %cst_39 = arith.constant dense<0xFF800000> : vector<128xf32>
    %39 = vector.multi_reduction <maximumf>, %38, %cst_39 [1] : vector<128x128xf32> to vector<128xf32>
    %40 = vector.shape_cast %39 : vector<128xf32> to vector<128x1xf32>
    %41 = vector.broadcast %40 : vector<128x1xf32> to vector<128x128xf32>
    %42 = arith.subf %38, %41 : vector<128x128xf32>
    %43 = math.exp %42 : vector<128x128xf32>
    %cst_40 = arith.constant dense<0.000000e+00> : vector<128xf32>
    %44 = vector.multi_reduction <add>, %43, %cst_40 [1] : vector<128x128xf32> to vector<128xf32>
    %45 = vector.shape_cast %44 : vector<128xf32> to vector<128x1xf32>
    %46 = tpu.reciprocal %45 {approx = true} : vector<128x1xf32> -> vector<128x1xf32>
    %47 = vector.broadcast %46 : vector<128x1xf32> to vector<128x128xf32>
    %48 = arith.mulf %43, %47 : vector<128x128xf32>
    %cst_41 = arith.constant dense<0.000000e+00> : vector<128x8xf32>
    %49 = tpu.matmul %48, %32, %cst_41 {dimension_numbers = #tpu.dot_dimension_numbers<[1], [0], [0], [1], [0, 0, 1, 1], [], []>} : vector<128x128xf32>, vector<128x8xf32>, vector<128x8xf32> -> vector<128x8xf32>
    %50 = vector.extract_strided_slice %16 {offsets = [0, 0], sizes = [8, 32], strides = [1, 1]} : vector<32x32xf32> to vector<8x32xf32>
    %cst_42 = arith.constant dense<0.000000e+00> : vector<128x32xf32>
    %51 = tpu.matmul %49, %50, %cst_42 {dimension_numbers = #tpu.dot_dimension_numbers<[1], [0], [0], [1], [0, 0, 1, 1], [], []>} : vector<128x8xf32>, vector<8x32xf32>, vector<128x32xf32> -> vector<128x32xf32>
    %52 = arith.addf %29, %51 : vector<128x32xf32>
    %53 = vector.extract_strided_slice %28 {offsets = [0, 8], sizes = [128, 8], strides = [1, 1]} : vector<128x96xf32> to vector<128x8xf32>
    %54 = vector.extract_strided_slice %28 {offsets = [0, 40], sizes = [128, 8], strides = [1, 1]} : vector<128x96xf32> to vector<128x8xf32>
    %55 = vector.extract_strided_slice %28 {offsets = [0, 72], sizes = [128, 8], strides = [1, 1]} : vector<128x96xf32> to vector<128x8xf32>
    %56 = tpu.transpose %54, [1, 0] : vector<128x8xf32> -> vector<8x128xf32>
    %cst_43 = arith.constant dense<0.000000e+00> : vector<128x128xf32>
    %57 = tpu.matmul %53, %56, %cst_43 {dimension_numbers = #tpu.dot_dimension_numbers<[1], [0], [0], [1], [0, 0, 1, 1], [], []>} : vector<128x8xf32>, vector<8x128xf32>, vector<128x128xf32> -> vector<128x128xf32>
    %cst_44 = arith.constant 0.353553385 : f32
    %58 = vector.broadcast %cst_44 : f32 to vector<128x128xf32>
    %59 = arith.mulf %57, %58 : vector<128x128xf32>
    %60 = vector.broadcast %13 : vector<1x128xf32> to vector<128x128xf32>
    %61 = arith.addf %59, %60 : vector<128x128xf32>
    %cst_45 = arith.constant dense<0xFF800000> : vector<128xf32>
    %62 = vector.multi_reduction <maximumf>, %61, %cst_45 [1] : vector<128x128xf32> to vector<128xf32>
    %63 = vector.shape_cast %62 : vector<128xf32> to vector<128x1xf32>
    %64 = vector.broadcast %63 : vector<128x1xf32> to vector<128x128xf32>
    %65 = arith.subf %61, %64 : vector<128x128xf32>
    %66 = math.exp %65 : vector<128x128xf32>
    %cst_46 = arith.constant dense<0.000000e+00> : vector<128xf32>
    %67 = vector.multi_reduction <add>, %66, %cst_46 [1] : vector<128x128xf32> to vector<128xf32>
    %68 = vector.shape_cast %67 : vector<128xf32> to vector<128x1xf32>
    %69 = tpu.reciprocal %68 {approx = true} : vector<128x1xf32> -> vector<128x1xf32>
    %70 = vector.broadcast %69 : vector<128x1xf32> to vector<128x128xf32>
    %71 = arith.mulf %66, %70 : vector<128x128xf32>
    %cst_47 = arith.constant dense<0.000000e+00> : vector<128x8xf32>
    %72 = tpu.matmul %71, %55, %cst_47 {dimension_numbers = #tpu.dot_dimension_numbers<[1], [0], [0], [1], [0, 0, 1, 1], [], []>} : vector<128x128xf32>, vector<128x8xf32>, vector<128x8xf32> -> vector<128x8xf32>
    %73 = vector.extract_strided_slice %16 {offsets = [8, 0], sizes = [8, 32], strides = [1, 1]} : vector<32x32xf32> to vector<8x32xf32>
    %cst_48 = arith.constant dense<0.000000e+00> : vector<128x32xf32>
    %74 = tpu.matmul %72, %73, %cst_48 {dimension_numbers = #tpu.dot_dimension_numbers<[1], [0], [0], [1], [0, 0, 1, 1], [], []>} : vector<128x8xf32>, vector<8x32xf32>, vector<128x32xf32> -> vector<128x32xf32>
    %75 = arith.addf %52, %74 : vector<128x32xf32>
    %76 = vector.extract_strided_slice %28 {offsets = [0, 16], sizes = [128, 8], strides = [1, 1]} : vector<128x96xf32> to vector<128x8xf32>
    %77 = vector.extract_strided_slice %28 {offsets = [0, 48], sizes = [128, 8], strides = [1, 1]} : vector<128x96xf32> to vector<128x8xf32>
    %78 = vector.extract_strided_slice %28 {offsets = [0, 80], sizes = [128, 8], strides = [1, 1]} : vector<128x96xf32> to vector<128x8xf32>
    %79 = tpu.transpose %77, [1, 0] : vector<128x8xf32> -> vector<8x128xf32>
    %cst_49 = arith.constant dense<0.000000e+00> : vector<128x128xf32>
    %80 = tpu.matmul %76, %79, %cst_49 {dimension_numbers = #tpu.dot_dimension_numbers<[1], [0], [0], [1], [0, 0, 1, 1], [], []>} : vector<128x8xf32>, vector<8x128xf32>, vector<128x128xf32> -> vector<128x128xf32>
    %cst_50 = arith.constant 0.353553385 : f32
    %81 = vector.broadcast %cst_50 : f32 to vector<128x128xf32>
    %82 = arith.mulf %80, %81 : vector<128x128xf32>
    %83 = vector.broadcast %13 : vector<1x128xf32> to vector<128x128xf32>
    %84 = arith.addf %82, %83 : vector<128x128xf32>
    %cst_51 = arith.constant dense<0xFF800000> : vector<128xf32>
    %85 = vector.multi_reduction <maximumf>, %84, %cst_51 [1] : vector<128x128xf32> to vector<128xf32>
    %86 = vector.shape_cast %85 : vector<128xf32> to vector<128x1xf32>
    %87 = vector.broadcast %86 : vector<128x1xf32> to vector<128x128xf32>
    %88 = arith.subf %84, %87 : vector<128x128xf32>
    %89 = math.exp %88 : vector<128x128xf32>
    %cst_52 = arith.constant dense<0.000000e+00> : vector<128xf32>
    %90 = vector.multi_reduction <add>, %89, %cst_52 [1] : vector<128x128xf32> to vector<128xf32>
    %91 = vector.shape_cast %90 : vector<128xf32> to vector<128x1xf32>
    %92 = tpu.reciprocal %91 {approx = true} : vector<128x1xf32> -> vector<128x1xf32>
    %93 = vector.broadcast %92 : vector<128x1xf32> to vector<128x128xf32>
    %94 = arith.mulf %89, %93 : vector<128x128xf32>
    %cst_53 = arith.constant dense<0.000000e+00> : vector<128x8xf32>
    %95 = tpu.matmul %94, %78, %cst_53 {dimension_numbers = #tpu.dot_dimension_numbers<[1], [0], [0], [1], [0, 0, 1, 1], [], []>} : vector<128x128xf32>, vector<128x8xf32>, vector<128x8xf32> -> vector<128x8xf32>
    %96 = vector.extract_strided_slice %16 {offsets = [16, 0], sizes = [8, 32], strides = [1, 1]} : vector<32x32xf32> to vector<8x32xf32>
    %cst_54 = arith.constant dense<0.000000e+00> : vector<128x32xf32>
    %97 = tpu.matmul %95, %96, %cst_54 {dimension_numbers = #tpu.dot_dimension_numbers<[1], [0], [0], [1], [0, 0, 1, 1], [], []>} : vector<128x8xf32>, vector<8x32xf32>, vector<128x32xf32> -> vector<128x32xf32>
    %98 = arith.addf %75, %97 : vector<128x32xf32>
    %99 = vector.extract_strided_slice %28 {offsets = [0, 24], sizes = [128, 8], strides = [1, 1]} : vector<128x96xf32> to vector<128x8xf32>
    %100 = vector.extract_strided_slice %28 {offsets = [0, 56], sizes = [128, 8], strides = [1, 1]} : vector<128x96xf32> to vector<128x8xf32>
    %101 = vector.extract_strided_slice %28 {offsets = [0, 88], sizes = [128, 8], strides = [1, 1]} : vector<128x96xf32> to vector<128x8xf32>
    %102 = tpu.transpose %100, [1, 0] : vector<128x8xf32> -> vector<8x128xf32>
    %cst_55 = arith.constant dense<0.000000e+00> : vector<128x128xf32>
    %103 = tpu.matmul %99, %102, %cst_55 {dimension_numbers = #tpu.dot_dimension_numbers<[1], [0], [0], [1], [0, 0, 1, 1], [], []>} : vector<128x8xf32>, vector<8x128xf32>, vector<128x128xf32> -> vector<128x128xf32>
    %cst_56 = arith.constant 0.353553385 : f32
    %104 = vector.broadcast %cst_56 : f32 to vector<128x128xf32>
    %105 = arith.mulf %103, %104 : vector<128x128xf32>
    %106 = vector.broadcast %13 : vector<1x128xf32> to vector<128x128xf32>
    %107 = arith.addf %105, %106 : vector<128x128xf32>
    %cst_57 = arith.constant dense<0xFF800000> : vector<128xf32>
    %108 = vector.multi_reduction <maximumf>, %107, %cst_57 [1] : vector<128x128xf32> to vector<128xf32>
    %109 = vector.shape_cast %108 : vector<128xf32> to vector<128x1xf32>
    %110 = vector.broadcast %109 : vector<128x1xf32> to vector<128x128xf32>
    %111 = arith.subf %107, %110 : vector<128x128xf32>
    %112 = math.exp %111 : vector<128x128xf32>
    %cst_58 = arith.constant dense<0.000000e+00> : vector<128xf32>
    %113 = vector.multi_reduction <add>, %112, %cst_58 [1] : vector<128x128xf32> to vector<128xf32>
    %114 = vector.shape_cast %113 : vector<128xf32> to vector<128x1xf32>
    %115 = tpu.reciprocal %114 {approx = true} : vector<128x1xf32> -> vector<128x1xf32>
    %116 = vector.broadcast %115 : vector<128x1xf32> to vector<128x128xf32>
    %117 = arith.mulf %112, %116 : vector<128x128xf32>
    %cst_59 = arith.constant dense<0.000000e+00> : vector<128x8xf32>
    %118 = tpu.matmul %117, %101, %cst_59 {dimension_numbers = #tpu.dot_dimension_numbers<[1], [0], [0], [1], [0, 0, 1, 1], [], []>} : vector<128x128xf32>, vector<128x8xf32>, vector<128x8xf32> -> vector<128x8xf32>
    %119 = vector.extract_strided_slice %16 {offsets = [24, 0], sizes = [8, 32], strides = [1, 1]} : vector<32x32xf32> to vector<8x32xf32>
    %cst_60 = arith.constant dense<0.000000e+00> : vector<128x32xf32>
    %120 = tpu.matmul %118, %119, %cst_60 {dimension_numbers = #tpu.dot_dimension_numbers<[1], [0], [0], [1], [0, 0, 1, 1], [], []>} : vector<128x8xf32>, vector<8x32xf32>, vector<128x32xf32> -> vector<128x32xf32>
    %121 = arith.addf %98, %120 : vector<128x32xf32>
    %122 = vector.broadcast %17 : vector<1x32xf32> to vector<128x32xf32>
    %123 = arith.addf %121, %122 : vector<128x32xf32>
    %124 = arith.addf %11, %123 : vector<128x32xf32>
    %cst_61 = arith.constant dense<0.000000e+00> : vector<128xf32>
    %125 = vector.multi_reduction <add>, %124, %cst_61 [1] : vector<128x32xf32> to vector<128xf32>
    %126 = vector.shape_cast %125 : vector<128xf32> to vector<128x1xf32>
    %cst_62 = arith.constant 3.200000e+01 : f32
    %127 = vector.broadcast %cst_62 : f32 to vector<128x1xf32>
    %128 = arith.divf %126, %127 : vector<128x1xf32>
    %129 = vector.broadcast %128 : vector<128x1xf32> to vector<128x32xf32>
    %130 = arith.subf %124, %129 : vector<128x32xf32>
    %131 = arith.mulf %130, %130 : vector<128x32xf32>
    %cst_63 = arith.constant dense<0.000000e+00> : vector<128xf32>
    %132 = vector.multi_reduction <add>, %131, %cst_63 [1] : vector<128x32xf32> to vector<128xf32>
    %133 = vector.shape_cast %132 : vector<128xf32> to vector<128x1xf32>
    %cst_64 = arith.constant 3.200000e+01 : f32
    %134 = vector.broadcast %cst_64 : f32 to vector<128x1xf32>
    %135 = arith.divf %133, %134 : vector<128x1xf32>
    %136 = vector.broadcast %128 : vector<128x1xf32> to vector<128x32xf32>
    %137 = arith.subf %124, %136 : vector<128x32xf32>
    %cst_65 = arith.constant 9.99999974E-6 : f32
    %138 = vector.broadcast %cst_65 : f32 to vector<128x1xf32>
    %139 = arith.addf %135, %138 : vector<128x1xf32>
    %140 = math.rsqrt %139 : vector<128x1xf32>
    %141 = vector.broadcast %140 : vector<128x1xf32> to vector<128x32xf32>
    %142 = arith.mulf %137, %141 : vector<128x32xf32>
    %143 = vector.broadcast %18 : vector<1x32xf32> to vector<128x32xf32>
    %144 = arith.mulf %142, %143 : vector<128x32xf32>
    %145 = vector.broadcast %19 : vector<1x32xf32> to vector<128x32xf32>
    %146 = arith.addf %144, %145 : vector<128x32xf32>
    %cst_66 = arith.constant dense<0.000000e+00> : vector<128x64xf32>
    %147 = tpu.matmul %146, %20, %cst_66 {dimension_numbers = #tpu.dot_dimension_numbers<[1], [0], [0], [1], [0, 0, 1, 1], [], []>} : vector<128x32xf32>, vector<32x64xf32>, vector<128x64xf32> -> vector<128x64xf32>
    %148 = vector.broadcast %21 : vector<1x64xf32> to vector<128x64xf32>
    %149 = arith.addf %147, %148 : vector<128x64xf32>
    %cst_67 = arith.constant 0.000000e+00 : f32
    %150 = vector.broadcast %cst_67 : f32 to vector<128x64xf32>
    %151 = arith.maximumf %149, %150 : vector<128x64xf32>
    %cst_68 = arith.constant dense<0.000000e+00> : vector<128x32xf32>
    %152 = tpu.matmul %151, %22, %cst_68 {dimension_numbers = #tpu.dot_dimension_numbers<[1], [0], [0], [1], [0, 0, 1, 1], [], []>} : vector<128x64xf32>, vector<64x32xf32>, vector<128x32xf32> -> vector<128x32xf32>
    %153 = vector.broadcast %23 : vector<1x32xf32> to vector<128x32xf32>
    %154 = arith.addf %152, %153 : vector<128x32xf32>
    %155 = arith.addf %146, %154 : vector<128x32xf32>
    %cst_69 = arith.constant dense<0.000000e+00> : vector<128xf32>
    %156 = vector.multi_reduction <add>, %155, %cst_69 [1] : vector<128x32xf32> to vector<128xf32>
    %157 = vector.shape_cast %156 : vector<128xf32> to vector<128x1xf32>
    %cst_70 = arith.constant 3.200000e+01 : f32
    %158 = vector.broadcast %cst_70 : f32 to vector<128x1xf32>
    %159 = arith.divf %157, %158 : vector<128x1xf32>
    %160 = vector.broadcast %159 : vector<128x1xf32> to vector<128x32xf32>
    %161 = arith.subf %155, %160 : vector<128x32xf32>
    %162 = arith.mulf %161, %161 : vector<128x32xf32>
    %cst_71 = arith.constant dense<0.000000e+00> : vector<128xf32>
    %163 = vector.multi_reduction <add>, %162, %cst_71 [1] : vector<128x32xf32> to vector<128xf32>
    %164 = vector.shape_cast %163 : vector<128xf32> to vector<128x1xf32>
    %cst_72 = arith.constant 3.200000e+01 : f32
    %165 = vector.broadcast %cst_72 : f32 to vector<128x1xf32>
    %166 = arith.divf %164, %165 : vector<128x1xf32>
    %167 = vector.broadcast %159 : vector<128x1xf32> to vector<128x32xf32>
    %168 = arith.subf %155, %167 : vector<128x32xf32>
    %cst_73 = arith.constant 9.99999974E-6 : f32
    %169 = vector.broadcast %cst_73 : f32 to vector<128x1xf32>
    %170 = arith.addf %166, %169 : vector<128x1xf32>
    %171 = math.rsqrt %170 : vector<128x1xf32>
    %172 = vector.broadcast %171 : vector<128x1xf32> to vector<128x32xf32>
    %173 = arith.mulf %168, %172 : vector<128x32xf32>
    %174 = vector.broadcast %24 : vector<1x32xf32> to vector<128x32xf32>
    %175 = arith.mulf %173, %174 : vector<128x32xf32>
    %176 = vector.broadcast %25 : vector<1x32xf32> to vector<128x32xf32>
    %177 = arith.addf %175, %176 : vector<128x32xf32>
    %c0_74 = arith.constant 0 : index
    %c0_75 = arith.constant 0 : index
    %c0_76 = arith.constant 0 : index
    %178 = vector.load %arg18[%c0_74, %c0_75, %c0_76] : memref<1x128x32xf32, #tpu.memory_space<vmem>>, vector<1x128x32xf32>
    %179 = vector.shape_cast %178 : vector<1x128x32xf32> to vector<128x32xf32>
    %180 = vector.shape_cast %177 : vector<128x32xf32> to vector<1x128x32xf32>
    tpu.vector_store %arg18[%c0_74, %c0_75, %c0_76], %180 {strides = array<i32>} : memref<1x128x32xf32, #tpu.memory_space<vmem>>, vector<1x128x32xf32>,
    return
  }
  func.func @transform_0(%arg0: i32) -> (i32, i32, i32) {
    %c0_i32 = arith.constant 0 : i32
    %c0_i32_0 = arith.constant 0 : i32
    %c0_i32_1 = arith.constant 0 : i32
    return %arg0, %c0_i32, %c0_i32_0 : i32, i32, i32
  }
  func.func @transform_1(%arg0: i32) -> (i32, i32, i32) {
    %c0_i32 = arith.constant 0 : i32
    %c0_i32_0 = arith.constant 0 : i32
    %c0_i32_1 = arith.constant 0 : i32
    return %arg0, %c0_i32, %c0_i32_0 : i32, i32, i32
  }
  func.func @transform_2(%arg0: i32) -> (i32, i32, i32) {
    %c0_i32 = arith.constant 0 : i32
    %c0_i32_0 = arith.constant 0 : i32
    %c0_i32_1 = arith.constant 0 : i32
    return %arg0, %c0_i32, %c0_i32_0 : i32, i32, i32
  }
  func.func @transform_3(%arg0: i32) -> (i32, i32) {
    %c0_i32 = arith.constant 0 : i32
    %c0_i32_0 = arith.constant 0 : i32
    %c0_i32_1 = arith.constant 0 : i32
    return %c0_i32, %c0_i32_0 : i32, i32
  }
  func.func @transform_4(%arg0: i32) -> (i32, i32) {
    %c0_i32 = arith.constant 0 : i32
    %c0_i32_0 = arith.constant 0 : i32
    %c0_i32_1 = arith.constant 0 : i32
    return %c0_i32, %c0_i32_0 : i32, i32
  }
  func.func @transform_5(%arg0: i32) -> (i32, i32) {
    %c0_i32 = arith.constant 0 : i32
    %c0_i32_0 = arith.constant 0 : i32
    %c0_i32_1 = arith.constant 0 : i32
    return %c0_i32, %c0_i32_0 : i32, i32
  }
  func.func @transform_6(%arg0: i32) -> (i32, i32) {
    %c0_i32 = arith.constant 0 : i32
    %c0_i32_0 = arith.constant 0 : i32
    %c0_i32_1 = arith.constant 0 : i32
    return %c0_i32, %c0_i32_0 : i32, i32
  }
  func.func @transform_7(%arg0: i32) -> (i32, i32) {
    %c0_i32 = arith.constant 0 : i32
    %c0_i32_0 = arith.constant 0 : i32
    %c0_i32_1 = arith.constant 0 : i32
    return %c0_i32, %c0_i32_0 : i32, i32
  }
  func.func @transform_8(%arg0: i32) -> (i32, i32) {
    %c0_i32 = arith.constant 0 : i32
    %c0_i32_0 = arith.constant 0 : i32
    %c0_i32_1 = arith.constant 0 : i32
    return %c0_i32, %c0_i32_0 : i32, i32
  }
  func.func @transform_9(%arg0: i32) -> (i32, i32) {
    %c0_i32 = arith.constant 0 : i32
    %c0_i32_0 = arith.constant 0 : i32
    %c0_i32_1 = arith.constant 0 : i32
    return %c0_i32, %c0_i32_0 : i32, i32
  }
  func.func @transform_10(%arg0: i32) -> (i32, i32) {
    %c0_i32 = arith.constant 0 : i32
    %c0_i32_0 = arith.constant 0 : i32
    %c0_i32_1 = arith.constant 0 : i32
    return %c0_i32, %c0_i32_0 : i32, i32
  }
  func.func @transform_11(%arg0: i32) -> (i32, i32) {
    %c0_i32 = arith.constant 0 : i32
    %c0_i32_0 = arith.constant 0 : i32
    %c0_i32_1 = arith.constant 0 : i32
    return %c0_i32, %c0_i32_0 : i32, i32
  }
  func.func @transform_12(%arg0: i32) -> (i32, i32) {
    %c0_i32 = arith.constant 0 : i32
    %c0_i32_0 = arith.constant 0 : i32
    %c0_i32_1 = arith.constant 0 : i32
    return %c0_i32, %c0_i32_0 : i32, i32
  }
  func.func @transform_13(%arg0: i32) -> (i32, i32) {
    %c0_i32 = arith.constant 0 : i32
    %c0_i32_0 = arith.constant 0 : i32
    %c0_i32_1 = arith.constant 0 : i32
    return %c0_i32, %c0_i32_0 : i32, i32
  }
  func.func @transform_14(%arg0: i32) -> (i32, i32) {
    %c0_i32 = arith.constant 0 : i32
    %c0_i32_0 = arith.constant 0 : i32
    %c0_i32_1 = arith.constant 0 : i32
    return %c0_i32, %c0_i32_0 : i32, i32
  }
  func.func @transform_15(%arg0: i32) -> (i32, i32) {
    %c0_i32 = arith.constant 0 : i32
    %c0_i32_0 = arith.constant 0 : i32
    %c0_i32_1 = arith.constant 0 : i32
    return %c0_i32, %c0_i32_0 : i32, i32
  }
  func.func @transform_16(%arg0: i32) -> (i32, i32) {
    %c0_i32 = arith.constant 0 : i32
    %c0_i32_0 = arith.constant 0 : i32
    %c0_i32_1 = arith.constant 0 : i32
    return %c0_i32, %c0_i32_0 : i32, i32
  }
  func.func @transform_17(%arg0: i32) -> (i32, i32, i32) {
    %c0_i32 = arith.constant 0 : i32
    %c0_i32_0 = arith.constant 0 : i32
    %c0_i32_1 = arith.constant 0 : i32
    return %arg0, %c0_i32, %c0_i32_0 : i32, i32, i32
  }
}

</mosaic_0001>

<llo_original>
// kernel: tpu_custom_call.1
$region0: #{tpu_custom_call.1}
  #allocation0 [shape = 'u32[]', space=smem, size = 0x4, offset = 0x4, fixed_abs, tag = 'smem constant byte address 0x4 - core index']
  #allocation1 [shape = 'u32[144,128]{1,0:T(1,128)}', space=vmem, size = 0x12000, scoped, tag = 'internal scratch']
  %s0 = inlined_call_operand.vmem [shape: f32[2,128,1], index: 0, kind: input, shape index: {}]
  %s1 = inlined_call_operand.vmem [shape: f32[2,128,32], index: 1, kind: input, shape index: {}]
  %s2 = inlined_call_operand.vmem [shape: f32[2,1,128], index: 2, kind: input, shape index: {}]
  %s3 = inlined_call_operand.vmem [shape: f32[1,32], index: 3, kind: input, shape index: {}]
  %s4 = inlined_call_operand.vmem [shape: f32[1,32], index: 4, kind: input, shape index: {}]
  %s5 = inlined_call_operand.vmem [shape: f32[32,96], index: 5, kind: input, shape index: {}]
  %s6 = inlined_call_operand.vmem [shape: f32[1,96], index: 6, kind: input, shape index: {}]
  %s7 = inlined_call_operand.vmem [shape: f32[32,32], index: 7, kind: input, shape index: {}]
  %s8 = inlined_call_operand.vmem [shape: f32[1,32], index: 8, kind: input, shape index: {}]
  %s9 = inlined_call_operand.vmem [shape: f32[1,32], index: 9, kind: input, shape index: {}]
  %s10 = inlined_call_operand.vmem [shape: f32[1,32], index: 10, kind: input, shape index: {}]
  %s11 = inlined_call_operand.vmem [shape: f32[32,64], index: 11, kind: input, shape index: {}]
  %s12 = inlined_call_operand.vmem [shape: f32[1,64], index: 12, kind: input, shape index: {}]
  %s13 = inlined_call_operand.vmem [shape: f32[64,32], index: 13, kind: input, shape index: {}]
  %s14 = inlined_call_operand.vmem [shape: f32[1,32], index: 14, kind: input, shape index: {}]
  %s15 = inlined_call_operand.vmem [shape: f32[1,32], index: 15, kind: input, shape index: {}]
  %s16 = inlined_call_operand.vmem [shape: f32[1,32], index: 16, kind: input, shape index: {}]
  %s17 = inlined_call_operand.vmem [shape: f32[2,128,32], index: 17, kind: output, shape index: {}]
  %s18 = sld [smem:[#allocation0]]
  $region101: #{tpu_custom_call.1} parent=0
    _
  %s20 = ssub.s32 1, %s18
  %s21 = scalar_select 0, %s20, %s18
  loop: start=0, step=1, limit=4
  $region2: #{tpu_custom_call.1} parent=0 // loop_pre_header
    _
  $region3: #{tpu_custom_call.1} parent=0 // loop_header
    %s23 = sphi 0, %s27
    %p24 = scmp.ge.s32.totalorder %s23, 4
    %s33 = sphi 0, %s35
    %s36 = sphi 0, %s33
    %s37 = sphi 0, %s36
    %s53 = sphi 0, %s37
    %s59 = sphi 0, %s61
    %s62 = sphi 0, %s59
    %s63 = sphi 0, %s62
    %s79 = sphi 0, %s63
    %s85 = sphi 0, %s87
    %s88 = sphi 0, %s85
    %s89 = sphi 0, %s88
    %s105 = sphi 0, %s89
    %s109 = sphi 0, %s109
    %s111 = sphi 0, %s109
    %s112 = sphi 0, %s111
    %s126 = sphi 0, %s112
    %s130 = sphi 0, %s130
    %s132 = sphi 0, %s130
    %s133 = sphi 0, %s132
    %s147 = sphi 0, %s133
    %s151 = sphi 0, %s151
    %s153 = sphi 0, %s151
    %s154 = sphi 0, %s153
    %s168 = sphi 0, %s154
    %s172 = sphi 0, %s172
    %s174 = sphi 0, %s172
    %s175 = sphi 0, %s174
    %s189 = sphi 0, %s175
    %s193 = sphi 0, %s193
    %s195 = sphi 0, %s193
    %s196 = sphi 0, %s195
    %s210 = sphi 0, %s196
    %s214 = sphi 0, %s214
    %s216 = sphi 0, %s214
    %s217 = sphi 0, %s216
    %s231 = sphi 0, %s217
    %s235 = sphi 0, %s235
    %s237 = sphi 0, %s235
    %s238 = sphi 0, %s237
    %s252 = sphi 0, %s238
    %s256 = sphi 0, %s256
    %s258 = sphi 0, %s256
    %s259 = sphi 0, %s258
    %s273 = sphi 0, %s259
    %s277 = sphi 0, %s277
    %s279 = sphi 0, %s277
    %s280 = sphi 0, %s279
    %s294 = sphi 0, %s280
    %s298 = sphi 0, %s298
    %s300 = sphi 0, %s298
    %s301 = sphi 0, %s300
    %s315 = sphi 0, %s301
    %s319 = sphi 0, %s319
    %s321 = sphi 0, %s319
    %s322 = sphi 0, %s321
    %s336 = sphi 0, %s322
    %s340 = sphi 0, %s340
    %s342 = sphi 0, %s340
    %s343 = sphi 0, %s342
    %s357 = sphi 0, %s343
    %s361 = sphi 0, %s361
    %s363 = sphi 0, %s361
    %s364 = sphi 0, %s363
    %s378 = sphi 0, %s364
    %s382 = sphi 0, %s382
    %s384 = sphi 0, %s382
    %s385 = sphi 0, %s384
    %s399 = sphi 0, %s385
    %s405 = sphi 0, %s407
    %s408 = sphi 0, %s405
    %s409 = sphi 0, %s408
    %s425 = sphi 0, %s409
  $region4: #{tpu_custom_call.1} parent=0 // loop_header_branch
    %26 = sbr.rel (%p24) target = $region8
  $region5: #{tpu_custom_call.1} parent=0 // loop_body
    %s28 = ssub.s32 %s23, 1
    %s29 = ssub.s32 %s23, 2
    %s30 = sadd.s32 %s23, 1
    %s31 = ssub.s32 %s23, %s30
    %p32 = scmp.eq.s32.totalorder %s31, 0
    %s34 = sadd.s32 %s33, 1
    %s35 = scalar_select %p32, %s33, %s34
    %p38 = pneg %p32
    %p39 = scmp.eq.s32.totalorder %s23, 1
    %p40 = por %p38, %p39
    %p41 = scmp.ne.s32.totalorder %s33, %s36
    %p42 = scmp.eq.s32.totalorder %s23, 0
    %p43 = por %p41, %p42
    %p44 = scmp.ne.s32.totalorder %s33, %s36
    %p45 = scmp.eq.s32.totalorder %s28, 1
    %p46 = por %p44, %p45
    %p47 = scmp.ne.s32.totalorder %s36, %s37
    %p48 = scmp.eq.s32.totalorder %s28, 0
    %p49 = por %p47, %p48
    %p50 = scmp.ne.s32.totalorder %s36, %s37
    %p51 = scmp.eq.s32.totalorder %s29, 1
    %p52 = por %p50, %p51
    %p54 = scmp.ne.s32.totalorder %s37, %s53
    %p55 = scmp.eq.s32.totalorder %s29, 0
    %p56 = por %p54, %p55
    %s57 = ssub.s32 %s23, %s30
    %p58 = scmp.eq.s32.totalorder %s57, 0
    %s60 = sadd.s32 %s59, 1
    %s61 = scalar_select %p58, %s59, %s60
    %p64 = pneg %p58
    %p65 = scmp.eq.s32.totalorder %s23, 1
    %p66 = por %p64, %p65
    %p67 = scmp.ne.s32.totalorder %s59, %s62
    %p68 = scmp.eq.s32.totalorder %s23, 0
    %p69 = por %p67, %p68
    %p70 = scmp.ne.s32.totalorder %s59, %s62
    %p71 = scmp.eq.s32.totalorder %s28, 1
    %p72 = por %p70, %p71
    %p73 = scmp.ne.s32.totalorder %s62, %s63
    %p74 = scmp.eq.s32.totalorder %s28, 0
    %p75 = por %p73, %p74
    %p76 = scmp.ne.s32.totalorder %s62, %s63
    %p77 = scmp.eq.s32.totalorder %s29, 1
    %p78 = por %p76, %p77
    %p80 = scmp.ne.s32.totalorder %s63, %s79
    %p81 = scmp.eq.s32.totalorder %s29, 0
    %p82 = por %p80, %p81
    %s83 = ssub.s32 %s23, %s30
    %p84 = scmp.eq.s32.totalorder %s83, 0
    %s86 = sadd.s32 %s85, 1
    %s87 = scalar_select %p84, %s85, %s86
    %p90 = pneg %p84
    %p91 = scmp.eq.s32.totalorder %s23, 1
    %p92 = por %p90, %p91
    %p93 = scmp.ne.s32.totalorder %s85, %s88
    %p94 = scmp.eq.s32.totalorder %s23, 0
    %p95 = por %p93, %p94
    %p96 = scmp.ne.s32.totalorder %s85, %s88
    %p97 = scmp.eq.s32.totalorder %s28, 1
    %p98 = por %p96, %p97
    %p99 = scmp.ne.s32.totalorder %s88, %s89
    %p100 = scmp.eq.s32.totalorder %s28, 0
    %p101 = por %p99, %p100
    %p102 = scmp.ne.s32.totalorder %s88, %s89
    %p103 = scmp.eq.s32.totalorder %s29, 1
    %p104 = por %p102, %p103
    %p106 = scmp.ne.s32.totalorder %s89, %s105
    %p107 = scmp.eq.s32.totalorder %s29, 0
    %p108 = por %p106, %p107
    %s110 = sadd.s32 %s109, 1
    %p113 = scmp.eq.s32.totalorder %s23, 1
    %p114 = scmp.ne.s32.totalorder %s109, %s111
    %p115 = scmp.eq.s32.totalorder %s23, 0
    %p116 = por %p114, %p115
    %p117 = scmp.ne.s32.totalorder %s109, %s111
    %p118 = scmp.eq.s32.totalorder %s28, 1
    %p119 = por %p117, %p118
    %p120 = scmp.ne.s32.totalorder %s111, %s112
    %p121 = scmp.eq.s32.totalorder %s28, 0
    %p122 = por %p120, %p121
    %p123 = scmp.ne.s32.totalorder %s111, %s112
    %p124 = scmp.eq.s32.totalorder %s29, 1
    %p125 = por %p123, %p124
    %p127 = scmp.ne.s32.totalorder %s112, %s126
    %p128 = scmp.eq.s32.totalorder %s29, 0
    %p129 = por %p127, %p128
    %s131 = sadd.s32 %s130, 1
    %p134 = scmp.eq.s32.totalorder %s23, 1
    %p135 = scmp.ne.s32.totalorder %s130, %s132
    %p136 = scmp.eq.s32.totalorder %s23, 0
    %p137 = por %p135, %p136
    %p138 = scmp.ne.s32.totalorder %s130, %s132
    %p139 = scmp.eq.s32.totalorder %s28, 1
    %p140 = por %p138, %p139
    %p141 = scmp.ne.s32.totalorder %s132, %s133
    %p142 = scmp.eq.s32.totalorder %s28, 0
    %p143 = por %p141, %p142
    %p144 = scmp.ne.s32.totalorder %s132, %s133
    %p145 = scmp.eq.s32.totalorder %s29, 1
    %p146 = por %p144, %p145
    %p148 = scmp.ne.s32.totalorder %s133, %s147
    %p149 = scmp.eq.s32.totalorder %s29, 0
    %p150 = por %p148, %p149
    %s152 = sadd.s32 %s151, 1
    %p155 = scmp.eq.s32.totalorder %s23, 1
    %p156 = scmp.ne.s32.totalorder %s151, %s153
    %p157 = scmp.eq.s32.totalorder %s23, 0
    %p158 = por %p156, %p157
    %p159 = scmp.ne.s32.totalorder %s151, %s153
    %p160 = scmp.eq.s32.totalorder %s28, 1
    %p161 = por %p159, %p160
    %p162 = scmp.ne.s32.totalorder %s153, %s154
    %p163 = scmp.eq.s32.totalorder %s28, 0
    %p164 = por %p162, %p163
    %p165 = scmp.ne.s32.totalorder %s153, %s154
    %p166 = scmp.eq.s32.totalorder %s29, 1
    %p167 = por %p165, %p166
    %p169 = scmp.ne.s32.totalorder %s154, %s168
    %p170 = scmp.eq.s32.totalorder %s29, 0
    %p171 = por %p169, %p170
    %s173 = sadd.s32 %s172, 1
    %p176 = scmp.eq.s32.totalorder %s23, 1
    %p177 = scmp.ne.s32.totalorder %s172, %s174
    %p178 = scmp.eq.s32.totalorder %s23, 0
    %p179 = por %p177, %p178
    %p180 = scmp.ne.s32.totalorder %s172, %s174
    %p181 = scmp.eq.s32.totalorder %s28, 1
    %p182 = por %p180, %p181
    %p183 = scmp.ne.s32.totalorder %s174, %s175
    %p184 = scmp.eq.s32.totalorder %s28, 0
    %p185 = por %p183, %p184
    %p186 = scmp.ne.s32.totalorder %s174, %s175
    %p187 = scmp.eq.s32.totalorder %s29, 1
    %p188 = por %p186, %p187
    %p190 = scmp.ne.s32.totalorder %s175, %s189
    %p191 = scmp.eq.s32.totalorder %s29, 0
    %p192 = por %p190, %p191
    %s194 = sadd.s32 %s193, 1
    %p197 = scmp.eq.s32.totalorder %s23, 1
    %p198 = scmp.ne.s32.totalorder %s193, %s195
    %p199 = scmp.eq.s32.totalorder %s23, 0
    %p200 = por %p198, %p199
    %p201 = scmp.ne.s32.totalorder %s193, %s195
    %p202 = scmp.eq.s32.totalorder %s28, 1
    %p203 = por %p201, %p202
    %p204 = scmp.ne.s32.totalorder %s195, %s196
    %p205 = scmp.eq.s32.totalorder %s28, 0
    %p206 = por %p204, %p205
    %p207 = scmp.ne.s32.totalorder %s195, %s196
    %p208 = scmp.eq.s32.totalorder %s29, 1
    %p209 = por %p207, %p208
    %p211 = scmp.ne.s32.totalorder %s196, %s210
    %p212 = scmp.eq.s32.totalorder %s29, 0
    %p213 = por %p211, %p212
    %s215 = sadd.s32 %s214, 1
    %p218 = scmp.eq.s32.totalorder %s23, 1
    %p219 = scmp.ne.s32.totalorder %s214, %s216
    %p220 = scmp.eq.s32.totalorder %s23, 0
    %p221 = por %p219, %p220
    %p222 = scmp.ne.s32.totalorder %s214, %s216
    %p223 = scmp.eq.s32.totalorder %s28, 1
    %p224 = por %p222, %p223
    %p225 = scmp.ne.s32.totalorder %s216, %s217
    %p226 = scmp.eq.s32.totalorder %s28, 0
    %p227 = por %p225, %p226
    %p228 = scmp.ne.s32.totalorder %s216, %s217
    %p229 = scmp.eq.s32.totalorder %s29, 1
    %p230 = por %p228, %p229
    %p232 = scmp.ne.s32.totalorder %s217, %s231
    %p233 = scmp.eq.s32.totalorder %s29, 0
    %p234 = por %p232, %p233
    %s236 = sadd.s32 %s235, 1
    %p239 = scmp.eq.s32.totalorder %s23, 1
    %p240 = scmp.ne.s32.totalorder %s235, %s237
    %p241 = scmp.eq.s32.totalorder %s23, 0
    %p242 = por %p240, %p241
    %p243 = scmp.ne.s32.totalorder %s235, %s237
    %p244 = scmp.eq.s32.totalorder %s28, 1
    %p245 = por %p243, %p244
    %p246 = scmp.ne.s32.totalorder %s237, %s238
    %p247 = scmp.eq.s32.totalorder %s28, 0
    %p248 = por %p246, %p247
    %p249 = scmp.ne.s32.totalorder %s237, %s238
    %p250 = scmp.eq.s32.totalorder %s29, 1
    %p251 = por %p249, %p250
    %p253 = scmp.ne.s32.totalorder %s238, %s252
    %p254 = scmp.eq.s32.totalorder %s29, 0
    %p255 = por %p253, %p254
    %s257 = sadd.s32 %s256, 1
    %p260 = scmp.eq.s32.totalorder %s23, 1
    %p261 = scmp.ne.s32.totalorder %s256, %s258
    %p262 = scmp.eq.s32.totalorder %s23, 0
    %p263 = por %p261, %p262
    %p264 = scmp.ne.s32.totalorder %s256, %s258
    %p265 = scmp.eq.s32.totalorder %s28, 1
    %p266 = por %p264, %p265
    %p267 = scmp.ne.s32.totalorder %s258, %s259
    %p268 = scmp.eq.s32.totalorder %s28, 0
    %p269 = por %p267, %p268
    %p270 = scmp.ne.s32.totalorder %s258, %s259
    %p271 = scmp.eq.s32.totalorder %s29, 1
    %p272 = por %p270, %p271
    %p274 = scmp.ne.s32.totalorder %s259, %s273
    %p275 = scmp.eq.s32.totalorder %s29, 0
    %p276 = por %p274, %p275
    %s278 = sadd.s32 %s277, 1
    %p281 = scmp.eq.s32.totalorder %s23, 1
    %p282 = scmp.ne.s32.totalorder %s277, %s279
    %p283 = scmp.eq.s32.totalorder %s23, 0
    %p284 = por %p282, %p283
    %p285 = scmp.ne.s32.totalorder %s277, %s279
    %p286 = scmp.eq.s32.totalorder %s28, 1
    %p287 = por %p285, %p286
    %p288 = scmp.ne.s32.totalorder %s279, %s280
    %p289 = scmp.eq.s32.totalorder %s28, 0
    %p290 = por %p288, %p289
    %p291 = scmp.ne.s32.totalorder %s279, %s280
    %p292 = scmp.eq.s32.totalorder %s29, 1
    %p293 = por %p291, %p292
    %p295 = scmp.ne.s32.totalorder %s280, %s294
    %p296 = scmp.eq.s32.totalorder %s29, 0
    %p297 = por %p295, %p296
    %s299 = sadd.s32 %s298, 1
    %p302 = scmp.eq.s32.totalorder %s23, 1
    %p303 = scmp.ne.s32.totalorder %s298, %s300
    %p304 = scmp.eq.s32.totalorder %s23, 0
    %p305 = por %p303, %p304
    %p306 = scmp.ne.s32.totalorder %s298, %s300
    %p307 = scmp.eq.s32.totalorder %s28, 1
    %p308 = por %p306, %p307
    %p309 = scmp.ne.s32.totalorder %s300, %s301
    %p310 = scmp.eq.s32.totalorder %s28, 0
    %p311 = por %p309, %p310
    %p312 = scmp.ne.s32.totalorder %s300, %s301
    %p313 = scmp.eq.s32.totalorder %s29, 1
    %p314 = por %p312, %p313
    %p316 = scmp.ne.s32.totalorder %s301, %s315
    %p317 = scmp.eq.s32.totalorder %s29, 0
    %p318 = por %p316, %p317
    %s320 = sadd.s32 %s319, 1
    %p323 = scmp.eq.s32.totalorder %s23, 1
    %p324 = scmp.ne.s32.totalorder %s319, %s321
    %p325 = scmp.eq.s32.totalorder %s23, 0
    %p326 = por %p324, %p325
    %p327 = scmp.ne.s32.totalorder %s319, %s321
    %p328 = scmp.eq.s32.totalorder %s28, 1
    %p329 = por %p327, %p328
    %p330 = scmp.ne.s32.totalorder %s321, %s322
    %p331 = scmp.eq.s32.totalorder %s28, 0
    %p332 = por %p330, %p331
    %p333 = scmp.ne.s32.totalorder %s321, %s322
    %p334 = scmp.eq.s32.totalorder %s29, 1
    %p335 = por %p333, %p334
    %p337 = scmp.ne.s32.totalorder %s322, %s336
    %p338 = scmp.eq.s32.totalorder %s29, 0
    %p339 = por %p337, %p338
    %s341 = sadd.s32 %s340, 1
    %p344 = scmp.eq.s32.totalorder %s23, 1
    %p345 = scmp.ne.s32.totalorder %s340, %s342
    %p346 = scmp.eq.s32.totalorder %s23, 0
    %p347 = por %p345, %p346
    %p348 = scmp.ne.s32.totalorder %s340, %s342
    %p349 = scmp.eq.s32.totalorder %s28, 1
    %p350 = por %p348, %p349
    %p351 = scmp.ne.s32.totalorder %s342, %s343
    %p352 = scmp.eq.s32.totalorder %s28, 0
    %p353 = por %p351, %p352
    %p354 = scmp.ne.s32.totalorder %s342, %s343
    %p355 = scmp.eq.s32.totalorder %s29, 1
    %p356 = por %p354, %p355
    %p358 = scmp.ne.s32.totalorder %s343, %s357
    %p359 = scmp.eq.s32.totalorder %s29, 0
    %p360 = por %p358, %p359
    %s362 = sadd.s32 %s361, 1
    %p365 = scmp.eq.s32.totalorder %s23, 1
    %p366 = scmp.ne.s32.totalorder %s361, %s363
    %p367 = scmp.eq.s32.totalorder %s23, 0
    %p368 = por %p366, %p367
    %p369 = scmp.ne.s32.totalorder %s361, %s363
    %p370 = scmp.eq.s32.totalorder %s28, 1
    %p371 = por %p369, %p370
    %p372 = scmp.ne.s32.totalorder %s363, %s364
    %p373 = scmp.eq.s32.totalorder %s28, 0
    %p374 = por %p372, %p373
    %p375 = scmp.ne.s32.totalorder %s363, %s364
    %p376 = scmp.eq.s32.totalorder %s29, 1
    %p377 = por %p375, %p376
    %p379 = scmp.ne.s32.totalorder %s364, %s378
    %p380 = scmp.eq.s32.totalorder %s29, 0
    %p381 = por %p379, %p380
    %s383 = sadd.s32 %s382, 1
    %p386 = scmp.eq.s32.totalorder %s23, 1
    %p387 = scmp.ne.s32.totalorder %s382, %s384
    %p388 = scmp.eq.s32.totalorder %s23, 0
    %p389 = por %p387, %p388
    %p390 = scmp.ne.s32.totalorder %s382, %s384
    %p391 = scmp.eq.s32.totalorder %s28, 1
    %p392 = por %p390, %p391
    %p393 = scmp.ne.s32.totalorder %s384, %s385
    %p394 = scmp.eq.s32.totalorder %s28, 0
    %p395 = por %p393, %p394
    %p396 = scmp.ne.s32.totalorder %s384, %s385
    %p397 = scmp.eq.s32.totalorder %s29, 1
    %p398 = por %p396, %p397
    %p400 = scmp.ne.s32.totalorder %s385, %s399
    %p401 = scmp.eq.s32.totalorder %s29, 0
    %p402 = por %p400, %p401
    %s403 = ssub.s32 %s23, %s30
    %p404 = scmp.eq.s32.totalorder %s403, 0
    %s406 = sadd.s32 %s405, 1
    %s407 = scalar_select %p404, %s405, %s406
    %p410 = pneg %p404
    %p411 = scmp.eq.s32.totalorder %s23, 1
    %p412 = por %p410, %p411
    %p413 = scmp.ne.s32.totalorder %s405, %s408
    %p414 = scmp.eq.s32.totalorder %s23, 0
    %p415 = por %p413, %p414
    %p416 = scmp.ne.s32.totalorder %s405, %s408
    %p417 = scmp.eq.s32.totalorder %s28, 1
    %p418 = por %p416, %p417
    %p419 = scmp.ne.s32.totalorder %s408, %s409
    %p420 = scmp.eq.s32.totalorder %s28, 0
    %p421 = por %p419, %p420
    %p422 = scmp.ne.s32.totalorder %s408, %s409
    %p423 = scmp.eq.s32.totalorder %s29, 1
    %p424 = por %p422, %p423
    %p426 = scmp.ne.s32.totalorder %s409, %s425
    %p427 = scmp.eq.s32.totalorder %s29, 0
    %p428 = por %p426, %p427
    %p429 = scmp.le.s32.totalorder 1, %s23
    %p430 = scmp.lt.s32.totalorder %s23, 3
    %p431 = pnand %p429, %p430
    %p432 = pneg %p431
    // Predicated region
    $region9: #{tpu_custom_call.1} parent=5 // pred_check
      _
    $region10: #{tpu_custom_call.1} parent=5 // pred_check_branch
      %434 = sbr.rel (%p431) target = $region12
    $region11: #{tpu_custom_call.1} parent=5 // pred_region
      %s435 = ssub.s32 %s23, 1
      // Predicated region
      $region13: #{tpu_custom_call.1} parent=11 // pred_check
        %p436 = pneg %p122
      $region14: #{tpu_custom_call.1} parent=11 // pred_check_branch
        %438 = sbr.rel (%p436) target = $region16
      $region15: #{tpu_custom_call.1} parent=11 // pred_region
        _
      $region16: #{tpu_custom_call.1} parent=11 // pred_fallthru
        _
      // Predicated region
      $region17: #{tpu_custom_call.1} parent=11 // pred_check
        %p439 = pneg %p143
      $region18: #{tpu_custom_call.1} parent=11 // pred_check_branch
        %441 = sbr.rel (%p439) target = $region20
      $region19: #{tpu_custom_call.1} parent=11 // pred_region
        _
      $region20: #{tpu_custom_call.1} parent=11 // pred_fallthru
        _
      // Predicated region
      $region21: #{tpu_custom_call.1} parent=11 // pred_check
        %p442 = pneg %p164
      $region22: #{tpu_custom_call.1} parent=11 // pred_check_branch
        %444 = sbr.rel (%p442) target = $region24
      $region23: #{tpu_custom_call.1} parent=11 // pred_region
        _
      $region24: #{tpu_custom_call.1} parent=11 // pred_fallthru
        _
      // Predicated region
      $region25: #{tpu_custom_call.1} parent=11 // pred_check
        %p445 = pneg %p185
      $region26: #{tpu_custom_call.1} parent=11 // pred_check_branch
        %447 = sbr.rel (%p445) target = $region28
      $region27: #{tpu_custom_call.1} parent=11 // pred_region
        _
      $region28: #{tpu_custom_call.1} parent=11 // pred_fallthru
        _
      // Predicated region
      $region29: #{tpu_custom_call.1} parent=11 // pred_check
        %p448 = pneg %p206
      $region30: #{tpu_custom_call.1} parent=11 // pred_check_branch
        %450 = sbr.rel (%p448) target = $region32
      $region31: #{tpu_custom_call.1} parent=11 // pred_region
        _
      $region32: #{tpu_custom_call.1} parent=11 // pred_fallthru
        _
      // Predicated region
      $region33: #{tpu_custom_call.1} parent=11 // pred_check
        %p451 = pneg %p227
      $region34: #{tpu_custom_call.1} parent=11 // pred_check_branch
        %453 = sbr.rel (%p451) target = $region36
      $region35: #{tpu_custom_call.1} parent=11 // pred_region
        _
      $region36: #{tpu_custom_call.1} parent=11 // pred_fallthru
        _
      // Predicated region
      $region37: #{tpu_custom_call.1} parent=11 // pred_check
        %p454 = pneg %p248
      $region38: #{tpu_custom_call.1} parent=11 // pred_check_branch
        %456 = sbr.rel (%p454) target = $region40
      $region39: #{tpu_custom_call.1} parent=11 // pred_region
        _
      $region40: #{tpu_custom_call.1} parent=11 // pred_fallthru
        _
      // Predicated region
      $region41: #{tpu_custom_call.1} parent=11 // pred_check
        %p457 = pneg %p269
      $region42: #{tpu_custom_call.1} parent=11 // pred_check_branch
        %459 = sbr.rel (%p457) target = $region44
      $region43: #{tpu_custom_call.1} parent=11 // pred_region
        _
      $region44: #{tpu_custom_call.1} parent=11 // pred_fallthru
        _
      // Predicated region
      $region45: #{tpu_custom_call.1} parent=11 // pred_check
        %p460 = pneg %p290
      $region46: #{tpu_custom_call.1} parent=11 // pred_check_branch
        %462 = sbr.rel (%p460) target = $region48
      $region47: #{tpu_custom_call.1} parent=11 // pred_region
        _
      $region48: #{tpu_custom_call.1} parent=11 // pred_fallthru
        _
      // Predicated region
      $region49: #{tpu_custom_call.1} parent=11 // pred_check
        %p463 = pneg %p311
      $region50: #{tpu_custom_call.1} parent=11 // pred_check_branch
        %465 = sbr.rel (%p463) target = $region52
      $region51: #{tpu_custom_call.1} parent=11 // pred_region
        _
      $region52: #{tpu_custom_call.1} parent=11 // pred_fallthru
        _
      // Predicated region
      $region53: #{tpu_custom_call.1} parent=11 // pred_check
        %p466 = pneg %p332
      $region54: #{tpu_custom_call.1} parent=11 // pred_check_branch
        %468 = sbr.rel (%p466) target = $region56
      $region55: #{tpu_custom_call.1} parent=11 // pred_region
        _
      $region56: #{tpu_custom_call.1} parent=11 // pred_fallthru
        _
      // Predicated region
      $region57: #{tpu_custom_call.1} parent=11 // pred_check
        %p469 = pneg %p353
      $region58: #{tpu_custom_call.1} parent=11 // pred_check_branch
        %471 = sbr.rel (%p469) target = $region60
      $region59: #{tpu_custom_call.1} parent=11 // pred_region
        _
      $region60: #{tpu_custom_call.1} parent=11 // pred_fallthru
        _
      // Predicated region
      $region61: #{tpu_custom_call.1} parent=11 // pred_check
        %p472 = pneg %p374
      $region62: #{tpu_custom_call.1} parent=11 // pred_check_branch
        %474 = sbr.rel (%p472) target = $region64
      $region63: #{tpu_custom_call.1} parent=11 // pred_region
        _
      $region64: #{tpu_custom_call.1} parent=11 // pred_fallthru
        _
      // Predicated region
      $region65: #{tpu_custom_call.1} parent=11 // pred_check
        %p475 = pneg %p395
      $region66: #{tpu_custom_call.1} parent=11 // pred_check_branch
        %477 = sbr.rel (%p475) target = $region68
      $region67: #{tpu_custom_call.1} parent=11 // pred_region
        _
      $region68: #{tpu_custom_call.1} parent=11 // pred_fallthru
        _
    $region12: #{tpu_custom_call.1} parent=5 // pred_fallthru
      _
    %p478 = scmp.lt.s32.totalorder %s23, 2
    // Predicated region
    $region69: #{tpu_custom_call.1} parent=5 // pred_check
      %p479 = pneg %p478
    $region70: #{tpu_custom_call.1} parent=5 // pred_check_branch
      %481 = sbr.rel (%p479) target = $region72
    $region71: #{tpu_custom_call.1} parent=5 // pred_region
      // Predicated region
      $region73: #{tpu_custom_call.1} parent=71 // pred_check
        %p482 = pneg %p43
      $region74: #{tpu_custom_call.1} parent=71 // pred_check_branch
        %484 = sbr.rel (%p482) target = $region76
      $region75: #{tpu_custom_call.1} parent=71 // pred_region
        %p485 = scmp.lt.s32.totalorder %s23, 1
        %s486 = scalar_select %p485, %s23, 1
        %s487 = smul.addr %s486, 16
        %s488 = smul.addr %s487, 8
        %s489 = scalar_lea.vmem %s0, %s488
      $region76: #{tpu_custom_call.1} parent=71 // pred_fallthru
        _
      // Predicated region
      $region77: #{tpu_custom_call.1} parent=71 // pred_check
        %p490 = pneg %p69
      $region78: #{tpu_custom_call.1} parent=71 // pred_check_branch
        %492 = sbr.rel (%p490) target = $region80
      $region79: #{tpu_custom_call.1} parent=71 // pred_region
        %p493 = scmp.lt.s32.totalorder %s23, 1
        %s494 = scalar_select %p493, %s23, 1
        %s495 = smul.addr %s494, 16
        %s496 = smul.addr %s495, 8
        %s497 = scalar_lea.vmem %s1, %s496
      $region80: #{tpu_custom_call.1} parent=71 // pred_fallthru
        _
      // Predicated region
      $region81: #{tpu_custom_call.1} parent=71 // pred_check
        %p498 = pneg %p95
      $region82: #{tpu_custom_call.1} parent=71 // pred_check_branch
        %500 = sbr.rel (%p498) target = $region84
      $region83: #{tpu_custom_call.1} parent=71 // pred_region
        %p501 = scmp.lt.s32.totalorder %s23, 1
        %s502 = scalar_select %p501, %s23, 1
        %s503 = scalar_lea.vmem %s2, %s502
      $region84: #{tpu_custom_call.1} parent=71 // pred_fallthru
        _
    $region72: #{tpu_custom_call.1} parent=5 // pred_fallthru
      _
    %p504 = scmp.le.s32.totalorder 1, %s23
    %p505 = scmp.lt.s32.totalorder %s23, 3
    %p506 = pnand %p504, %p505
    %p507 = pneg %p506
    // Predicated region
    $region85: #{tpu_custom_call.1} parent=5 // pred_check
      _
    $region86: #{tpu_custom_call.1} parent=5 // pred_check_branch
      %509 = sbr.rel (%p506) target = $region88
    $region87: #{tpu_custom_call.1} parent=5 // pred_region
      %s510 = ssub.s32 %s23, 1
      %p511 = scmp.lt.s32.totalorder %s28, 1
      %s512 = scalar_select %p511, %s28, 1
      %s513 = smul.addr %s512, 16
      %s514 = smul.addr %s513, 8
      %s515 = scalar_lea.vmem %s0, %s514
      %p516 = pneg %p49
      %p517 = pneg %p46
      %p518 = scmp.lt.s32.totalorder %s28, 1
      %s519 = scalar_select %p518, %s28, 1
      %s520 = smul.addr %s519, 16
      %s521 = smul.addr %s520, 8
      %s522 = scalar_lea.vmem %s1, %s521
      %p523 = pneg %p75
      %p524 = pneg %p72
      %p525 = scmp.lt.s32.totalorder %s28, 1
      %s526 = scalar_select %p525, %s28, 1
      %s527 = scalar_lea.vmem %s2, %s526
      %p528 = pneg %p101
      %p529 = pneg %p98
      %p530 = pneg %p122
      %p531 = pneg %p119
      %p532 = pneg %p143
      %p533 = pneg %p140
      %p534 = pneg %p164
      %p535 = pneg %p161
      %p536 = pneg %p185
      %p537 = pneg %p182
      %p538 = pneg %p206
      %p539 = pneg %p203
      %p540 = pneg %p227
      %p541 = pneg %p224
      %p542 = pneg %p248
      %p543 = pneg %p245
      %p544 = pneg %p269
      %p545 = pneg %p266
      %p546 = pneg %p290
      %p547 = pneg %p287
      %p548 = pneg %p311
      %p549 = pneg %p308
      %p550 = pneg %p332
      %p551 = pneg %p329
      %p552 = pneg %p353
      %p553 = pneg %p350
      %p554 = pneg %p374
      %p555 = pneg %p371
      %p556 = pneg %p395
      %p557 = pneg %p392
      %p558 = pneg %p421
      %p559 = pneg %p418
      %p560 = scmp.lt.s32.totalorder %s28, 1
      %s561 = scalar_select %p560, %s28, 1
      %s562 = smul.addr %s561, 16
      %s563 = smul.addr %s562, 8
      %s564 = scalar_lea.vmem %s17, %s563
      %p565 = scmp.lt.s32.totalorder %s28, 1
      %s566 = scalar_select %p565, %s28, 1
      %s567 = smul.addr %s566, 16
      %s568 = smul.addr %s567, 8
      %s569 = scalar_lea.vmem %s0, %s568
      %p570 = scmp.lt.s32.totalorder %s28, 1
      %s571 = scalar_select %p570, %s28, 1
      %s572 = smul.addr %s571, 16
      %s573 = smul.addr %s572, 8
      %s574 = scalar_lea.vmem %s1, %s573
      %p575 = scmp.lt.s32.totalorder %s28, 1
      %s576 = scalar_select %p575, %s28, 1
      %s577 = scalar_lea.vmem %s2, %s576
      %p578 = scmp.lt.s32.totalorder %s28, 1
      %s579 = scalar_select %p578, %s28, 1
      %s580 = smul.addr %s579, 16
      %s581 = smul.addr %s580, 8
      %s582 = scalar_lea.vmem %s17, %s581
      %v583 = vld [vmem:[%s569] sm:$0xff]
      %v584 = vld [vmem:[%s569 + $0x8] sm:$0xff]
      %v585 = vld [vmem:[%s569 + $0x10] sm:$0xff]
      %v586 = vld [vmem:[%s569 + $0x18] sm:$0xff]
      %v587 = vld [vmem:[%s569 + $0x20] sm:$0xff]
      %v588 = vld [vmem:[%s569 + $0x28] sm:$0xff]
      %v589 = vld [vmem:[%s569 + $0x30] sm:$0xff]
      %v590 = vld [vmem:[%s569 + $0x38] sm:$0xff]
      %v591 = vld [vmem:[%s569 + $0x40] sm:$0xff]
      %v592 = vld [vmem:[%s569 + $0x48] sm:$0xff]
      %v593 = vld [vmem:[%s569 + $0x50] sm:$0xff]
      %v594 = vld [vmem:[%s569 + $0x58] sm:$0xff]
      %v595 = vld [vmem:[%s569 + $0x60] sm:$0xff]
      %v596 = vld [vmem:[%s569 + $0x68] sm:$0xff]
      %v597 = vld [vmem:[%s569 + $0x70] sm:$0xff]
      %v598 = vld [vmem:[%s569 + $0x78] sm:$0xff]
      %v599 = vld [vmem:[%s3] sm:$0x1]
      %601 = vset.pattern.permute.xlu0 0
      %602 = vperm.xlu0 %601, %v583
      %v603 = vpop.permute.xlu0 %602
      %606 = vset.pattern.permute.xlu0 0
      %607 = vperm.xlu0 %606, %v584
      %v608 = vpop.permute.xlu0 %607
      %611 = vset.pattern.permute.xlu0 0
      %612 = vperm.xlu0 %611, %v585
      %v613 = vpop.permute.xlu0 %612
      %616 = vset.pattern.permute.xlu0 0
      %617 = vperm.xlu0 %616, %v586
      %v618 = vpop.permute.xlu0 %617
      %621 = vset.pattern.permute.xlu0 0
      %622 = vperm.xlu0 %621, %v587
      %v623 = vpop.permute.xlu0 %622
      %626 = vset.pattern.permute.xlu0 0
      %627 = vperm.xlu0 %626, %v588
      %v628 = vpop.permute.xlu0 %627
      %631 = vset.pattern.permute.xlu0 0
      %632 = vperm.xlu0 %631, %v589
      %v633 = vpop.permute.xlu0 %632
      %636 = vset.pattern.permute.xlu0 0
      %637 = vperm.xlu0 %636, %v590
      %v638 = vpop.permute.xlu0 %637
      %641 = vset.pattern.permute.xlu0 0
      %642 = vperm.xlu0 %641, %v591
      %v643 = vpop.permute.xlu0 %642
      %646 = vset.pattern.permute.xlu0 0
      %647 = vperm.xlu0 %646, %v592
      %v648 = vpop.permute.xlu0 %647
      %651 = vset.pattern.permute.xlu0 0
      %652 = vperm.xlu0 %651, %v593
      %v653 = vpop.permute.xlu0 %652
      %656 = vset.pattern.permute.xlu0 0
      %657 = vperm.xlu0 %656, %v594
      %v658 = vpop.permute.xlu0 %657
      %661 = vset.pattern.permute.xlu0 0
      %662 = vperm.xlu0 %661, %v595
      %v663 = vpop.permute.xlu0 %662
      %666 = vset.pattern.permute.xlu0 0
      %667 = vperm.xlu0 %666, %v596
      %v668 = vpop.permute.xlu0 %667
      %671 = vset.pattern.permute.xlu0 0
      %672 = vperm.xlu0 %671, %v597
      %v673 = vpop.permute.xlu0 %672
      %676 = vset.pattern.permute.xlu0 0
      %677 = vperm.xlu0 %676, %v598
      %v678 = vpop.permute.xlu0 %677
      %v681 = vlaneseq
      %v682 = vshrl.u32 %v681, 7
      %v683 = vsub.s32 0, %v682
      %v684 = vrot.slane %v599, %v683
      %v686 = vmul.f32 %v603, %v684
      %v687 = vmul.f32 %v608, %v684
      %v688 = vmul.f32 %v613, %v684
      %v689 = vmul.f32 %v618, %v684
      %v690 = vmul.f32 %v623, %v684
      %v691 = vmul.f32 %v628, %v684
      %v692 = vmul.f32 %v633, %v684
      %v693 = vmul.f32 %v638, %v684
      %v694 = vmul.f32 %v643, %v684
      %v695 = vmul.f32 %v648, %v684
      %v696 = vmul.f32 %v653, %v684
      %v697 = vmul.f32 %v658, %v684
      %v698 = vmul.f32 %v663, %v684
      %v699 = vmul.f32 %v668, %v684
      %v700 = vmul.f32 %v673, %v684
      %v701 = vmul.f32 %v678, %v684
      %v702 = vld [vmem:[%s4] sm:$0x1]
      %v704 = vlaneseq
      %v705 = vshrl.u32 %v704, 7
      %v706 = vsub.s32 0, %v705
      %v707 = vrot.slane %v702, %v706
      %v709 = vadd.f32 %v686, %v707
      %v710 = vadd.f32 %v687, %v707
      %v711 = vadd.f32 %v688, %v707
      %v712 = vadd.f32 %v689, %v707
      %v713 = vadd.f32 %v690, %v707
      %v714 = vadd.f32 %v691, %v707
      %v715 = vadd.f32 %v692, %v707
      %v716 = vadd.f32 %v693, %v707
      %v717 = vadd.f32 %v694, %v707
      %v718 = vadd.f32 %v695, %v707
      %v719 = vadd.f32 %v696, %v707
      %v720 = vadd.f32 %v697, %v707
      %v721 = vadd.f32 %v698, %v707
      %v722 = vadd.f32 %v699, %v707
      %v723 = vadd.f32 %v700, %v707
      %v724 = vadd.f32 %v701, %v707
      %v725 = vld [vmem:[%s574] sm:$0xff]
      %v726 = vld [vmem:[%s574 + $0x8] sm:$0xff]
      %v727 = vld [vmem:[%s574 + $0x10] sm:$0xff]
      %v728 = vld [vmem:[%s574 + $0x18] sm:$0xff]
      %v729 = vld [vmem:[%s574 + $0x20] sm:$0xff]
      %v730 = vld [vmem:[%s574 + $0x28] sm:$0xff]
      %v731 = vld [vmem:[%s574 + $0x30] sm:$0xff]
      %v732 = vld [vmem:[%s574 + $0x38] sm:$0xff]
      %v733 = vld [vmem:[%s574 + $0x40] sm:$0xff]
      %v734 = vld [vmem:[%s574 + $0x48] sm:$0xff]
      %v735 = vld [vmem:[%s574 + $0x50] sm:$0xff]
      %v736 = vld [vmem:[%s574 + $0x58] sm:$0xff]
      %v737 = vld [vmem:[%s574 + $0x60] sm:$0xff]
      %v738 = vld [vmem:[%s574 + $0x68] sm:$0xff]
      %v739 = vld [vmem:[%s574 + $0x70] sm:$0xff]
      %v740 = vld [vmem:[%s574 + $0x78] sm:$0xff]
      %v741 = vadd.f32 %v709, %v725
      %v742 = vadd.f32 %v710, %v726
      %v743 = vadd.f32 %v711, %v727
      %v744 = vadd.f32 %v712, %v728
      %v745 = vadd.f32 %v713, %v729
      %v746 = vadd.f32 %v714, %v730
      %v747 = vadd.f32 %v715, %v731
      %v748 = vadd.f32 %v716, %v732
      %v749 = vadd.f32 %v717, %v733
      %v750 = vadd.f32 %v718, %v734
      %v751 = vadd.f32 %v719, %v735
      %v752 = vadd.f32 %v720, %v736
      %v753 = vadd.f32 %v721, %v737
      %v754 = vadd.f32 %v722, %v738
      %v755 = vadd.f32 %v723, %v739
      %v756 = vadd.f32 %v724, %v740
      %v757 = vld [vmem:[%s577] sm:$0x1]
      %v758 = vld [vmem:[%s5] sm:$0xff]
      %v759 = vld [vmem:[%s5 + $0x8] sm:$0xff]
      %v760 = vld [vmem:[%s5 + $0x10] sm:$0xff]
      %v761 = vld [vmem:[%s5 + $0x18] sm:$0xff]
      %v762 = vld [vmem:[%s6] sm:$0x1]
      %v763 = vld [vmem:[%s7] sm:$0xff]
      %v764 = vld [vmem:[%s7 + $0x8] sm:$0xff]
      %v765 = vld [vmem:[%s7 + $0x10] sm:$0xff]
      %v766 = vld [vmem:[%s7 + $0x18] sm:$0xff]
      %v767 = vld [vmem:[%s8] sm:$0x1]
      %v768 = vld [vmem:[%s9] sm:$0x1]
      %v769 = vld [vmem:[%s10] sm:$0x1]
      %v770 = vld [vmem:[%s11] sm:$0xff]
      %v771 = vld [vmem:[%s11 + $0x8] sm:$0xff]
      %v772 = vld [vmem:[%s11 + $0x10] sm:$0xff]
      %v773 = vld [vmem:[%s11 + $0x18] sm:$0xff]
      %v774 = vld [vmem:[%s12] sm:$0x1]
      %v775 = vld [vmem:[%s13] sm:$0xff]
      %v776 = vld [vmem:[%s13 + $0x8] sm:$0xff]
      %v777 = vld [vmem:[%s13 + $0x10] sm:$0xff]
      %v778 = vld [vmem:[%s13 + $0x18] sm:$0xff]
      %v779 = vld [vmem:[%s13 + $0x20] sm:$0xff]
      %v780 = vld [vmem:[%s13 + $0x28] sm:$0xff]
      %v781 = vld [vmem:[%s13 + $0x30] sm:$0xff]
      %v782 = vld [vmem:[%s13 + $0x38] sm:$0xff]
      %v783 = vld [vmem:[%s14] sm:$0x1]
      %v784 = vld [vmem:[%s15] sm:$0x1]
      %v785 = vld [vmem:[%s16] sm:$0x1]
      %v787 = vlaneseq
      %v788 = vshrl.u32 %v787, 7
      %v789 = vsub.s32 0, %v788
      %v790 = vrot.slane %v762, %v789
      %vm792 = vcmask 261120
      %v794 = vsel %vm792, %v741, 0
      %v797 = vsel %vm792, %v742, 0
      %v800 = vsel %vm792, %v743, 0
      %v803 = vsel %vm792, %v744, 0
      %v806 = vsel %vm792, %v745, 0
      %v809 = vsel %vm792, %v746, 0
      %v812 = vsel %vm792, %v747, 0
      %v815 = vsel %vm792, %v748, 0
      %v818 = vsel %vm792, %v749, 0
      %v821 = vsel %vm792, %v750, 0
      %v824 = vsel %vm792, %v751, 0
      %v827 = vsel %vm792, %v752, 0
      %v830 = vsel %vm792, %v753, 0
      %v833 = vsel %vm792, %v754, 0
      %v836 = vsel %vm792, %v755, 0
      %v839 = vsel %vm792, %v756, 0
      %841 = vmatprep.subr.mxu0 0.0
      %842 = vmatpush1.msra.mxu0 %v758
      %843 = vmatprep.subr.mxu0 0.0
      %844 = vmatpush1.msra.mxu0 %v759
      %845 = vmatprep.subr.mxu0 0.0
      %846 = vmatpush1.msra.mxu0 %v760
      %847 = vmatprep.subr.mxu0 0.0
      %848 = vmatpush1.msra.mxu0 %v761
      %849 = vmatprep.subr.mxu0 0.0
      %850 = vmatpush1.msra.mxu0 0.0
      %851 = vmatprep.subr.mxu0 0.0
      %852 = vmatpush1.msra.mxu0 0.0
      %853 = vmatprep.subr.mxu0 0.0
      %854 = vmatpush1.msra.mxu0 0.0
      %855 = vmatprep.subr.mxu0 0.0
      %856 = vmatpush1.msra.mxu0 0.0
      %857 = vmatprep.subr.mxu0 0.0
      %858 = vmatpush1.msra.mxu0 0.0
      %859 = vmatprep.subr.mxu0 0.0
      %860 = vmatpush1.msra.mxu0 0.0
      %861 = vmatprep.subr.mxu0 0.0
      %862 = vmatpush1.msra.mxu0 0.0
      %863 = vmatprep.subr.mxu0 0.0
      %864 = vmatpush1.msra.mxu0 0.0
      %865 = vmatprep.subr.mxu0 0.0
      %866 = vmatpush1.msra.mxu0 0.0
      %867 = vmatprep.subr.mxu0 0.0
      %868 = vmatpush1.msra.mxu0 0.0
      %869 = vmatprep.subr.mxu0 0.0
      %870 = vmatpush1.msra.mxu0 0.0
      %871 = vmatprep.subr.mxu0 0.0
      %872 = vmatpush1.msra.mxu0 0.0
      %873 = vmatprep.subr.mxu0 0.0
      %874 = vmatpush1.msra.mxu0 0.0
      %875 = vmatprep.subr.mxu0 0.0
      %876 = vmatpush1.msra.mxu0 0.0
      %877 = vmatprep.subr.mxu0 0.0
      %878 = vmatpush1.msra.mxu0 0.0
      %879 = vmatprep.subr.mxu0 0.0
      %880 = vmatpush1.msra.mxu0 0.0
      %881 = vmatprep.subr.mxu0 0.0
      %882 = vmatpush1.msra.mxu0 0.0
      %883 = vmatprep.subr.mxu0 0.0
      %884 = vmatpush1.msra.mxu0 0.0
      %885 = vmatprep.subr.mxu0 0.0
      %886 = vmatpush1.msra.mxu0 0.0
      %887 = vmatprep.subr.mxu0 0.0
      %888 = vmatpush1.msra.mxu0 0.0
      %889 = vmatprep.subr.mxu0 0.0
      %890 = vmatpush1.msra.mxu0 0.0
      %891 = vmatprep.subr.mxu0 0.0
      %892 = vmatpush1.msra.mxu0 0.0
      %893 = vmatprep.subr.mxu0 0.0
      %894 = vmatpush1.msra.mxu0 0.0
      %895 = vmatprep.subr.mxu0 0.0
      %896 = vmatpush1.msra.mxu0 0.0
      %897 = vmatprep.subr.mxu0 0.0
      %898 = vmatpush1.msra.mxu0 0.0
      %899 = vmatprep.subr.mxu0 0.0
      %900 = vmatpush1.msra.mxu0 0.0
      %901 = vmatprep.subr.mxu0 0.0
      %902 = vmatpush1.msra.mxu0 0.0
      %903 = vmatprep.subr.mxu0 0.0
      %904 = vmatpush1.msra.mxu0 0.0
      %905 = vmatprep.mubr.f32.mxu0 0.0
      %906 = vmatmul.mubr.f32.gmra.mrb[0].mxu0 %v794
      %v907 = vpop.f32.mrb[0].mxu0
      %v908 = vadd.f32 %v790, %v907
      %v909 = vpop.f32.mrb[0].mxu0
      %910 = vmatprep.mubr.f32.mxu0 0.0
      %911 = vmatmul.mubr.f32.gmra.mrb[0].mxu0 %v797
      %v912 = vpop.f32.mrb[0].mxu0
      %v913 = vadd.f32 %v790, %v912
      %v914 = vpop.f32.mrb[0].mxu0
      %915 = vmatprep.mubr.f32.mxu0 0.0
      %916 = vmatmul.mubr.f32.gmra.mrb[0].mxu0 %v800
      %v917 = vpop.f32.mrb[0].mxu0
      %v918 = vadd.f32 %v790, %v917
      %v919 = vpop.f32.mrb[0].mxu0
      %920 = vmatprep.mubr.f32.mxu0 0.0
      %921 = vmatmul.mubr.f32.gmra.mrb[0].mxu0 %v803
      %v922 = vpop.f32.mrb[0].mxu0
      %v923 = vadd.f32 %v790, %v922
      %v924 = vpop.f32.mrb[0].mxu0
      %925 = vmatprep.mubr.f32.mxu0 0.0
      %926 = vmatmul.mubr.f32.gmra.mrb[0].mxu0 %v806
      %v927 = vpop.f32.mrb[0].mxu0
      %v928 = vadd.f32 %v790, %v927
      %v929 = vpop.f32.mrb[0].mxu0
      %930 = vmatprep.mubr.f32.mxu0 0.0
      %931 = vmatmul.mubr.f32.gmra.mrb[0].mxu0 %v809
      %v932 = vpop.f32.mrb[0].mxu0
      %v933 = vadd.f32 %v790, %v932
      %v934 = vpop.f32.mrb[0].mxu0
      %935 = vmatprep.mubr.f32.mxu0 0.0
      %936 = vmatmul.mubr.f32.gmra.mrb[0].mxu0 %v812
      %v937 = vpop.f32.mrb[0].mxu0
      %v938 = vadd.f32 %v790, %v937
      %v939 = vpop.f32.mrb[0].mxu0
      %940 = vmatprep.mubr.f32.mxu0 0.0
      %941 = vmatmul.mubr.f32.gmra.mrb[0].mxu0 %v815
      %v942 = vpop.f32.mrb[0].mxu0
      %v943 = vadd.f32 %v790, %v942
      %v944 = vpop.f32.mrb[0].mxu0
      %945 = vmatprep.mubr.f32.mxu0 0.0
      %946 = vmatmul.mubr.f32.gmra.mrb[0].mxu0 %v818
      %v947 = vpop.f32.mrb[0].mxu0
      %v948 = vadd.f32 %v790, %v947
      %v949 = vpop.f32.mrb[0].mxu0
      %950 = vmatprep.mubr.f32.mxu0 0.0
      %951 = vmatmul.mubr.f32.gmra.mrb[0].mxu0 %v821
      %v952 = vpop.f32.mrb[0].mxu0
      %v953 = vadd.f32 %v790, %v952
      %v954 = vpop.f32.mrb[0].mxu0
      %955 = vmatprep.mubr.f32.mxu0 0.0
      %956 = vmatmul.mubr.f32.gmra.mrb[0].mxu0 %v824
      %v957 = vpop.f32.mrb[0].mxu0
      %v958 = vadd.f32 %v790, %v957
      %v959 = vpop.f32.mrb[0].mxu0
      %960 = vmatprep.mubr.f32.mxu0 0.0
      %961 = vmatmul.mubr.f32.gmra.mrb[0].mxu0 %v827
      %v962 = vpop.f32.mrb[0].mxu0
      %v963 = vadd.f32 %v790, %v962
      %v964 = vpop.f32.mrb[0].mxu0
      %965 = vmatprep.mubr.f32.mxu0 0.0
      %966 = vmatmul.mubr.f32.gmra.mrb[0].mxu0 %v830
      %v967 = vpop.f32.mrb[0].mxu0
      %v968 = vadd.f32 %v790, %v967
      %v969 = vpop.f32.mrb[0].mxu0
      %970 = vmatprep.mubr.f32.mxu0 0.0
      %971 = vmatmul.mubr.f32.gmra.mrb[0].mxu0 %v833
      %v972 = vpop.f32.mrb[0].mxu0
      %v973 = vadd.f32 %v790, %v972
      %v974 = vpop.f32.mrb[0].mxu0
      %975 = vmatprep.mubr.f32.mxu0 0.0
      %976 = vmatmul.mubr.f32.gmra.mrb[0].mxu0 %v836
      %v977 = vpop.f32.mrb[0].mxu0
      %v978 = vadd.f32 %v790, %v977
      %v979 = vpop.f32.mrb[0].mxu0
      %980 = vmatprep.mubr.f32.mxu0 0.0
      %981 = vmatmul.mubr.f32.gmra.mrb[0].mxu0 %v839
      %v982 = vpop.f32.mrb[0].mxu0
      %v983 = vadd.f32 %v790, %v982
      %v984 = vpop.f32.mrb[0].mxu0
      %985 = vdwg.mxu0
      %1002 = vrot.lane.b32.xlu0 %v908, 96
      %v1003 = vpop.permute.xlu0 %1002
      %1004 = vrot.lane.b32.xlu0 %v913, 96
      %v1005 = vpop.permute.xlu0 %1004
      %1006 = vrot.lane.b32.xlu0 %v918, 96
      %v1007 = vpop.permute.xlu0 %1006
      %1008 = vrot.lane.b32.xlu0 %v923, 96
      %v1009 = vpop.permute.xlu0 %1008
      %1010 = vrot.lane.b32.xlu0 %v928, 96
      %v1011 = vpop.permute.xlu0 %1010
      %1012 = vrot.lane.b32.xlu0 %v933, 96
      %v1013 = vpop.permute.xlu0 %1012
      %1014 = vrot.lane.b32.xlu0 %v938, 96
      %v1015 = vpop.permute.xlu0 %1014
      %1016 = vrot.lane.b32.xlu0 %v943, 96
      %v1017 = vpop.permute.xlu0 %1016
      %1018 = vrot.lane.b32.xlu0 %v948, 96
      %v1019 = vpop.permute.xlu0 %1018
      %1020 = vrot.lane.b32.xlu0 %v953, 96
      %v1021 = vpop.permute.xlu0 %1020
      %1022 = vrot.lane.b32.xlu0 %v958, 96
      %v1023 = vpop.permute.xlu0 %1022
      %1024 = vrot.lane.b32.xlu0 %v963, 96
      %v1025 = vpop.permute.xlu0 %1024
      %1026 = vrot.lane.b32.xlu0 %v968, 96
      %v1027 = vpop.permute.xlu0 %1026
      %1028 = vrot.lane.b32.xlu0 %v973, 96
      %v1029 = vpop.permute.xlu0 %1028
      %1030 = vrot.lane.b32.xlu0 %v978, 96
      %v1031 = vpop.permute.xlu0 %1030
      %1032 = vrot.lane.b32.xlu0 %v983, 96
      %v1033 = vpop.permute.xlu0 %1032
      %vm1034 = vcmask 64512
      %v1035 = vsel %vm1034, %v908, 0
      %v1037 = vsel %vm1034, %v913, 0
      %v1039 = vsel %vm1034, %v918, 0
      %v1041 = vsel %vm1034, %v923, 0
      %v1043 = vsel %vm1034, %v928, 0
      %v1045 = vsel %vm1034, %v933, 0
      %v1047 = vsel %vm1034, %v938, 0
      %v1049 = vsel %vm1034, %v943, 0
      %v1051 = vsel %vm1034, %v948, 0
      %v1053 = vsel %vm1034, %v953, 0
      %v1055 = vsel %vm1034, %v958, 0
      %v1057 = vsel %vm1034, %v963, 0
      %v1059 = vsel %vm1034, %v968, 0
      %v1061 = vsel %vm1034, %v973, 0
      %v1063 = vsel %vm1034, %v978, 0
      %v1065 = vsel %vm1034, %v983, 0
      %v1067 = vsel %vm1034, %v1003, 0
      %v1069 = vsel %vm1034, %v1005, 0
      %v1071 = vsel %vm1034, %v1007, 0
      %v1073 = vsel %vm1034, %v1009, 0
      %v1075 = vsel %vm1034, %v1011, 0
      %v1077 = vsel %vm1034, %v1013, 0
      %v1079 = vsel %vm1034, %v1015, 0
      %v1081 = vsel %vm1034, %v1017, 0
      %v1083 = vsel %vm1034, %v1019, 0
      %v1085 = vsel %vm1034, %v1021, 0
      %v1087 = vsel %vm1034, %v1023, 0
      %v1089 = vsel %vm1034, %v1025, 0
      %v1091 = vsel %vm1034, %v1027, 0
      %v1093 = vsel %vm1034, %v1029, 0
      %v1095 = vsel %vm1034, %v1031, 0
      %v1097 = vsel %vm1034, %v1033, 0
      %1099 = vmatprep.subr.mxu0 0.0
      %1100 = vmatpush1.xpose.msra.mxu0 %v1067
      %1101 = vmatprep.subr.mxu0 0.0
      %1102 = vmatpush1.xpose.msra.mxu0 %v1069
      %1103 = vmatprep.subr.mxu0 0.0
      %1104 = vmatpush1.xpose.msra.mxu0 %v1071
      %1105 = vmatprep.subr.mxu0 0.0
      %1106 = vmatpush1.xpose.msra.mxu0 %v1073
      %1107 = vmatprep.subr.mxu0 0.0
      %1108 = vmatpush1.xpose.msra.mxu0 %v1075
      %1109 = vmatprep.subr.mxu0 0.0
      %1110 = vmatpush1.xpose.msra.mxu0 %v1077
      %1111 = vmatprep.subr.mxu0 0.0
      %1112 = vmatpush1.xpose.msra.mxu0 %v1079
      %1113 = vmatprep.subr.mxu0 0.0
      %1114 = vmatpush1.xpose.msra.mxu0 %v1081
      %1115 = vmatprep.subr.mxu0 0.0
      %1116 = vmatpush1.xpose.msra.mxu0 %v1083
      %1117 = vmatprep.subr.mxu0 0.0
      %1118 = vmatpush1.xpose.msra.mxu0 %v1085
      %1119 = vmatprep.subr.mxu0 0.0
      %1120 = vmatpush1.xpose.msra.mxu0 %v1087
      %1121 = vmatprep.subr.mxu0 0.0
      %1122 = vmatpush1.xpose.msra.mxu0 %v1089
      %1123 = vmatprep.subr.mxu0 0.0
      %1124 = vmatpush1.xpose.msra.mxu0 %v1091
      %1125 = vmatprep.subr.mxu0 0.0
      %1126 = vmatpush1.xpose.msra.mxu0 %v1093
      %1127 = vmatprep.subr.mxu0 0.0
      %1128 = vmatpush1.xpose.msra.mxu0 %v1095
      %1129 = vmatprep.subr.mxu0 0.0
      %1130 = vmatpush1.xpose.msra.mxu0 %v1097
      %1131 = vmatprep.subr.mxu0 0.0
      %1132 = vmatpush1.xpose.msra.mxu0 0.0
      %1133 = vmatprep.subr.mxu0 0.0
      %1134 = vmatpush1.xpose.msra.mxu0 0.0
      %1135 = vmatprep.subr.mxu0 0.0
      %1136 = vmatpush1.xpose.msra.mxu0 0.0
      %1137 = vmatprep.subr.mxu0 0.0
      %1138 = vmatpush1.xpose.msra.mxu0 0.0
      %1139 = vmatprep.subr.mxu0 0.0
      %1140 = vmatpush1.xpose.msra.mxu0 0.0
      %1141 = vmatprep.subr.mxu0 0.0
      %1142 = vmatpush1.xpose.msra.mxu0 0.0
      %1143 = vmatprep.subr.mxu0 0.0
      %1144 = vmatpush1.xpose.msra.mxu0 0.0
      %1145 = vmatprep.subr.mxu0 0.0
      %1146 = vmatpush1.xpose.msra.mxu0 0.0
      %1147 = vmatprep.subr.mxu0 0.0
      %1148 = vmatpush1.xpose.msra.mxu0 0.0
      %1149 = vmatprep.subr.mxu0 0.0
      %1150 = vmatpush1.xpose.msra.mxu0 0.0
      %1151 = vmatprep.subr.mxu0 0.0
      %1152 = vmatpush1.xpose.msra.mxu0 0.0
      %1153 = vmatprep.subr.mxu0 0.0
      %1154 = vmatpush1.xpose.msra.mxu0 0.0
      %1155 = vmatprep.subr.mxu0 0.0
      %1156 = vmatpush1.xpose.msra.mxu0 0.0
      %1157 = vmatprep.subr.mxu0 0.0
      %1158 = vmatpush1.xpose.msra.mxu0 0.0
      %1159 = vmatprep.subr.mxu0 0.0
      %1160 = vmatpush1.xpose.msra.mxu0 0.0
      %1161 = vmatprep.subr.mxu0 0.0
      %1162 = vmatpush1.xpose.msra.mxu0 0.0
      %1163 = vmatprep.mubr.f32.mxu0 0.0
      %1164 = vmatmul.mubr.f32.gmra.mrb[0].mxu0 %v1035
      %v1165 = vpop.f32.mrb[0].mxu0
      %v1166 = vadd.f32 0.0, %v1165
      %v1167 = vpop.f32.mrb[0].mxu0
      %1168 = vmatprep.mubr.f32.mxu0 0.0
      %1169 = vmatmul.mubr.f32.gmra.mrb[0].mxu0 %v1037
      %v1170 = vpop.f32.mrb[0].mxu0
      %v1171 = vadd.f32 0.0, %v1170
      %v1172 = vpop.f32.mrb[0].mxu0
      %1173 = vmatprep.mubr.f32.mxu0 0.0
      %1174 = vmatmul.mubr.f32.gmra.mrb[0].mxu0 %v1039
      %v1175 = vpop.f32.mrb[0].mxu0
      %v1176 = vadd.f32 0.0, %v1175
      %v1177 = vpop.f32.mrb[0].mxu0
      %1178 = vmatprep.mubr.f32.mxu0 0.0
      %1179 = vmatmul.mubr.f32.gmra.mrb[0].mxu0 %v1041
      %v1180 = vpop.f32.mrb[0].mxu0
      %v1181 = vadd.f32 0.0, %v1180
      %v1182 = vpop.f32.mrb[0].mxu0
      %1183 = vmatprep.mubr.f32.mxu0 0.0
      %1184 = vmatmul.mubr.f32.gmra.mrb[0].mxu0 %v1043
      %v1185 = vpop.f32.mrb[0].mxu0
      %v1186 = vadd.f32 0.0, %v1185
      %v1187 = vpop.f32.mrb[0].mxu0
      %1188 = vmatprep.mubr.f32.mxu0 0.0
      %1189 = vmatmul.mubr.f32.gmra.mrb[0].mxu0 %v1045
      %v1190 = vpop.f32.mrb[0].mxu0
      %v1191 = vadd.f32 0.0, %v1190
      %v1192 = vpop.f32.mrb[0].mxu0
      %1193 = vmatprep.mubr.f32.mxu0 0.0
      %1194 = vmatmul.mubr.f32.gmra.mrb[0].mxu0 %v1047
      %v1195 = vpop.f32.mrb[0].mxu0
      %v1196 = vadd.f32 0.0, %v1195
      %v1197 = vpop.f32.mrb[0].mxu0
      %1198 = vmatprep.mubr.f32.mxu0 0.0
      %1199 = vmatmul.mubr.f32.gmra.mrb[0].mxu0 %v1049
      %v1200 = vpop.f32.mrb[0].mxu0
      %v1201 = vadd.f32 0.0, %v1200
      %v1202 = vpop.f32.mrb[0].mxu0
      %1203 = vmatprep.mubr.f32.mxu0 0.0
      %1204 = vmatmul.mubr.f32.gmra.mrb[0].mxu0 %v1051
      %v1205 = vpop.f32.mrb[0].mxu0
      %v1206 = vadd.f32 0.0, %v1205
      %v1207 = vpop.f32.mrb[0].mxu0
      %1208 = vmatprep.mubr.f32.mxu0 0.0
      %1209 = vmatmul.mubr.f32.gmra.mrb[0].mxu0 %v1053
      %v1210 = vpop.f32.mrb[0].mxu0
      %v1211 = vadd.f32 0.0, %v1210
      %v1212 = vpop.f32.mrb[0].mxu0
      %1213 = vmatprep.mubr.f32.mxu0 0.0
      %1214 = vmatmul.mubr.f32.gmra.mrb[0].mxu0 %v1055
      %v1215 = vpop.f32.mrb[0].mxu0
      %v1216 = vadd.f32 0.0, %v1215
      %v1217 = vpop.f32.mrb[0].mxu0
      %1218 = vmatprep.mubr.f32.mxu0 0.0
      %1219 = vmatmul.mubr.f32.gmra.mrb[0].mxu0 %v1057
      %v1220 = vpop.f32.mrb[0].mxu0
      %v1221 = vadd.f32 0.0, %v1220
      %v1222 = vpop.f32.mrb[0].mxu0
      %1223 = vmatprep.mubr.f32.mxu0 0.0
      %1224 = vmatmul.mubr.f32.gmra.mrb[0].mxu0 %v1059
      %v1225 = vpop.f32.mrb[0].mxu0
      %v1226 = vadd.f32 0.0, %v1225
      %v1227 = vpop.f32.mrb[0].mxu0
      %1228 = vmatprep.mubr.f32.mxu0 0.0
      %1229 = vmatmul.mubr.f32.gmra.mrb[0].mxu0 %v1061
      %v1230 = vpop.f32.mrb[0].mxu0
      %v1231 = vadd.f32 0.0, %v1230
      %v1232 = vpop.f32.mrb[0].mxu0
      %1233 = vmatprep.mubr.f32.mxu0 0.0
      %1234 = vmatmul.mubr.f32.gmra.mrb[0].mxu0 %v1063
      %v1235 = vpop.f32.mrb[0].mxu0
      %v1236 = vadd.f32 0.0, %v1235
      %v1237 = vpop.f32.mrb[0].mxu0
      %1238 = vmatprep.mubr.f32.mxu0 0.0
      %1239 = vmatmul.mubr.f32.gmra.mrb[0].mxu0 %v1065
      %v1240 = vpop.f32.mrb[0].mxu0
      %v1241 = vadd.f32 0.0, %v1240
      %v1242 = vpop.f32.mrb[0].mxu0
      %1243 = vdwg.mxu0
      %v1244 = vmul.f32 %v1166, 0.35355338
      %v1245 = vmul.f32 %v1171, 0.35355338
      %v1246 = vmul.f32 %v1176, 0.35355338
      %v1247 = vmul.f32 %v1181, 0.35355338
      %v1248 = vmul.f32 %v1186, 0.35355338
      %v1249 = vmul.f32 %v1191, 0.35355338
      %v1250 = vmul.f32 %v1196, 0.35355338
      %v1251 = vmul.f32 %v1201, 0.35355338
      %v1252 = vmul.f32 %v1206, 0.35355338
      %v1253 = vmul.f32 %v1211, 0.35355338
      %v1254 = vmul.f32 %v1216, 0.35355338
      %v1255 = vmul.f32 %v1221, 0.35355338
      %v1256 = vmul.f32 %v1226, 0.35355338
      %v1257 = vmul.f32 %v1231, 0.35355338
      %v1258 = vmul.f32 %v1236, 0.35355338
      %v1259 = vmul.f32 %v1241, 0.35355338
      %v1261 = vlaneseq
      %v1262 = vshrl.u32 %v1261, 7
      %v1263 = vsub.s32 0, %v1262
      %v1264 = vrot.slane %v757, %v1263
      %v1266 = vadd.f32 %v1244, %v1264
      %v1267 = vadd.f32 %v1245, %v1264
      %v1268 = vadd.f32 %v1246, %v1264
      %v1269 = vadd.f32 %v1247, %v1264
      %v1270 = vadd.f32 %v1248, %v1264
      %v1271 = vadd.f32 %v1249, %v1264
      %v1272 = vadd.f32 %v1250, %v1264
      %v1273 = vadd.f32 %v1251, %v1264
      %v1274 = vadd.f32 %v1252, %v1264
      %v1275 = vadd.f32 %v1253, %v1264
      %v1276 = vadd.f32 %v1254, %v1264
      %v1277 = vadd.f32 %v1255, %v1264
      %v1278 = vadd.f32 %v1256, %v1264
      %v1279 = vadd.f32 %v1257, %v1264
      %v1280 = vadd.f32 %v1258, %v1264
      %v1281 = vadd.f32 %v1259, %v1264
      %1282 = vmax.xlane.f32.xlu0 %v1266
      %v1283 = vpop.xlane.xlu0 %1282
      %1284 = vmax.xlane.f32.xlu0 %v1267
      %v1285 = vpop.xlane.xlu0 %1284
      %1286 = vmax.xlane.f32.xlu0 %v1268
      %v1287 = vpop.xlane.xlu0 %1286
      %1288 = vmax.xlane.f32.xlu0 %v1269
      %v1289 = vpop.xlane.xlu0 %1288
      %1290 = vmax.xlane.f32.xlu0 %v1270
      %v1291 = vpop.xlane.xlu0 %1290
      %1292 = vmax.xlane.f32.xlu0 %v1271
      %v1293 = vpop.xlane.xlu0 %1292
      %1294 = vmax.xlane.f32.xlu0 %v1272
      %v1295 = vpop.xlane.xlu0 %1294
      %1296 = vmax.xlane.f32.xlu0 %v1273
      %v1297 = vpop.xlane.xlu0 %1296
      %1298 = vmax.xlane.f32.xlu0 %v1274
      %v1299 = vpop.xlane.xlu0 %1298
      %1300 = vmax.xlane.f32.xlu0 %v1275
      %v1301 = vpop.xlane.xlu0 %1300
      %1302 = vmax.xlane.f32.xlu0 %v1276
      %v1303 = vpop.xlane.xlu0 %1302
      %1304 = vmax.xlane.f32.xlu0 %v1277
      %v1305 = vpop.xlane.xlu0 %1304
      %1306 = vmax.xlane.f32.xlu0 %v1278
      %v1307 = vpop.xlane.xlu0 %1306
      %1308 = vmax.xlane.f32.xlu0 %v1279
      %v1309 = vpop.xlane.xlu0 %1308
      %1310 = vmax.xlane.f32.xlu0 %v1280
      %v1311 = vpop.xlane.xlu0 %1310
      %1312 = vmax.xlane.f32.xlu0 %v1281
      %v1313 = vpop.xlane.xlu0 %1312
      %v1314 = vsub.f32 %v1266, %v1283
      %v1315 = vsub.f32 %v1267, %v1285
      %v1316 = vsub.f32 %v1268, %v1287
      %v1317 = vsub.f32 %v1269, %v1289
      %v1318 = vsub.f32 %v1270, %v1291
      %v1319 = vsub.f32 %v1271, %v1293
      %v1320 = vsub.f32 %v1272, %v1295
      %v1321 = vsub.f32 %v1273, %v1297
      %v1322 = vsub.f32 %v1274, %v1299
      %v1323 = vsub.f32 %v1275, %v1301
      %v1324 = vsub.f32 %v1276, %v1303
      %v1325 = vsub.f32 %v1277, %v1305
      %v1326 = vsub.f32 %v1278, %v1307
      %v1327 = vsub.f32 %v1279, %v1309
      %v1328 = vsub.f32 %v1280, %v1311
      %v1329 = vsub.f32 %v1281, %v1313
      %v1330 = vmul.f32 %v1314, 1.442695
      %v1331 = vpow.pop %v1330
      %v1332 = vmul.f32 %v1315, 1.442695
      %v1333 = vpow.pop %v1332
      %v1334 = vmul.f32 %v1316, 1.442695
      %v1335 = vpow.pop %v1334
      %v1336 = vmul.f32 %v1317, 1.442695
      %v1337 = vpow.pop %v1336
      %v1338 = vmul.f32 %v1318, 1.442695
      %v1339 = vpow.pop %v1338
      %v1340 = vmul.f32 %v1319, 1.442695
      %v1341 = vpow.pop %v1340
      %v1342 = vmul.f32 %v1320, 1.442695
      %v1343 = vpow.pop %v1342
      %v1344 = vmul.f32 %v1321, 1.442695
      %v1345 = vpow.pop %v1344
      %v1346 = vmul.f32 %v1322, 1.442695
      %v1347 = vpow.pop %v1346
      %v1348 = vmul.f32 %v1323, 1.442695
      %v1349 = vpow.pop %v1348
      %v1350 = vmul.f32 %v1324, 1.442695
      %v1351 = vpow.pop %v1350
      %v1352 = vmul.f32 %v1325, 1.442695
      %v1353 = vpow.pop %v1352
      %v1354 = vmul.f32 %v1326, 1.442695
      %v1355 = vpow.pop %v1354
      %v1356 = vmul.f32 %v1327, 1.442695
      %v1357 = vpow.pop %v1356
      %v1358 = vmul.f32 %v1328, 1.442695
      %v1359 = vpow.pop %v1358
      %v1360 = vmul.f32 %v1329, 1.442695
      %v1361 = vpow.pop %v1360
      %1362 = vadd.xlane.f32.xlu0 %v1331
      %v1363 = vpop.xlane.xlu0 %1362
      %1364 = vadd.xlane.f32.xlu0 %v1333
      %v1365 = vpop.xlane.xlu0 %1364
      %1366 = vadd.xlane.f32.xlu0 %v1335
      %v1367 = vpop.xlane.xlu0 %1366
      %1368 = vadd.xlane.f32.xlu0 %v1337
      %v1369 = vpop.xlane.xlu0 %1368
      %1370 = vadd.xlane.f32.xlu0 %v1339
      %v1371 = vpop.xlane.xlu0 %1370
      %1372 = vadd.xlane.f32.xlu0 %v1341
      %v1373 = vpop.xlane.xlu0 %1372
      %1374 = vadd.xlane.f32.xlu0 %v1343
      %v1375 = vpop.xlane.xlu0 %1374
      %1376 = vadd.xlane.f32.xlu0 %v1345
      %v1377 = vpop.xlane.xlu0 %1376
      %1378 = vadd.xlane.f32.xlu0 %v1347
      %v1379 = vpop.xlane.xlu0 %1378
      %1380 = vadd.xlane.f32.xlu0 %v1349
      %v1381 = vpop.xlane.xlu0 %1380
      %1382 = vadd.xlane.f32.xlu0 %v1351
      %v1383 = vpop.xlane.xlu0 %1382
      %1384 = vadd.xlane.f32.xlu0 %v1353
      %v1385 = vpop.xlane.xlu0 %1384
      %1386 = vadd.xlane.f32.xlu0 %v1355
      %v1387 = vpop.xlane.xlu0 %1386
      %1388 = vadd.xlane.f32.xlu0 %v1357
      %v1389 = vpop.xlane.xlu0 %1388
      %1390 = vadd.xlane.f32.xlu0 %v1359
      %v1391 = vpop.xlane.xlu0 %1390
      %1392 = vadd.xlane.f32.xlu0 %v1361
      %v1393 = vpop.xlane.xlu0 %1392
      %v1394 = vrcp.pop %v1363
      %v1395 = vrcp.pop %v1365
      %v1396 = vrcp.pop %v1367
      %v1397 = vrcp.pop %v1369
      %v1398 = vrcp.pop %v1371
      %v1399 = vrcp.pop %v1373
      %v1400 = vrcp.pop %v1375
      %v1401 = vrcp.pop %v1377
      %v1402 = vrcp.pop %v1379
      %v1403 = vrcp.pop %v1381
      %v1404 = vrcp.pop %v1383
      %v1405 = vrcp.pop %v1385
      %v1406 = vrcp.pop %v1387
      %v1407 = vrcp.pop %v1389
      %v1408 = vrcp.pop %v1391
      %v1409 = vrcp.pop %v1393
      %v1410 = vmul.f32 %v1331, %v1394
      %v1411 = vmul.f32 %v1333, %v1395
      %v1412 = vmul.f32 %v1335, %v1396
      %v1413 = vmul.f32 %v1337, %v1397
      %v1414 = vmul.f32 %v1339, %v1398
      %v1415 = vmul.f32 %v1341, %v1399
      %v1416 = vmul.f32 %v1343, %v1400
      %v1417 = vmul.f32 %v1345, %v1401
      %v1418 = vmul.f32 %v1347, %v1402
      %v1419 = vmul.f32 %v1349, %v1403
      %v1420 = vmul.f32 %v1351, %v1404
      %v1421 = vmul.f32 %v1353, %v1405
      %v1422 = vmul.f32 %v1355, %v1406
      %v1423 = vmul.f32 %v1357, %v1407
      %v1424 = vmul.f32 %v1359, %v1408
      %v1425 = vmul.f32 %v1361, %v1409
      %1426 = vrot.lane.b32.xlu0 %v908, 64
      %v1427 = vpop.permute.xlu0 %1426
      %1428 = vrot.lane.b32.xlu0 %v913, 64
      %v1429 = vpop.permute.xlu0 %1428
      %1430 = vrot.lane.b32.xlu0 %v918, 64
      %v1431 = vpop.permute.xlu0 %1430
      %1432 = vrot.lane.b32.xlu0 %v923, 64
      %v1433 = vpop.permute.xlu0 %1432
      %1434 = vrot.lane.b32.xlu0 %v928, 64
      %v1435 = vpop.permute.xlu0 %1434
      %1436 = vrot.lane.b32.xlu0 %v933, 64
      %v1437 = vpop.permute.xlu0 %1436
      %1438 = vrot.lane.b32.xlu0 %v938, 64
      %v1439 = vpop.permute.xlu0 %1438
      %1440 = vrot.lane.b32.xlu0 %v943, 64
      %v1441 = vpop.permute.xlu0 %1440
      %1442 = vrot.lane.b32.xlu0 %v948, 64
      %v1443 = vpop.permute.xlu0 %1442
      %1444 = vrot.lane.b32.xlu0 %v953, 64
      %v1445 = vpop.permute.xlu0 %1444
      %1446 = vrot.lane.b32.xlu0 %v958, 64
      %v1447 = vpop.permute.xlu0 %1446
      %1448 = vrot.lane.b32.xlu0 %v963, 64
      %v1449 = vpop.permute.xlu0 %1448
      %1450 = vrot.lane.b32.xlu0 %v968, 64
      %v1451 = vpop.permute.xlu0 %1450
      %1452 = vrot.lane.b32.xlu0 %v973, 64
      %v1453 = vpop.permute.xlu0 %1452
      %1454 = vrot.lane.b32.xlu0 %v978, 64
      %v1455 = vpop.permute.xlu0 %1454
      %1456 = vrot.lane.b32.xlu0 %v983, 64
      %v1457 = vpop.permute.xlu0 %1456
      %1474 = vmatprep.subr.mxu0 0.0
      %1475 = vmatpush1.msra.mxu0 %v1427
      %1476 = vmatprep.subr.mxu0 0.0
      %1477 = vmatpush1.msra.mxu0 %v1429
      %1478 = vmatprep.subr.mxu0 0.0
      %1479 = vmatpush1.msra.mxu0 %v1431
      %1480 = vmatprep.subr.mxu0 0.0
      %1481 = vmatpush1.msra.mxu0 %v1433
      %1482 = vmatprep.subr.mxu0 0.0
      %1483 = vmatpush1.msra.mxu0 %v1435
      %1484 = vmatprep.subr.mxu0 0.0
      %1485 = vmatpush1.msra.mxu0 %v1437
      %1486 = vmatprep.subr.mxu0 0.0
      %1487 = vmatpush1.msra.mxu0 %v1439
      %1488 = vmatprep.subr.mxu0 0.0
      %1489 = vmatpush1.msra.mxu0 %v1441
      %1490 = vmatprep.subr.mxu0 0.0
      %1491 = vmatpush1.msra.mxu0 %v1443
      %1492 = vmatprep.subr.mxu0 0.0
      %1493 = vmatpush1.msra.mxu0 %v1445
      %1494 = vmatprep.subr.mxu0 0.0
      %1495 = vmatpush1.msra.mxu0 %v1447
      %1496 = vmatprep.subr.mxu0 0.0
      %1497 = vmatpush1.msra.mxu0 %v1449
      %1498 = vmatprep.subr.mxu0 0.0
      %1499 = vmatpush1.msra.mxu0 %v1451
      %1500 = vmatprep.subr.mxu0 0.0
      %1501 = vmatpush1.msra.mxu0 %v1453
      %1502 = vmatprep.subr.mxu0 0.0
      %1503 = vmatpush1.msra.mxu0 %v1455
      %1504 = vmatprep.subr.mxu0 0.0
      %1505 = vmatpush1.msra.mxu0 %v1457
      %1506 = vmatprep.subr.mxu0 0.0
      %1507 = vmatpush1.msra.mxu0 0.0
      %1508 = vmatprep.subr.mxu0 0.0
      %1509 = vmatpush1.msra.mxu0 0.0
      %1510 = vmatprep.subr.mxu0 0.0
      %1511 = vmatpush1.msra.mxu0 0.0
      %1512 = vmatprep.subr.mxu0 0.0
      %1513 = vmatpush1.msra.mxu0 0.0
      %1514 = vmatprep.subr.mxu0 0.0
      %1515 = vmatpush1.msra.mxu0 0.0
      %1516 = vmatprep.subr.mxu0 0.0
      %1517 = vmatpush1.msra.mxu0 0.0
      %1518 = vmatprep.subr.mxu0 0.0
      %1519 = vmatpush1.msra.mxu0 0.0
      %1520 = vmatprep.subr.mxu0 0.0
      %1521 = vmatpush1.msra.mxu0 0.0
      %1522 = vmatprep.subr.mxu0 0.0
      %1523 = vmatpush1.msra.mxu0 0.0
      %1524 = vmatprep.subr.mxu0 0.0
      %1525 = vmatpush1.msra.mxu0 0.0
      %1526 = vmatprep.subr.mxu0 0.0
      %1527 = vmatpush1.msra.mxu0 0.0
      %1528 = vmatprep.subr.mxu0 0.0
      %1529 = vmatpush1.msra.mxu0 0.0
      %1530 = vmatprep.subr.mxu0 0.0
      %1531 = vmatpush1.msra.mxu0 0.0
      %1532 = vmatprep.subr.mxu0 0.0
      %1533 = vmatpush1.msra.mxu0 0.0
      %1534 = vmatprep.subr.mxu0 0.0
      %1535 = vmatpush1.msra.mxu0 0.0
      %1536 = vmatprep.subr.mxu0 0.0
      %1537 = vmatpush1.msra.mxu0 0.0
      %1538 = vmatprep.mubr.f32.mxu0 0.0
      %1539 = vmatmul.mubr.f32.gmra.mrb[0].mxu0 %v1410
      %v1540 = vpop.f32.mrb[0].mxu0
      %v1541 = vadd.f32 0.0, %v1540
      %v1542 = vpop.f32.mrb[0].mxu0
      %1543 = vmatprep.mubr.f32.mxu0 0.0
      %1544 = vmatmul.mubr.f32.gmra.mrb[0].mxu0 %v1411
      %v1545 = vpop.f32.mrb[0].mxu0
      %v1546 = vadd.f32 0.0, %v1545
      %v1547 = vpop.f32.mrb[0].mxu0
      %1548 = vmatprep.mubr.f32.mxu0 0.0
      %1549 = vmatmul.mubr.f32.gmra.mrb[0].mxu0 %v1412
      %v1550 = vpop.f32.mrb[0].mxu0
      %v1551 = vadd.f32 0.0, %v1550
      %v1552 = vpop.f32.mrb[0].mxu0
      %1553 = vmatprep.mubr.f32.mxu0 0.0
      %1554 = vmatmul.mubr.f32.gmra.mrb[0].mxu0 %v1413
      %v1555 = vpop.f32.mrb[0].mxu0
      %v1556 = vadd.f32 0.0, %v1555
      %v1557 = vpop.f32.mrb[0].mxu0
      %1558 = vmatprep.mubr.f32.mxu0 0.0
      %1559 = vmatmul.mubr.f32.gmra.mrb[0].mxu0 %v1414
      %v1560 = vpop.f32.mrb[0].mxu0
      %v1561 = vadd.f32 0.0, %v1560
      %v1562 = vpop.f32.mrb[0].mxu0
      %1563 = vmatprep.mubr.f32.mxu0 0.0
      %1564 = vmatmul.mubr.f32.gmra.mrb[0].mxu0 %v1415
      %v1565 = vpop.f32.mrb[0].mxu0
      %v1566 = vadd.f32 0.0, %v1565
      %v1567 = vpop.f32.mrb[0].mxu0
      %1568 = vmatprep.mubr.f32.mxu0 0.0
      %1569 = vmatmul.mubr.f32.gmra.mrb[0].mxu0 %v1416
      %v1570 = vpop.f32.mrb[0].mxu0
      %v1571 = vadd.f32 0.0, %v1570
      %v1572 = vpop.f32.mrb[0].mxu0
      %1573 = vmatprep.mubr.f32.mxu0 0.0
      %1574 = vmatmul.mubr.f32.gmra.mrb[0].mxu0 %v1417
      %v1575 = vpop.f32.mrb[0].mxu0
      %v1576 = vadd.f32 0.0, %v1575
      %v1577 = vpop.f32.mrb[0].mxu0
      %1578 = vmatprep.mubr.f32.mxu0 0.0
      %1579 = vmatmul.mubr.f32.gmra.mrb[0].mxu0 %v1418
      %v1580 = vpop.f32.mrb[0].mxu0
      %v1581 = vadd.f32 0.0, %v1580
      %v1582 = vpop.f32.mrb[0].mxu0
      %1583 = vmatprep.mubr.f32.mxu0 0.0
      %1584 = vmatmul.mubr.f32.gmra.mrb[0].mxu0 %v1419
      %v1585 = vpop.f32.mrb[0].mxu0
      %v1586 = vadd.f32 0.0, %v1585
      %v1587 = vpop.f32.mrb[0].mxu0
      %1588 = vmatprep.mubr.f32.mxu0 0.0
      %1589 = vmatmul.mubr.f32.gmra.mrb[0].mxu0 %v1420
      %v1590 = vpop.f32.mrb[0].mxu0
      %v1591 = vadd.f32 0.0, %v1590
      %v1592 = vpop.f32.mrb[0].mxu0
      %1593 = vmatprep.mubr.f32.mxu0 0.0
      %1594 = vmatmul.mubr.f32.gmra.mrb[0].mxu0 %v1421
      %v1595 = vpop.f32.mrb[0].mxu0
      %v1596 = vadd.f32 0.0, %v1595
      %v1597 = vpop.f32.mrb[0].mxu0
      %1598 = vmatprep.mubr.f32.mxu0 0.0
      %1599 = vmatmul.mubr.f32.gmra.mrb[0].mxu0 %v1422
      %v1600 = vpop.f32.mrb[0].mxu0
      %v1601 = vadd.f32 0.0, %v1600
      %v1602 = vpop.f32.mrb[0].mxu0
      %1603 = vmatprep.mubr.f32.mxu0 0.0
      %1604 = vmatmul.mubr.f32.gmra.mrb[0].mxu0 %v1423
      %v1605 = vpop.f32.mrb[0].mxu0
      %v1606 = vadd.f32 0.0, %v1605
      %v1607 = vpop.f32.mrb[0].mxu0
      %1608 = vmatprep.mubr.f32.mxu0 0.0
      %1609 = vmatmul.mubr.f32.gmra.mrb[0].mxu0 %v1424
      %v1610 = vpop.f32.mrb[0].mxu0
      %v1611 = vadd.f32 0.0, %v1610
      %v1612 = vpop.f32.mrb[0].mxu0
      %1613 = vmatprep.mubr.f32.mxu0 0.0
      %1614 = vmatmul.mubr.f32.gmra.mrb[0].mxu0 %v1425
      %v1615 = vpop.f32.mrb[0].mxu0
      %v1616 = vadd.f32 0.0, %v1615
      %v1617 = vpop.f32.mrb[0].mxu0
      %1618 = vdwg.mxu0
      %1619 = vrot.lane.b32.xlu0 %v908, 120
      %v1620 = vpop.permute.xlu0 %1619
      %1621 = vrot.lane.b32.xlu0 %v913, 120
      %v1622 = vpop.permute.xlu0 %1621
      %1623 = vrot.lane.b32.xlu0 %v918, 120
      %v1624 = vpop.permute.xlu0 %1623
      %1625 = vrot.lane.b32.xlu0 %v923, 120
      %v1626 = vpop.permute.xlu0 %1625
      %1627 = vrot.lane.b32.xlu0 %v928, 120
      %v1628 = vpop.permute.xlu0 %1627
      %1629 = vrot.lane.b32.xlu0 %v933, 120
      %v1630 = vpop.permute.xlu0 %1629
      %1631 = vrot.lane.b32.xlu0 %v938, 120
      %v1632 = vpop.permute.xlu0 %1631
      %1633 = vrot.lane.b32.xlu0 %v943, 120
      %v1634 = vpop.permute.xlu0 %1633
      %1635 = vrot.lane.b32.xlu0 %v948, 120
      %v1636 = vpop.permute.xlu0 %1635
      %1637 = vrot.lane.b32.xlu0 %v953, 120
      %v1638 = vpop.permute.xlu0 %1637
      %1639 = vrot.lane.b32.xlu0 %v958, 120
      %v1640 = vpop.permute.xlu0 %1639
      %1641 = vrot.lane.b32.xlu0 %v963, 120
      %v1642 = vpop.permute.xlu0 %1641
      %1643 = vrot.lane.b32.xlu0 %v968, 120
      %v1644 = vpop.permute.xlu0 %1643
      %1645 = vrot.lane.b32.xlu0 %v973, 120
      %v1646 = vpop.permute.xlu0 %1645
      %1647 = vrot.lane.b32.xlu0 %v978, 120
      %v1648 = vpop.permute.xlu0 %1647
      %1649 = vrot.lane.b32.xlu0 %v983, 120
      %v1650 = vpop.permute.xlu0 %1649
      %1651 = vrot.lane.b32.xlu0 %v908, 88
      %v1652 = vpop.permute.xlu0 %1651
      %1653 = vrot.lane.b32.xlu0 %v913, 88
      %v1654 = vpop.permute.xlu0 %1653
      %1655 = vrot.lane.b32.xlu0 %v918, 88
      %v1656 = vpop.permute.xlu0 %1655
      %1657 = vrot.lane.b32.xlu0 %v923, 88
      %v1658 = vpop.permute.xlu0 %1657
      %1659 = vrot.lane.b32.xlu0 %v928, 88
      %v1660 = vpop.permute.xlu0 %1659
      %1661 = vrot.lane.b32.xlu0 %v933, 88
      %v1662 = vpop.permute.xlu0 %1661
      %1663 = vrot.lane.b32.xlu0 %v938, 88
      %v1664 = vpop.permute.xlu0 %1663
      %1665 = vrot.lane.b32.xlu0 %v943, 88
      %v1666 = vpop.permute.xlu0 %1665
      %1667 = vrot.lane.b32.xlu0 %v948, 88
      %v1668 = vpop.permute.xlu0 %1667
      %1669 = vrot.lane.b32.xlu0 %v953, 88
      %v1670 = vpop.permute.xlu0 %1669
      %1671 = vrot.lane.b32.xlu0 %v958, 88
      %v1672 = vpop.permute.xlu0 %1671
      %1673 = vrot.lane.b32.xlu0 %v963, 88
      %v1674 = vpop.permute.xlu0 %1673
      %1675 = vrot.lane.b32.xlu0 %v968, 88
      %v1676 = vpop.permute.xlu0 %1675
      %1677 = vrot.lane.b32.xlu0 %v973, 88
      %v1678 = vpop.permute.xlu0 %1677
      %1679 = vrot.lane.b32.xlu0 %v978, 88
      %v1680 = vpop.permute.xlu0 %1679
      %1681 = vrot.lane.b32.xlu0 %v983, 88
      %v1682 = vpop.permute.xlu0 %1681
      %v1683 = vsel %vm1034, %v1620, 0
      %v1685 = vsel %vm1034, %v1622, 0
      %v1687 = vsel %vm1034, %v1624, 0
      %v1689 = vsel %vm1034, %v1626, 0
      %v1691 = vsel %vm1034, %v1628, 0
      %v1693 = vsel %vm1034, %v1630, 0
      %v1695 = vsel %vm1034, %v1632, 0
      %v1697 = vsel %vm1034, %v1634, 0
      %v1699 = vsel %vm1034, %v1636, 0
      %v1701 = vsel %vm1034, %v1638, 0
      %v1703 = vsel %vm1034, %v1640, 0
      %v1705 = vsel %vm1034, %v1642, 0
      %v1707 = vsel %vm1034, %v1644, 0
      %v1709 = vsel %vm1034, %v1646, 0
      %v1711 = vsel %vm1034, %v1648, 0
      %v1713 = vsel %vm1034, %v1650, 0
      %v1715 = vsel %vm1034, %v1652, 0
      %v1717 = vsel %vm1034, %v1654, 0
      %v1719 = vsel %vm1034, %v1656, 0
      %v1721 = vsel %vm1034, %v1658, 0
      %v1723 = vsel %vm1034, %v1660, 0
      %v1725 = vsel %vm1034, %v1662, 0
      %v1727 = vsel %vm1034, %v1664, 0
      %v1729 = vsel %vm1034, %v1666, 0
      %v1731 = vsel %vm1034, %v1668, 0
      %v1733 = vsel %vm1034, %v1670, 0
      %v1735 = vsel %vm1034, %v1672, 0
      %v1737 = vsel %vm1034, %v1674, 0
      %v1739 = vsel %vm1034, %v1676, 0
      %v1741 = vsel %vm1034, %v1678, 0
      %v1743 = vsel %vm1034, %v1680, 0
      %v1745 = vsel %vm1034, %v1682, 0
      %1747 = vmatprep.subr.mxu0 0.0
      %1748 = vmatpush1.xpose.msra.mxu0 %v1715
      %1749 = vmatprep.subr.mxu0 0.0
      %1750 = vmatpush1.xpose.msra.mxu0 %v1717
      %1751 = vmatprep.subr.mxu0 0.0
      %1752 = vmatpush1.xpose.msra.mxu0 %v1719
      %1753 = vmatprep.subr.mxu0 0.0
      %1754 = vmatpush1.xpose.msra.mxu0 %v1721
      %1755 = vmatprep.subr.mxu0 0.0
      %1756 = vmatpush1.xpose.msra.mxu0 %v1723
      %1757 = vmatprep.subr.mxu0 0.0
      %1758 = vmatpush1.xpose.msra.mxu0 %v1725
      %1759 = vmatprep.subr.mxu0 0.0
      %1760 = vmatpush1.xpose.msra.mxu0 %v1727
      %1761 = vmatprep.subr.mxu0 0.0
      %1762 = vmatpush1.xpose.msra.mxu0 %v1729
      %1763 = vmatprep.subr.mxu0 0.0
      %1764 = vmatpush1.xpose.msra.mxu0 %v1731
      %1765 = vmatprep.subr.mxu0 0.0
      %1766 = vmatpush1.xpose.msra.mxu0 %v1733
      %1767 = vmatprep.subr.mxu0 0.0
      %1768 = vmatpush1.xpose.msra.mxu0 %v1735
      %1769 = vmatprep.subr.mxu0 0.0
      %1770 = vmatpush1.xpose.msra.mxu0 %v1737
      %1771 = vmatprep.subr.mxu0 0.0
      %1772 = vmatpush1.xpose.msra.mxu0 %v1739
      %1773 = vmatprep.subr.mxu0 0.0
      %1774 = vmatpush1.xpose.msra.mxu0 %v1741
      %1775 = vmatprep.subr.mxu0 0.0
      %1776 = vmatpush1.xpose.msra.mxu0 %v1743
      %1777 = vmatprep.subr.mxu0 0.0
      %1778 = vmatpush1.xpose.msra.mxu0 %v1745
      %1779 = vmatprep.subr.mxu0 0.0
      %1780 = vmatpush1.xpose.msra.mxu0 0.0
      %1781 = vmatprep.subr.mxu0 0.0
      %1782 = vmatpush1.xpose.msra.mxu0 0.0
      %1783 = vmatprep.subr.mxu0 0.0
      %1784 = vmatpush1.xpose.msra.mxu0 0.0
      %1785 = vmatprep.subr.mxu0 0.0
      %1786 = vmatpush1.xpose.msra.mxu0 0.0
      %1787 = vmatprep.subr.mxu0 0.0
      %1788 = vmatpush1.xpose.msra.mxu0 0.0
      %1789 = vmatprep.subr.mxu0 0.0
      %1790 = vmatpush1.xpose.msra.mxu0 0.0
      %1791 = vmatprep.subr.mxu0 0.0
      %1792 = vmatpush1.xpose.msra.mxu0 0.0
      %1793 = vmatprep.subr.mxu0 0.0
      %1794 = vmatpush1.xpose.msra.mxu0 0.0
      %1795 = vmatprep.subr.mxu0 0.0
      %1796 = vmatpush1.xpose.msra.mxu0 0.0
      %1797 = vmatprep.subr.mxu0 0.0
      %1798 = vmatpush1.xpose.msra.mxu0 0.0
      %1799 = vmatprep.subr.mxu0 0.0
      %1800 = vmatpush1.xpose.msra.mxu0 0.0
      %1801 = vmatprep.subr.mxu0 0.0
      %1802 = vmatpush1.xpose.msra.mxu0 0.0
      %1803 = vmatprep.subr.mxu0 0.0
      %1804 = vmatpush1.xpose.msra.mxu0 0.0
      %1805 = vmatprep.subr.mxu0 0.0
      %1806 = vmatpush1.xpose.msra.mxu0 0.0
      %1807 = vmatprep.subr.mxu0 0.0
      %1808 = vmatpush1.xpose.msra.mxu0 0.0
      %1809 = vmatprep.subr.mxu0 0.0
      %1810 = vmatpush1.xpose.msra.mxu0 0.0
      %1811 = vmatprep.mubr.f32.mxu0 0.0
      %1812 = vmatmul.mubr.f32.gmra.mrb[0].mxu0 %v1683
      %v1813 = vpop.f32.mrb[0].mxu0
      %v1814 = vadd.f32 0.0, %v1813
      %v1815 = vpop.f32.mrb[0].mxu0
      %1816 = vmatprep.mubr.f32.mxu0 0.0
      %1817 = vmatmul.mubr.f32.gmra.mrb[0].mxu0 %v1685
      %v1818 = vpop.f32.mrb[0].mxu0
      %v1819 = vadd.f32 0.0, %v1818
      %v1820 = vpop.f32.mrb[0].mxu0
      %1821 = vmatprep.mubr.f32.mxu0 0.0
      %1822 = vmatmul.mubr.f32.gmra.mrb[0].mxu0 %v1687
      %v1823 = vpop.f32.mrb[0].mxu0
      %v1824 = vadd.f32 0.0, %v1823
      %v1825 = vpop.f32.mrb[0].mxu0
      %1826 = vmatprep.mubr.f32.mxu0 0.0
      %1827 = vmatmul.mubr.f32.gmra.mrb[0].mxu0 %v1689
      %v1828 = vpop.f32.mrb[0].mxu0
      %v1829 = vadd.f32 0.0, %v1828
      %v1830 = vpop.f32.mrb[0].mxu0
      %1831 = vmatprep.mubr.f32.mxu0 0.0
      %1832 = vmatmul.mubr.f32.gmra.mrb[0].mxu0 %v1691
      %v1833 = vpop.f32.mrb[0].mxu0
      %v1834 = vadd.f32 0.0, %v1833
      %v1835 = vpop.f32.mrb[0].mxu0
      %1836 = vmatprep.mubr.f32.mxu0 0.0
      %1837 = vmatmul.mubr.f32.gmra.mrb[0].mxu0 %v1693
      %v1838 = vpop.f32.mrb[0].mxu0
      %v1839 = vadd.f32 0.0, %v1838
      %v1840 = vpop.f32.mrb[0].mxu0
      %1841 = vmatprep.mubr.f32.mxu0 0.0
      %1842 = vmatmul.mubr.f32.gmra.mrb[0].mxu0 %v1695
      %v1843 = vpop.f32.mrb[0].mxu0
      %v1844 = vadd.f32 0.0, %v1843
      %v1845 = vpop.f32.mrb[0].mxu0
      %1846 = vmatprep.mubr.f32.mxu0 0.0
      %1847 = vmatmul.mubr.f32.gmra.mrb[0].mxu0 %v1697
      %v1848 = vpop.f32.mrb[0].mxu0
      %v1849 = vadd.f32 0.0, %v1848
      %v1850 = vpop.f32.mrb[0].mxu0
      %1851 = vmatprep.mubr.f32.mxu0 0.0
      %1852 = vmatmul.mubr.f32.gmra.mrb[0].mxu0 %v1699
      %v1853 = vpop.f32.mrb[0].mxu0
      %v1854 = vadd.f32 0.0, %v1853
      %v1855 = vpop.f32.mrb[0].mxu0
      %1856 = vmatprep.mubr.f32.mxu0 0.0
      %1857 = vmatmul.mubr.f32.gmra.mrb[0].mxu0 %v1701
      %v1858 = vpop.f32.mrb[0].mxu0
      %v1859 = vadd.f32 0.0, %v1858
      %v1860 = vpop.f32.mrb[0].mxu0
      %1861 = vmatprep.mubr.f32.mxu0 0.0
      %1862 = vmatmul.mubr.f32.gmra.mrb[0].mxu0 %v1703
      %v1863 = vpop.f32.mrb[0].mxu0
      %v1864 = vadd.f32 0.0, %v1863
      %v1865 = vpop.f32.mrb[0].mxu0
      %1866 = vmatprep.mubr.f32.mxu0 0.0
      %1867 = vmatmul.mubr.f32.gmra.mrb[0].mxu0 %v1705
      %v1868 = vpop.f32.mrb[0].mxu0
      %v1869 = vadd.f32 0.0, %v1868
      %v1870 = vpop.f32.mrb[0].mxu0
      %1871 = vmatprep.mubr.f32.mxu0 0.0
      %1872 = vmatmul.mubr.f32.gmra.mrb[0].mxu0 %v1707
      %v1873 = vpop.f32.mrb[0].mxu0
      %v1874 = vadd.f32 0.0, %v1873
      %v1875 = vpop.f32.mrb[0].mxu0
      %1876 = vmatprep.mubr.f32.mxu0 0.0
      %1877 = vmatmul.mubr.f32.gmra.mrb[0].mxu0 %v1709
      %v1878 = vpop.f32.mrb[0].mxu0
      %v1879 = vadd.f32 0.0, %v1878
      %v1880 = vpop.f32.mrb[0].mxu0
      %1881 = vmatprep.mubr.f32.mxu0 0.0
      %1882 = vmatmul.mubr.f32.gmra.mrb[0].mxu0 %v1711
      %v1883 = vpop.f32.mrb[0].mxu0
      %v1884 = vadd.f32 0.0, %v1883
      %v1885 = vpop.f32.mrb[0].mxu0
      %1886 = vmatprep.mubr.f32.mxu0 0.0
      %1887 = vmatmul.mubr.f32.gmra.mrb[0].mxu0 %v1713
      %v1888 = vpop.f32.mrb[0].mxu0
      %v1889 = vadd.f32 0.0, %v1888
      %v1890 = vpop.f32.mrb[0].mxu0
      %1891 = vdwg.mxu0
      %v1892 = vmul.f32 %v1814, 0.35355338
      %v1893 = vmul.f32 %v1819, 0.35355338
      %v1894 = vmul.f32 %v1824, 0.35355338
      %v1895 = vmul.f32 %v1829, 0.35355338
      %v1896 = vmul.f32 %v1834, 0.35355338
      %v1897 = vmul.f32 %v1839, 0.35355338
      %v1898 = vmul.f32 %v1844, 0.35355338
      %v1899 = vmul.f32 %v1849, 0.35355338
      %v1900 = vmul.f32 %v1854, 0.35355338
      %v1901 = vmul.f32 %v1859, 0.35355338
      %v1902 = vmul.f32 %v1864, 0.35355338
      %v1903 = vmul.f32 %v1869, 0.35355338
      %v1904 = vmul.f32 %v1874, 0.35355338
      %v1905 = vmul.f32 %v1879, 0.35355338
      %v1906 = vmul.f32 %v1884, 0.35355338
      %v1907 = vmul.f32 %v1889, 0.35355338
      %v1908 = vadd.f32 %v1892, %v1264
      %v1909 = vadd.f32 %v1893, %v1264
      %v1910 = vadd.f32 %v1894, %v1264
      %v1911 = vadd.f32 %v1895, %v1264
      %v1912 = vadd.f32 %v1896, %v1264
      %v1913 = vadd.f32 %v1897, %v1264
      %v1914 = vadd.f32 %v1898, %v1264
      %v1915 = vadd.f32 %v1899, %v1264
      %v1916 = vadd.f32 %v1900, %v1264
      %v1917 = vadd.f32 %v1901, %v1264
      %v1918 = vadd.f32 %v1902, %v1264
      %v1919 = vadd.f32 %v1903, %v1264
      %v1920 = vadd.f32 %v1904, %v1264
      %v1921 = vadd.f32 %v1905, %v1264
      %v1922 = vadd.f32 %v1906, %v1264
      %v1923 = vadd.f32 %v1907, %v1264
      %1924 = vmax.xlane.f32.xlu0 %v1908
      %v1925 = vpop.xlane.xlu0 %1924
      %1926 = vmax.xlane.f32.xlu0 %v1909
      %v1927 = vpop.xlane.xlu0 %1926
      %1928 = vmax.xlane.f32.xlu0 %v1910
      %v1929 = vpop.xlane.xlu0 %1928
      %1930 = vmax.xlane.f32.xlu0 %v1911
      %v1931 = vpop.xlane.xlu0 %1930
      %1932 = vmax.xlane.f32.xlu0 %v1912
      %v1933 = vpop.xlane.xlu0 %1932
      %1934 = vmax.xlane.f32.xlu0 %v1913
      %v1935 = vpop.xlane.xlu0 %1934
      %1936 = vmax.xlane.f32.xlu0 %v1914
      %v1937 = vpop.xlane.xlu0 %1936
      %1938 = vmax.xlane.f32.xlu0 %v1915
      %v1939 = vpop.xlane.xlu0 %1938
      %1940 = vmax.xlane.f32.xlu0 %v1916
      %v1941 = vpop.xlane.xlu0 %1940
      %1942 = vmax.xlane.f32.xlu0 %v1917
      %v1943 = vpop.xlane.xlu0 %1942
      %1944 = vmax.xlane.f32.xlu0 %v1918
      %v1945 = vpop.xlane.xlu0 %1944
      %1946 = vmax.xlane.f32.xlu0 %v1919
      %v1947 = vpop.xlane.xlu0 %1946
      %1948 = vmax.xlane.f32.xlu0 %v1920
      %v1949 = vpop.xlane.xlu0 %1948
      %1950 = vmax.xlane.f32.xlu0 %v1921
      %v1951 = vpop.xlane.xlu0 %1950
      %1952 = vmax.xlane.f32.xlu0 %v1922
      %v1953 = vpop.xlane.xlu0 %1952
      %1954 = vmax.xlane.f32.xlu0 %v1923
      %v1955 = vpop.xlane.xlu0 %1954
      %v1956 = vsub.f32 %v1908, %v1925
      %v1957 = vsub.f32 %v1909, %v1927
      %v1958 = vsub.f32 %v1910, %v1929
      %v1959 = vsub.f32 %v1911, %v1931
      %v1960 = vsub.f32 %v1912, %v1933
      %v1961 = vsub.f32 %v1913, %v1935
      %v1962 = vsub.f32 %v1914, %v1937
      %v1963 = vsub.f32 %v1915, %v1939
      %v1964 = vsub.f32 %v1916, %v1941
      %v1965 = vsub.f32 %v1917, %v1943
      %v1966 = vsub.f32 %v1918, %v1945
      %v1967 = vsub.f32 %v1919, %v1947
      %v1968 = vsub.f32 %v1920, %v1949
      %v1969 = vsub.f32 %v1921, %v1951
      %v1970 = vsub.f32 %v1922, %v1953
      %v1971 = vsub.f32 %v1923, %v1955
      %v1972 = vmul.f32 %v1956, 1.442695
      %v1973 = vpow.pop %v1972
      %v1974 = vmul.f32 %v1957, 1.442695
      %v1975 = vpow.pop %v1974
      %v1976 = vmul.f32 %v1958, 1.442695
      %v1977 = vpow.pop %v1976
      %v1978 = vmul.f32 %v1959, 1.442695
      %v1979 = vpow.pop %v1978
      %v1980 = vmul.f32 %v1960, 1.442695
      %v1981 = vpow.pop %v1980
      %v1982 = vmul.f32 %v1961, 1.442695
      %v1983 = vpow.pop %v1982
      %v1984 = vmul.f32 %v1962, 1.442695
      %v1985 = vpow.pop %v1984
      %v1986 = vmul.f32 %v1963, 1.442695
      %v1987 = vpow.pop %v1986
      %v1988 = vmul.f32 %v1964, 1.442695
      %v1989 = vpow.pop %v1988
      %v1990 = vmul.f32 %v1965, 1.442695
      %v1991 = vpow.pop %v1990
      %v1992 = vmul.f32 %v1966, 1.442695
      %v1993 = vpow.pop %v1992
      %v1994 = vmul.f32 %v1967, 1.442695
      %v1995 = vpow.pop %v1994
      %v1996 = vmul.f32 %v1968, 1.442695
      %v1997 = vpow.pop %v1996
      %v1998 = vmul.f32 %v1969, 1.442695
      %v1999 = vpow.pop %v1998
      %v2000 = vmul.f32 %v1970, 1.442695
      %v2001 = vpow.pop %v2000
      %v2002 = vmul.f32 %v1971, 1.442695
      %v2003 = vpow.pop %v2002
      %2004 = vadd.xlane.f32.xlu0 %v1973
      %v2005 = vpop.xlane.xlu0 %2004
      %2006 = vadd.xlane.f32.xlu0 %v1975
      %v2007 = vpop.xlane.xlu0 %2006
      %2008 = vadd.xlane.f32.xlu0 %v1977
      %v2009 = vpop.xlane.xlu0 %2008
      %2010 = vadd.xlane.f32.xlu0 %v1979
      %v2011 = vpop.xlane.xlu0 %2010
      %2012 = vadd.xlane.f32.xlu0 %v1981
      %v2013 = vpop.xlane.xlu0 %2012
      %2014 = vadd.xlane.f32.xlu0 %v1983
      %v2015 = vpop.xlane.xlu0 %2014
      %2016 = vadd.xlane.f32.xlu0 %v1985
      %v2017 = vpop.xlane.xlu0 %2016
      %2018 = vadd.xlane.f32.xlu0 %v1987
      %v2019 = vpop.xlane.xlu0 %2018
      %2020 = vadd.xlane.f32.xlu0 %v1989
      %v2021 = vpop.xlane.xlu0 %2020
      %2022 = vadd.xlane.f32.xlu0 %v1991
      %v2023 = vpop.xlane.xlu0 %2022
      %2024 = vadd.xlane.f32.xlu0 %v1993
      %v2025 = vpop.xlane.xlu0 %2024
      %2026 = vadd.xlane.f32.xlu0 %v1995
      %v2027 = vpop.xlane.xlu0 %2026
      %2028 = vadd.xlane.f32.xlu0 %v1997
      %v2029 = vpop.xlane.xlu0 %2028
      %2030 = vadd.xlane.f32.xlu0 %v1999
      %v2031 = vpop.xlane.xlu0 %2030
      %2032 = vadd.xlane.f32.xlu0 %v2001
      %v2033 = vpop.xlane.xlu0 %2032
      %2034 = vadd.xlane.f32.xlu0 %v2003
      %v2035 = vpop.xlane.xlu0 %2034
      %v2036 = vrcp.pop %v2005
      %v2037 = vrcp.pop %v2007
      %v2038 = vrcp.pop %v2009
      %v2039 = vrcp.pop %v2011
      %v2040 = vrcp.pop %v2013
      %v2041 = vrcp.pop %v2015
      %v2042 = vrcp.pop %v2017
      %v2043 = vrcp.pop %v2019
      %v2044 = vrcp.pop %v2021
      %v2045 = vrcp.pop %v2023
      %v2046 = vrcp.pop %v2025
      %v2047 = vrcp.pop %v2027
      %v2048 = vrcp.pop %v2029
      %v2049 = vrcp.pop %v2031
      %v2050 = vrcp.pop %v2033
      %v2051 = vrcp.pop %v2035
      %v2052 = vmul.f32 %v1973, %v2036
      %v2053 = vmul.f32 %v1975, %v2037
      %v2054 = vmul.f32 %v1977, %v2038
      %v2055 = vmul.f32 %v1979, %v2039
      %v2056 = vmul.f32 %v1981, %v2040
      %v2057 = vmul.f32 %v1983, %v2041
      %v2058 = vmul.f32 %v1985, %v2042
      %v2059 = vmul.f32 %v1987, %v2043
      %v2060 = vmul.f32 %v1989, %v2044
      %v2061 = vmul.f32 %v1991, %v2045
      %v2062 = vmul.f32 %v1993, %v2046
      %v2063 = vmul.f32 %v1995, %v2047
      %v2064 = vmul.f32 %v1997, %v2048
      %v2065 = vmul.f32 %v1999, %v2049
      %v2066 = vmul.f32 %v2001, %v2050
      %v2067 = vmul.f32 %v2003, %v2051
      %2068 = vrot.lane.b32.xlu0 %v908, 56
      %v2069 = vpop.permute.xlu0 %2068
      %2070 = vrot.lane.b32.xlu0 %v913, 56
      %v2071 = vpop.permute.xlu0 %2070
      %2072 = vrot.lane.b32.xlu0 %v918, 56
      %v2073 = vpop.permute.xlu0 %2072
      %2074 = vrot.lane.b32.xlu0 %v923, 56
      %v2075 = vpop.permute.xlu0 %2074
      %2076 = vrot.lane.b32.xlu0 %v928, 56
      %v2077 = vpop.permute.xlu0 %2076
      %2078 = vrot.lane.b32.xlu0 %v933, 56
      %v2079 = vpop.permute.xlu0 %2078
      %2080 = vrot.lane.b32.xlu0 %v938, 56
      %v2081 = vpop.permute.xlu0 %2080
      %2082 = vrot.lane.b32.xlu0 %v943, 56
      %v2083 = vpop.permute.xlu0 %2082
      %2084 = vrot.lane.b32.xlu0 %v948, 56
      %v2085 = vpop.permute.xlu0 %2084
      %2086 = vrot.lane.b32.xlu0 %v953, 56
      %v2087 = vpop.permute.xlu0 %2086
      %2088 = vrot.lane.b32.xlu0 %v958, 56
      %v2089 = vpop.permute.xlu0 %2088
      %2090 = vrot.lane.b32.xlu0 %v963, 56
      %v2091 = vpop.permute.xlu0 %2090
      %2092 = vrot.lane.b32.xlu0 %v968, 56
      %v2093 = vpop.permute.xlu0 %2092
      %2094 = vrot.lane.b32.xlu0 %v973, 56
      %v2095 = vpop.permute.xlu0 %2094
      %2096 = vrot.lane.b32.xlu0 %v978, 56
      %v2097 = vpop.permute.xlu0 %2096
      %2098 = vrot.lane.b32.xlu0 %v983, 56
      %v2099 = vpop.permute.xlu0 %2098
      %2116 = vmatprep.subr.mxu0 0.0
      %2117 = vmatpush1.msra.mxu0 %v2069
      %2118 = vmatprep.subr.mxu0 0.0
      %2119 = vmatpush1.msra.mxu0 %v2071
      %2120 = vmatprep.subr.mxu0 0.0
      %2121 = vmatpush1.msra.mxu0 %v2073
      %2122 = vmatprep.subr.mxu0 0.0
      %2123 = vmatpush1.msra.mxu0 %v2075
      %2124 = vmatprep.subr.mxu0 0.0
      %2125 = vmatpush1.msra.mxu0 %v2077
      %2126 = vmatprep.subr.mxu0 0.0
      %2127 = vmatpush1.msra.mxu0 %v2079
      %2128 = vmatprep.subr.mxu0 0.0
      %2129 = vmatpush1.msra.mxu0 %v2081
      %2130 = vmatprep.subr.mxu0 0.0
      %2131 = vmatpush1.msra.mxu0 %v2083
      %2132 = vmatprep.subr.mxu0 0.0
      %2133 = vmatpush1.msra.mxu0 %v2085
      %2134 = vmatprep.subr.mxu0 0.0
      %2135 = vmatpush1.msra.mxu0 %v2087
      %2136 = vmatprep.subr.mxu0 0.0
      %2137 = vmatpush1.msra.mxu0 %v2089
      %2138 = vmatprep.subr.mxu0 0.0
      %2139 = vmatpush1.msra.mxu0 %v2091
      %2140 = vmatprep.subr.mxu0 0.0
      %2141 = vmatpush1.msra.mxu0 %v2093
      %2142 = vmatprep.subr.mxu0 0.0
      %2143 = vmatpush1.msra.mxu0 %v2095
      %2144 = vmatprep.subr.mxu0 0.0
      %2145 = vmatpush1.msra.mxu0 %v2097
      %2146 = vmatprep.subr.mxu0 0.0
      %2147 = vmatpush1.msra.mxu0 %v2099
      %2148 = vmatprep.subr.mxu0 0.0
      %2149 = vmatpush1.msra.mxu0 0.0
      %2150 = vmatprep.subr.mxu0 0.0
      %2151 = vmatpush1.msra.mxu0 0.0
      %2152 = vmatprep.subr.mxu0 0.0
      %2153 = vmatpush1.msra.mxu0 0.0
      %2154 = vmatprep.subr.mxu0 0.0
      %2155 = vmatpush1.msra.mxu0 0.0
      %2156 = vmatprep.subr.mxu0 0.0
      %2157 = vmatpush1.msra.mxu0 0.0
      %2158 = vmatprep.subr.mxu0 0.0
      %2159 = vmatpush1.msra.mxu0 0.0
      %2160 = vmatprep.subr.mxu0 0.0
      %2161 = vmatpush1.msra.mxu0 0.0
      %2162 = vmatprep.subr.mxu0 0.0
      %2163 = vmatpush1.msra.mxu0 0.0
      %2164 = vmatprep.subr.mxu0 0.0
      %2165 = vmatpush1.msra.mxu0 0.0
      %2166 = vmatprep.subr.mxu0 0.0
      %2167 = vmatpush1.msra.mxu0 0.0
      %2168 = vmatprep.subr.mxu0 0.0
      %2169 = vmatpush1.msra.mxu0 0.0
      %2170 = vmatprep.subr.mxu0 0.0
      %2171 = vmatpush1.msra.mxu0 0.0
      %2172 = vmatprep.subr.mxu0 0.0
      %2173 = vmatpush1.msra.mxu0 0.0
      %2174 = vmatprep.subr.mxu0 0.0
      %2175 = vmatpush1.msra.mxu0 0.0
      %2176 = vmatprep.subr.mxu0 0.0
      %2177 = vmatpush1.msra.mxu0 0.0
      %2178 = vmatprep.subr.mxu0 0.0
      %2179 = vmatpush1.msra.mxu0 0.0
      %2180 = vmatprep.mubr.f32.mxu0 0.0
      %2181 = vmatmul.mubr.f32.gmra.mrb[0].mxu0 %v2052
      %v2182 = vpop.f32.mrb[0].mxu0
      %v2183 = vadd.f32 0.0, %v2182
      %v2184 = vpop.f32.mrb[0].mxu0
      %2185 = vmatprep.mubr.f32.mxu0 0.0
      %2186 = vmatmul.mubr.f32.gmra.mrb[0].mxu0 %v2053
      %v2187 = vpop.f32.mrb[0].mxu0
      %v2188 = vadd.f32 0.0, %v2187
      %v2189 = vpop.f32.mrb[0].mxu0
      %2190 = vmatprep.mubr.f32.mxu0 0.0
      %2191 = vmatmul.mubr.f32.gmra.mrb[0].mxu0 %v2054
      %v2192 = vpop.f32.mrb[0].mxu0
      %v2193 = vadd.f32 0.0, %v2192
      %v2194 = vpop.f32.mrb[0].mxu0
      %2195 = vmatprep.mubr.f32.mxu0 0.0
      %2196 = vmatmul.mubr.f32.gmra.mrb[0].mxu0 %v2055
      %v2197 = vpop.f32.mrb[0].mxu0
      %v2198 = vadd.f32 0.0, %v2197
      %v2199 = vpop.f32.mrb[0].mxu0
      %2200 = vmatprep.mubr.f32.mxu0 0.0
      %2201 = vmatmul.mubr.f32.gmra.mrb[0].mxu0 %v2056
      %v2202 = vpop.f32.mrb[0].mxu0
      %v2203 = vadd.f32 0.0, %v2202
      %v2204 = vpop.f32.mrb[0].mxu0
      %2205 = vmatprep.mubr.f32.mxu0 0.0
      %2206 = vmatmul.mubr.f32.gmra.mrb[0].mxu0 %v2057
      %v2207 = vpop.f32.mrb[0].mxu0
      %v2208 = vadd.f32 0.0, %v2207
      %v2209 = vpop.f32.mrb[0].mxu0
      %2210 = vmatprep.mubr.f32.mxu0 0.0
      %2211 = vmatmul.mubr.f32.gmra.mrb[0].mxu0 %v2058
      %v2212 = vpop.f32.mrb[0].mxu0
      %v2213 = vadd.f32 0.0, %v2212
      %v2214 = vpop.f32.mrb[0].mxu0
      %2215 = vmatprep.mubr.f32.mxu0 0.0
      %2216 = vmatmul.mubr.f32.gmra.mrb[0].mxu0 %v2059
      %v2217 = vpop.f32.mrb[0].mxu0
      %v2218 = vadd.f32 0.0, %v2217
      %v2219 = vpop.f32.mrb[0].mxu0
      %2220 = vmatprep.mubr.f32.mxu0 0.0
      %2221 = vmatmul.mubr.f32.gmra.mrb[0].mxu0 %v2060
      %v2222 = vpop.f32.mrb[0].mxu0
      %v2223 = vadd.f32 0.0, %v2222
      %v2224 = vpop.f32.mrb[0].mxu0
      %2225 = vmatprep.mubr.f32.mxu0 0.0
      %2226 = vmatmul.mubr.f32.gmra.mrb[0].mxu0 %v2061
      %v2227 = vpop.f32.mrb[0].mxu0
      %v2228 = vadd.f32 0.0, %v2227
      %v2229 = vpop.f32.mrb[0].mxu0
      %2230 = vmatprep.mubr.f32.mxu0 0.0
      %2231 = vmatmul.mubr.f32.gmra.mrb[0].mxu0 %v2062
      %v2232 = vpop.f32.mrb[0].mxu0
      %v2233 = vadd.f32 0.0, %v2232
      %v2234 = vpop.f32.mrb[0].mxu0
      %2235 = vmatprep.mubr.f32.mxu0 0.0
      %2236 = vmatmul.mubr.f32.gmra.mrb[0].mxu0 %v2063
      %v2237 = vpop.f32.mrb[0].mxu0
      %v2238 = vadd.f32 0.0, %v2237
      %v2239 = vpop.f32.mrb[0].mxu0
      %2240 = vmatprep.mubr.f32.mxu0 0.0
      %2241 = vmatmul.mubr.f32.gmra.mrb[0].mxu0 %v2064
      %v2242 = vpop.f32.mrb[0].mxu0
      %v2243 = vadd.f32 0.0, %v2242
      %v2244 = vpop.f32.mrb[0].mxu0
      %2245 = vmatprep.mubr.f32.mxu0 0.0
      %2246 = vmatmul.mubr.f32.gmra.mrb[0].mxu0 %v2065
      %v2247 = vpop.f32.mrb[0].mxu0
      %v2248 = vadd.f32 0.0, %v2247
      %v2249 = vpop.f32.mrb[0].mxu0
      %2250 = vmatprep.mubr.f32.mxu0 0.0
      %2251 = vmatmul.mubr.f32.gmra.mrb[0].mxu0 %v2066
      %v2252 = vpop.f32.mrb[0].mxu0
      %v2253 = vadd.f32 0.0, %v2252
      %v2254 = vpop.f32.mrb[0].mxu0
      %2255 = vmatprep.mubr.f32.mxu0 0.0
      %2256 = vmatmul.mubr.f32.gmra.mrb[0].mxu0 %v2067
      %v2257 = vpop.f32.mrb[0].mxu0
      %v2258 = vadd.f32 0.0, %v2257
      %v2259 = vpop.f32.mrb[0].mxu0
      %2260 = vdwg.mxu0
      %v2262 = vsel %vm1034, %v2183, 0
      %v2265 = vsel %vm1034, %v2188, 0
      %v2268 = vsel %vm1034, %v2193, 0
      %v2271 = vsel %vm1034, %v2198, 0
      %v2274 = vsel %vm1034, %v2203, 0
      %v2277 = vsel %vm1034, %v2208, 0
      %v2280 = vsel %vm1034, %v2213, 0
      %v2283 = vsel %vm1034, %v2218, 0
      %v2286 = vsel %vm1034, %v2223, 0
      %v2289 = vsel %vm1034, %v2228, 0
      %v2292 = vsel %vm1034, %v2233, 0
      %v2295 = vsel %vm1034, %v2238, 0
      %v2298 = vsel %vm1034, %v2243, 0
      %v2301 = vsel %vm1034, %v2248, 0
      %v2304 = vsel %vm1034, %v2253, 0
      %v2307 = vsel %vm1034, %v2258, 0
      %2309 = vmatprep.subr.mxu0 0.0
      %2310 = vmatpush1.msra.mxu0 %v764
      %2311 = vmatprep.subr.mxu0 0.0
      %2312 = vmatpush1.msra.mxu0 0.0
      %2313 = vmatprep.subr.mxu0 0.0
      %2314 = vmatpush1.msra.mxu0 0.0
      %2315 = vmatprep.subr.mxu0 0.0
      %2316 = vmatpush1.msra.mxu0 0.0
      %2317 = vmatprep.subr.mxu0 0.0
      %2318 = vmatpush1.msra.mxu0 0.0
      %2319 = vmatprep.subr.mxu0 0.0
      %2320 = vmatpush1.msra.mxu0 0.0
      %2321 = vmatprep.subr.mxu0 0.0
      %2322 = vmatpush1.msra.mxu0 0.0
      %2323 = vmatprep.subr.mxu0 0.0
      %2324 = vmatpush1.msra.mxu0 0.0
      %2325 = vmatprep.subr.mxu0 0.0
      %2326 = vmatpush1.msra.mxu0 0.0
      %2327 = vmatprep.subr.mxu0 0.0
      %2328 = vmatpush1.msra.mxu0 0.0
      %2329 = vmatprep.subr.mxu0 0.0
      %2330 = vmatpush1.msra.mxu0 0.0
      %2331 = vmatprep.subr.mxu0 0.0
      %2332 = vmatpush1.msra.mxu0 0.0
      %2333 = vmatprep.subr.mxu0 0.0
      %2334 = vmatpush1.msra.mxu0 0.0
      %2335 = vmatprep.subr.mxu0 0.0
      %2336 = vmatpush1.msra.mxu0 0.0
      %2337 = vmatprep.subr.mxu0 0.0
      %2338 = vmatpush1.msra.mxu0 0.0
      %2339 = vmatprep.subr.mxu0 0.0
      %2340 = vmatpush1.msra.mxu0 0.0
      %2341 = vmatprep.subr.mxu0 0.0
      %2342 = vmatpush1.msra.mxu0 0.0
      %2343 = vmatprep.subr.mxu0 0.0
      %2344 = vmatpush1.msra.mxu0 0.0
      %2345 = vmatprep.subr.mxu0 0.0
      %2346 = vmatpush1.msra.mxu0 0.0
      %2347 = vmatprep.subr.mxu0 0.0
      %2348 = vmatpush1.msra.mxu0 0.0
      %2349 = vmatprep.subr.mxu0 0.0
      %2350 = vmatpush1.msra.mxu0 0.0
      %2351 = vmatprep.subr.mxu0 0.0
      %2352 = vmatpush1.msra.mxu0 0.0
      %2353 = vmatprep.subr.mxu0 0.0
      %2354 = vmatpush1.msra.mxu0 0.0
      %2355 = vmatprep.subr.mxu0 0.0
      %2356 = vmatpush1.msra.mxu0 0.0
      %2357 = vmatprep.subr.mxu0 0.0
      %2358 = vmatpush1.msra.mxu0 0.0
      %2359 = vmatprep.subr.mxu0 0.0
      %2360 = vmatpush1.msra.mxu0 0.0
      %2361 = vmatprep.subr.mxu0 0.0
      %2362 = vmatpush1.msra.mxu0 0.0
      %2363 = vmatprep.subr.mxu0 0.0
      %2364 = vmatpush1.msra.mxu0 0.0
      %2365 = vmatprep.subr.mxu0 0.0
      %2366 = vmatpush1.msra.mxu0 0.0
      %2367 = vmatprep.subr.mxu0 0.0
      %2368 = vmatpush1.msra.mxu0 0.0
      %2369 = vmatprep.subr.mxu0 0.0
      %2370 = vmatpush1.msra.mxu0 0.0
      %2371 = vmatprep.subr.mxu0 0.0
      %2372 = vmatpush1.msra.mxu0 0.0
      %2373 = vmatprep.mubr.f32.mxu0 0.0
      %2374 = vmatmul.mubr.f32.gmra.mrb[0].mxu0 %v2262
      %v2375 = vpop.f32.mrb[0].mxu0
      %v2376 = vadd.f32 0.0, %v2375
      %v2377 = vpop.f32.mrb[0].mxu0
      %2378 = vmatprep.mubr.f32.mxu0 0.0
      %2379 = vmatmul.mubr.f32.gmra.mrb[0].mxu0 %v2265
      %v2380 = vpop.f32.mrb[0].mxu0
      %v2381 = vadd.f32 0.0, %v2380
      %v2382 = vpop.f32.mrb[0].mxu0
      %2383 = vmatprep.mubr.f32.mxu0 0.0
      %2384 = vmatmul.mubr.f32.gmra.mrb[0].mxu0 %v2268
      %v2385 = vpop.f32.mrb[0].mxu0
      %v2386 = vadd.f32 0.0, %v2385
      %v2387 = vpop.f32.mrb[0].mxu0
      %2388 = vmatprep.mubr.f32.mxu0 0.0
      %2389 = vmatmul.mubr.f32.gmra.mrb[0].mxu0 %v2271
      %v2390 = vpop.f32.mrb[0].mxu0
      %v2391 = vadd.f32 0.0, %v2390
      %v2392 = vpop.f32.mrb[0].mxu0
      %2393 = vmatprep.mubr.f32.mxu0 0.0
      %2394 = vmatmul.mubr.f32.gmra.mrb[0].mxu0 %v2274
      %v2395 = vpop.f32.mrb[0].mxu0
      %v2396 = vadd.f32 0.0, %v2395
      %v2397 = vpop.f32.mrb[0].mxu0
      %2398 = vmatprep.mubr.f32.mxu0 0.0
      %2399 = vmatmul.mubr.f32.gmra.mrb[0].mxu0 %v2277
      %v2400 = vpop.f32.mrb[0].mxu0
      %v2401 = vadd.f32 0.0, %v2400
      %v2402 = vpop.f32.mrb[0].mxu0
      %2403 = vmatprep.mubr.f32.mxu0 0.0
      %2404 = vmatmul.mubr.f32.gmra.mrb[0].mxu0 %v2280
      %v2405 = vpop.f32.mrb[0].mxu0
      %v2406 = vadd.f32 0.0, %v2405
      %v2407 = vpop.f32.mrb[0].mxu0
      %2408 = vmatprep.mubr.f32.mxu0 0.0
      %2409 = vmatmul.mubr.f32.gmra.mrb[0].mxu0 %v2283
      %v2410 = vpop.f32.mrb[0].mxu0
      %v2411 = vadd.f32 0.0, %v2410
      %v2412 = vpop.f32.mrb[0].mxu0
      %2413 = vmatprep.mubr.f32.mxu0 0.0
      %2414 = vmatmul.mubr.f32.gmra.mrb[0].mxu0 %v2286
      %v2415 = vpop.f32.mrb[0].mxu0
      %v2416 = vadd.f32 0.0, %v2415
      %v2417 = vpop.f32.mrb[0].mxu0
      %2418 = vmatprep.mubr.f32.mxu0 0.0
      %2419 = vmatmul.mubr.f32.gmra.mrb[0].mxu0 %v2289
      %v2420 = vpop.f32.mrb[0].mxu0
      %v2421 = vadd.f32 0.0, %v2420
      %v2422 = vpop.f32.mrb[0].mxu0
      %2423 = vmatprep.mubr.f32.mxu0 0.0
      %2424 = vmatmul.mubr.f32.gmra.mrb[0].mxu0 %v2292
      %v2425 = vpop.f32.mrb[0].mxu0
      %v2426 = vadd.f32 0.0, %v2425
      %v2427 = vpop.f32.mrb[0].mxu0
      %2428 = vmatprep.mubr.f32.mxu0 0.0
      %2429 = vmatmul.mubr.f32.gmra.mrb[0].mxu0 %v2295
      %v2430 = vpop.f32.mrb[0].mxu0
      %v2431 = vadd.f32 0.0, %v2430
      %v2432 = vpop.f32.mrb[0].mxu0
      %2433 = vmatprep.mubr.f32.mxu0 0.0
      %2434 = vmatmul.mubr.f32.gmra.mrb[0].mxu0 %v2298
      %v2435 = vpop.f32.mrb[0].mxu0
      %v2436 = vadd.f32 0.0, %v2435
      %v2437 = vpop.f32.mrb[0].mxu0
      %2438 = vmatprep.mubr.f32.mxu0 0.0
      %2439 = vmatmul.mubr.f32.gmra.mrb[0].mxu0 %v2301
      %v2440 = vpop.f32.mrb[0].mxu0
      %v2441 = vadd.f32 0.0, %v2440
      %v2442 = vpop.f32.mrb[0].mxu0
      %2443 = vmatprep.mubr.f32.mxu0 0.0
      %2444 = vmatmul.mubr.f32.gmra.mrb[0].mxu0 %v2304
      %v2445 = vpop.f32.mrb[0].mxu0
      %v2446 = vadd.f32 0.0, %v2445
      %v2447 = vpop.f32.mrb[0].mxu0
      %2448 = vmatprep.mubr.f32.mxu0 0.0
      %2449 = vmatmul.mubr.f32.gmra.mrb[0].mxu0 %v2307
      %v2450 = vpop.f32.mrb[0].mxu0
      %v2451 = vadd.f32 0.0, %v2450
      %v2452 = vpop.f32.mrb[0].mxu0
      %2453 = vdwg.mxu0
      %v2455 = vsel %vm1034, %v1541, 0
      %v2458 = vsel %vm1034, %v1546, 0
      %v2461 = vsel %vm1034, %v1551, 0
      %v2464 = vsel %vm1034, %v1556, 0
      %v2467 = vsel %vm1034, %v1561, 0
      %v2470 = vsel %vm1034, %v1566, 0
      %v2473 = vsel %vm1034, %v1571, 0
      %v2476 = vsel %vm1034, %v1576, 0
      %v2479 = vsel %vm1034, %v1581, 0
      %v2482 = vsel %vm1034, %v1586, 0
      %v2485 = vsel %vm1034, %v1591, 0
      %v2488 = vsel %vm1034, %v1596, 0
      %v2491 = vsel %vm1034, %v1601, 0
      %v2494 = vsel %vm1034, %v1606, 0
      %v2497 = vsel %vm1034, %v1611, 0
      %v2500 = vsel %vm1034, %v1616, 0
      %2502 = vmatprep.subr.mxu0 0.0
      %2503 = vmatpush1.msra.mxu0 %v763
      %2504 = vmatprep.subr.mxu0 0.0
      %2505 = vmatpush1.msra.mxu0 0.0
      %2506 = vmatprep.subr.mxu0 0.0
      %2507 = vmatpush1.msra.mxu0 0.0
      %2508 = vmatprep.subr.mxu0 0.0
      %2509 = vmatpush1.msra.mxu0 0.0
      %2510 = vmatprep.subr.mxu0 0.0
      %2511 = vmatpush1.msra.mxu0 0.0
      %2512 = vmatprep.subr.mxu0 0.0
      %2513 = vmatpush1.msra.mxu0 0.0
      %2514 = vmatprep.subr.mxu0 0.0
      %2515 = vmatpush1.msra.mxu0 0.0
      %2516 = vmatprep.subr.mxu0 0.0
      %2517 = vmatpush1.msra.mxu0 0.0
      %2518 = vmatprep.subr.mxu0 0.0
      %2519 = vmatpush1.msra.mxu0 0.0
      %2520 = vmatprep.subr.mxu0 0.0
      %2521 = vmatpush1.msra.mxu0 0.0
      %2522 = vmatprep.subr.mxu0 0.0
      %2523 = vmatpush1.msra.mxu0 0.0
      %2524 = vmatprep.subr.mxu0 0.0
      %2525 = vmatpush1.msra.mxu0 0.0
      %2526 = vmatprep.subr.mxu0 0.0
      %2527 = vmatpush1.msra.mxu0 0.0
      %2528 = vmatprep.subr.mxu0 0.0
      %2529 = vmatpush1.msra.mxu0 0.0
      %2530 = vmatprep.subr.mxu0 0.0
      %2531 = vmatpush1.msra.mxu0 0.0
      %2532 = vmatprep.subr.mxu0 0.0
      %2533 = vmatpush1.msra.mxu0 0.0
      %2534 = vmatprep.subr.mxu0 0.0
      %2535 = vmatpush1.msra.mxu0 0.0
      %2536 = vmatprep.subr.mxu0 0.0
      %2537 = vmatpush1.msra.mxu0 0.0
      %2538 = vmatprep.subr.mxu0 0.0
      %2539 = vmatpush1.msra.mxu0 0.0
      %2540 = vmatprep.subr.mxu0 0.0
      %2541 = vmatpush1.msra.mxu0 0.0
      %2542 = vmatprep.subr.mxu0 0.0
      %2543 = vmatpush1.msra.mxu0 0.0
      %2544 = vmatprep.subr.mxu0 0.0
      %2545 = vmatpush1.msra.mxu0 0.0
      %2546 = vmatprep.subr.mxu0 0.0
      %2547 = vmatpush1.msra.mxu0 0.0
      %2548 = vmatprep.subr.mxu0 0.0
      %2549 = vmatpush1.msra.mxu0 0.0
      %2550 = vmatprep.subr.mxu0 0.0
      %2551 = vmatpush1.msra.mxu0 0.0
      %2552 = vmatprep.subr.mxu0 0.0
      %2553 = vmatpush1.msra.mxu0 0.0
      %2554 = vmatprep.subr.mxu0 0.0
      %2555 = vmatpush1.msra.mxu0 0.0
      %2556 = vmatprep.subr.mxu0 0.0
      %2557 = vmatpush1.msra.mxu0 0.0
      %2558 = vmatprep.subr.mxu0 0.0
      %2559 = vmatpush1.msra.mxu0 0.0
      %2560 = vmatprep.subr.mxu0 0.0
      %2561 = vmatpush1.msra.mxu0 0.0
      %2562 = vmatprep.subr.mxu0 0.0
      %2563 = vmatpush1.msra.mxu0 0.0
      %2564 = vmatprep.subr.mxu0 0.0
      %2565 = vmatpush1.msra.mxu0 0.0
      %2566 = vmatprep.mubr.f32.mxu0 0.0
      %2567 = vmatmul.mubr.f32.gmra.mrb[0].mxu0 %v2455
      %v2568 = vpop.f32.mrb[0].mxu0
      %v2569 = vadd.f32 %v2376, %v2568
      %v2570 = vpop.f32.mrb[0].mxu0
      %2571 = vmatprep.mubr.f32.mxu0 0.0
      %2572 = vmatmul.mubr.f32.gmra.mrb[0].mxu0 %v2458
      %v2573 = vpop.f32.mrb[0].mxu0
      %v2574 = vadd.f32 %v2381, %v2573
      %v2575 = vpop.f32.mrb[0].mxu0
      %2576 = vmatprep.mubr.f32.mxu0 0.0
      %2577 = vmatmul.mubr.f32.gmra.mrb[0].mxu0 %v2461
      %v2578 = vpop.f32.mrb[0].mxu0
      %v2579 = vadd.f32 %v2386, %v2578
      %v2580 = vpop.f32.mrb[0].mxu0
      %2581 = vmatprep.mubr.f32.mxu0 0.0
      %2582 = vmatmul.mubr.f32.gmra.mrb[0].mxu0 %v2464
      %v2583 = vpop.f32.mrb[0].mxu0
      %v2584 = vadd.f32 %v2391, %v2583
      %v2585 = vpop.f32.mrb[0].mxu0
      %2586 = vmatprep.mubr.f32.mxu0 0.0
      %2587 = vmatmul.mubr.f32.gmra.mrb[0].mxu0 %v2467
      %v2588 = vpop.f32.mrb[0].mxu0
      %v2589 = vadd.f32 %v2396, %v2588
      %v2590 = vpop.f32.mrb[0].mxu0
      %2591 = vmatprep.mubr.f32.mxu0 0.0
      %2592 = vmatmul.mubr.f32.gmra.mrb[0].mxu0 %v2470
      %v2593 = vpop.f32.mrb[0].mxu0
      %v2594 = vadd.f32 %v2401, %v2593
      %v2595 = vpop.f32.mrb[0].mxu0
      %2596 = vmatprep.mubr.f32.mxu0 0.0
      %2597 = vmatmul.mubr.f32.gmra.mrb[0].mxu0 %v2473
      %v2598 = vpop.f32.mrb[0].mxu0
      %v2599 = vadd.f32 %v2406, %v2598
      %v2600 = vpop.f32.mrb[0].mxu0
      %2601 = vmatprep.mubr.f32.mxu0 0.0
      %2602 = vmatmul.mubr.f32.gmra.mrb[0].mxu0 %v2476
      %v2603 = vpop.f32.mrb[0].mxu0
      %v2604 = vadd.f32 %v2411, %v2603
      %v2605 = vpop.f32.mrb[0].mxu0
      %2606 = vmatprep.mubr.f32.mxu0 0.0
      %2607 = vmatmul.mubr.f32.gmra.mrb[0].mxu0 %v2479
      %v2608 = vpop.f32.mrb[0].mxu0
      %v2609 = vadd.f32 %v2416, %v2608
      %v2610 = vpop.f32.mrb[0].mxu0
      %2611 = vmatprep.mubr.f32.mxu0 0.0
      %2612 = vmatmul.mubr.f32.gmra.mrb[0].mxu0 %v2482
      %v2613 = vpop.f32.mrb[0].mxu0
      %v2614 = vadd.f32 %v2421, %v2613
      %v2615 = vpop.f32.mrb[0].mxu0
      %2616 = vmatprep.mubr.f32.mxu0 0.0
      %2617 = vmatmul.mubr.f32.gmra.mrb[0].mxu0 %v2485
      %v2618 = vpop.f32.mrb[0].mxu0
      %v2619 = vadd.f32 %v2426, %v2618
      %v2620 = vpop.f32.mrb[0].mxu0
      %2621 = vmatprep.mubr.f32.mxu0 0.0
      %2622 = vmatmul.mubr.f32.gmra.mrb[0].mxu0 %v2488
      %v2623 = vpop.f32.mrb[0].mxu0
      %v2624 = vadd.f32 %v2431, %v2623
      %v2625 = vpop.f32.mrb[0].mxu0
      %2626 = vmatprep.mubr.f32.mxu0 0.0
      %2627 = vmatmul.mubr.f32.gmra.mrb[0].mxu0 %v2491
      %v2628 = vpop.f32.mrb[0].mxu0
      %v2629 = vadd.f32 %v2436, %v2628
      %v2630 = vpop.f32.mrb[0].mxu0
      %2631 = vmatprep.mubr.f32.mxu0 0.0
      %2632 = vmatmul.mubr.f32.gmra.mrb[0].mxu0 %v2494
      %v2633 = vpop.f32.mrb[0].mxu0
      %v2634 = vadd.f32 %v2441, %v2633
      %v2635 = vpop.f32.mrb[0].mxu0
      %2636 = vmatprep.mubr.f32.mxu0 0.0
      %2637 = vmatmul.mubr.f32.gmra.mrb[0].mxu0 %v2497
      %v2638 = vpop.f32.mrb[0].mxu0
      %v2639 = vadd.f32 %v2446, %v2638
      %v2640 = vpop.f32.mrb[0].mxu0
      %2641 = vmatprep.mubr.f32.mxu0 0.0
      %2642 = vmatmul.mubr.f32.gmra.mrb[0].mxu0 %v2500
      %v2643 = vpop.f32.mrb[0].mxu0
      %v2644 = vadd.f32 %v2451, %v2643
      %v2645 = vpop.f32.mrb[0].mxu0
      %2646 = vdwg.mxu0
      %2647 = vrot.lane.b32.xlu0 %v908, 112
      %v2648 = vpop.permute.xlu0 %2647
      %2649 = vrot.lane.b32.xlu0 %v913, 112
      %v2650 = vpop.permute.xlu0 %2649
      %2651 = vrot.lane.b32.xlu0 %v918, 112
      %v2652 = vpop.permute.xlu0 %2651
      %2653 = vrot.lane.b32.xlu0 %v923, 112
      %v2654 = vpop.permute.xlu0 %2653
      %2655 = vrot.lane.b32.xlu0 %v928, 112
      %v2656 = vpop.permute.xlu0 %2655
      %2657 = vrot.lane.b32.xlu0 %v933, 112
      %v2658 = vpop.permute.xlu0 %2657
      %2659 = vrot.lane.b32.xlu0 %v938, 112
      %v2660 = vpop.permute.xlu0 %2659
      %2661 = vrot.lane.b32.xlu0 %v943, 112
      %v2662 = vpop.permute.xlu0 %2661
      %2663 = vrot.lane.b32.xlu0 %v948, 112
      %v2664 = vpop.permute.xlu0 %2663
      %2665 = vrot.lane.b32.xlu0 %v953, 112
      %v2666 = vpop.permute.xlu0 %2665
      %2667 = vrot.lane.b32.xlu0 %v958, 112
      %v2668 = vpop.permute.xlu0 %2667
      %2669 = vrot.lane.b32.xlu0 %v963, 112
      %v2670 = vpop.permute.xlu0 %2669
      %2671 = vrot.lane.b32.xlu0 %v968, 112
      %v2672 = vpop.permute.xlu0 %2671
      %2673 = vrot.lane.b32.xlu0 %v973, 112
      %v2674 = vpop.permute.xlu0 %2673
      %2675 = vrot.lane.b32.xlu0 %v978, 112
      %v2676 = vpop.permute.xlu0 %2675
      %2677 = vrot.lane.b32.xlu0 %v983, 112
      %v2678 = vpop.permute.xlu0 %2677
      %2679 = vrot.lane.b32.xlu0 %v908, 80
      %v2680 = vpop.permute.xlu0 %2679
      %2681 = vrot.lane.b32.xlu0 %v913, 80
      %v2682 = vpop.permute.xlu0 %2681
      %2683 = vrot.lane.b32.xlu0 %v918, 80
      %v2684 = vpop.permute.xlu0 %2683
      %2685 = vrot.lane.b32.xlu0 %v923, 80
      %v2686 = vpop.permute.xlu0 %2685
      %2687 = vrot.lane.b32.xlu0 %v928, 80
      %v2688 = vpop.permute.xlu0 %2687
      %2689 = vrot.lane.b32.xlu0 %v933, 80
      %v2690 = vpop.permute.xlu0 %2689
      %2691 = vrot.lane.b32.xlu0 %v938, 80
      %v2692 = vpop.permute.xlu0 %2691
      %2693 = vrot.lane.b32.xlu0 %v943, 80
      %v2694 = vpop.permute.xlu0 %2693
      %2695 = vrot.lane.b32.xlu0 %v948, 80
      %v2696 = vpop.permute.xlu0 %2695
      %2697 = vrot.lane.b32.xlu0 %v953, 80
      %v2698 = vpop.permute.xlu0 %2697
      %2699 = vrot.lane.b32.xlu0 %v958, 80
      %v2700 = vpop.permute.xlu0 %2699
      %2701 = vrot.lane.b32.xlu0 %v963, 80
      %v2702 = vpop.permute.xlu0 %2701
      %2703 = vrot.lane.b32.xlu0 %v968, 80
      %v2704 = vpop.permute.xlu0 %2703
      %2705 = vrot.lane.b32.xlu0 %v973, 80
      %v2706 = vpop.permute.xlu0 %2705
      %2707 = vrot.lane.b32.xlu0 %v978, 80
      %v2708 = vpop.permute.xlu0 %2707
      %2709 = vrot.lane.b32.xlu0 %v983, 80
      %v2710 = vpop.permute.xlu0 %2709
      %v2711 = vsel %vm1034, %v2648, 0
      %v2713 = vsel %vm1034, %v2650, 0
      %v2715 = vsel %vm1034, %v2652, 0
      %v2717 = vsel %vm1034, %v2654, 0
      %v2719 = vsel %vm1034, %v2656, 0
      %v2721 = vsel %vm1034, %v2658, 0
      %v2723 = vsel %vm1034, %v2660, 0
      %v2725 = vsel %vm1034, %v2662, 0
      %v2727 = vsel %vm1034, %v2664, 0
      %v2729 = vsel %vm1034, %v2666, 0
      %v2731 = vsel %vm1034, %v2668, 0
      %v2733 = vsel %vm1034, %v2670, 0
      %v2735 = vsel %vm1034, %v2672, 0
      %v2737 = vsel %vm1034, %v2674, 0
      %v2739 = vsel %vm1034, %v2676, 0
      %v2741 = vsel %vm1034, %v2678, 0
      %v2743 = vsel %vm1034, %v2680, 0
      %v2745 = vsel %vm1034, %v2682, 0
      %v2747 = vsel %vm1034, %v2684, 0
      %v2749 = vsel %vm1034, %v2686, 0
      %v2751 = vsel %vm1034, %v2688, 0
      %v2753 = vsel %vm1034, %v2690, 0
      %v2755 = vsel %vm1034, %v2692, 0
      %v2757 = vsel %vm1034, %v2694, 0
      %v2759 = vsel %vm1034, %v2696, 0
      %v2761 = vsel %vm1034, %v2698, 0
      %v2763 = vsel %vm1034, %v2700, 0
      %v2765 = vsel %vm1034, %v2702, 0
      %v2767 = vsel %vm1034, %v2704, 0
      %v2769 = vsel %vm1034, %v2706, 0
      %v2771 = vsel %vm1034, %v2708, 0
      %v2773 = vsel %vm1034, %v2710, 0
      %2775 = vmatprep.subr.mxu0 0.0
      %2776 = vmatpush1.xpose.msra.mxu0 %v2743
      %2777 = vmatprep.subr.mxu0 0.0
      %2778 = vmatpush1.xpose.msra.mxu0 %v2745
      %2779 = vmatprep.subr.mxu0 0.0
      %2780 = vmatpush1.xpose.msra.mxu0 %v2747
      %2781 = vmatprep.subr.mxu0 0.0
      %2782 = vmatpush1.xpose.msra.mxu0 %v2749
      %2783 = vmatprep.subr.mxu0 0.0
      %2784 = vmatpush1.xpose.msra.mxu0 %v2751
      %2785 = vmatprep.subr.mxu0 0.0
      %2786 = vmatpush1.xpose.msra.mxu0 %v2753
      %2787 = vmatprep.subr.mxu0 0.0
      %2788 = vmatpush1.xpose.msra.mxu0 %v2755
      %2789 = vmatprep.subr.mxu0 0.0
      %2790 = vmatpush1.xpose.msra.mxu0 %v2757
      %2791 = vmatprep.subr.mxu0 0.0
      %2792 = vmatpush1.xpose.msra.mxu0 %v2759
      %2793 = vmatprep.subr.mxu0 0.0
      %2794 = vmatpush1.xpose.msra.mxu0 %v2761
      %2795 = vmatprep.subr.mxu0 0.0
      %2796 = vmatpush1.xpose.msra.mxu0 %v2763
      %2797 = vmatprep.subr.mxu0 0.0
      %2798 = vmatpush1.xpose.msra.mxu0 %v2765
      %2799 = vmatprep.subr.mxu0 0.0
      %2800 = vmatpush1.xpose.msra.mxu0 %v2767
      %2801 = vmatprep.subr.mxu0 0.0
      %2802 = vmatpush1.xpose.msra.mxu0 %v2769
      %2803 = vmatprep.subr.mxu0 0.0
      %2804 = vmatpush1.xpose.msra.mxu0 %v2771
      %2805 = vmatprep.subr.mxu0 0.0
      %2806 = vmatpush1.xpose.msra.mxu0 %v2773
      %2807 = vmatprep.subr.mxu0 0.0
      %2808 = vmatpush1.xpose.msra.mxu0 0.0
      %2809 = vmatprep.subr.mxu0 0.0
      %2810 = vmatpush1.xpose.msra.mxu0 0.0
      %2811 = vmatprep.subr.mxu0 0.0
      %2812 = vmatpush1.xpose.msra.mxu0 0.0
      %2813 = vmatprep.subr.mxu0 0.0
      %2814 = vmatpush1.xpose.msra.mxu0 0.0
      %2815 = vmatprep.subr.mxu0 0.0
      %2816 = vmatpush1.xpose.msra.mxu0 0.0
      %2817 = vmatprep.subr.mxu0 0.0
      %2818 = vmatpush1.xpose.msra.mxu0 0.0
      %2819 = vmatprep.subr.mxu0 0.0
      %2820 = vmatpush1.xpose.msra.mxu0 0.0
      %2821 = vmatprep.subr.mxu0 0.0
      %2822 = vmatpush1.xpose.msra.mxu0 0.0
      %2823 = vmatprep.subr.mxu0 0.0
      %2824 = vmatpush1.xpose.msra.mxu0 0.0
      %2825 = vmatprep.subr.mxu0 0.0
      %2826 = vmatpush1.xpose.msra.mxu0 0.0
      %2827 = vmatprep.subr.mxu0 0.0
      %2828 = vmatpush1.xpose.msra.mxu0 0.0
      %2829 = vmatprep.subr.mxu0 0.0
      %2830 = vmatpush1.xpose.msra.mxu0 0.0
      %2831 = vmatprep.subr.mxu0 0.0
      %2832 = vmatpush1.xpose.msra.mxu0 0.0
      %2833 = vmatprep.subr.mxu0 0.0
      %2834 = vmatpush1.xpose.msra.mxu0 0.0
      %2835 = vmatprep.subr.mxu0 0.0
      %2836 = vmatpush1.xpose.msra.mxu0 0.0
      %2837 = vmatprep.subr.mxu0 0.0
      %2838 = vmatpush1.xpose.msra.mxu0 0.0
      %2839 = vmatprep.mubr.f32.mxu0 0.0
      %2840 = vmatmul.mubr.f32.gmra.mrb[0].mxu0 %v2711
      %v2841 = vpop.f32.mrb[0].mxu0
      %v2842 = vadd.f32 0.0, %v2841
      %v2843 = vpop.f32.mrb[0].mxu0
      %2844 = vmatprep.mubr.f32.mxu0 0.0
      %2845 = vmatmul.mubr.f32.gmra.mrb[0].mxu0 %v2713
      %v2846 = vpop.f32.mrb[0].mxu0
      %v2847 = vadd.f32 0.0, %v2846
      %v2848 = vpop.f32.mrb[0].mxu0
      %2849 = vmatprep.mubr.f32.mxu0 0.0
      %2850 = vmatmul.mubr.f32.gmra.mrb[0].mxu0 %v2715
      %v2851 = vpop.f32.mrb[0].mxu0
      %v2852 = vadd.f32 0.0, %v2851
      %v2853 = vpop.f32.mrb[0].mxu0
      %2854 = vmatprep.mubr.f32.mxu0 0.0
      %2855 = vmatmul.mubr.f32.gmra.mrb[0].mxu0 %v2717
      %v2856 = vpop.f32.mrb[0].mxu0
      %v2857 = vadd.f32 0.0, %v2856
      %v2858 = vpop.f32.mrb[0].mxu0
      %2859 = vmatprep.mubr.f32.mxu0 0.0
      %2860 = vmatmul.mubr.f32.gmra.mrb[0].mxu0 %v2719
      %v2861 = vpop.f32.mrb[0].mxu0
      %v2862 = vadd.f32 0.0, %v2861
      %v2863 = vpop.f32.mrb[0].mxu0
      %2864 = vmatprep.mubr.f32.mxu0 0.0
      %2865 = vmatmul.mubr.f32.gmra.mrb[0].mxu0 %v2721
      %v2866 = vpop.f32.mrb[0].mxu0
      %v2867 = vadd.f32 0.0, %v2866
      %v2868 = vpop.f32.mrb[0].mxu0
      %2869 = vmatprep.mubr.f32.mxu0 0.0
      %2870 = vmatmul.mubr.f32.gmra.mrb[0].mxu0 %v2723
      %v2871 = vpop.f32.mrb[0].mxu0
      %v2872 = vadd.f32 0.0, %v2871
      %v2873 = vpop.f32.mrb[0].mxu0
      %2874 = vmatprep.mubr.f32.mxu0 0.0
      %2875 = vmatmul.mubr.f32.gmra.mrb[0].mxu0 %v2725
      %v2876 = vpop.f32.mrb[0].mxu0
      %v2877 = vadd.f32 0.0, %v2876
      %v2878 = vpop.f32.mrb[0].mxu0
      %2879 = vmatprep.mubr.f32.mxu0 0.0
      %2880 = vmatmul.mubr.f32.gmra.mrb[0].mxu0 %v2727
      %v2881 = vpop.f32.mrb[0].mxu0
      %v2882 = vadd.f32 0.0, %v2881
      %v2883 = vpop.f32.mrb[0].mxu0
      %2884 = vmatprep.mubr.f32.mxu0 0.0
      %2885 = vmatmul.mubr.f32.gmra.mrb[0].mxu0 %v2729
      %v2886 = vpop.f32.mrb[0].mxu0
      %v2887 = vadd.f32 0.0, %v2886
      %v2888 = vpop.f32.mrb[0].mxu0
      %2889 = vmatprep.mubr.f32.mxu0 0.0
      %2890 = vmatmul.mubr.f32.gmra.mrb[0].mxu0 %v2731
      %v2891 = vpop.f32.mrb[0].mxu0
      %v2892 = vadd.f32 0.0, %v2891
      %v2893 = vpop.f32.mrb[0].mxu0
      %2894 = vmatprep.mubr.f32.mxu0 0.0
      %2895 = vmatmul.mubr.f32.gmra.mrb[0].mxu0 %v2733
      %v2896 = vpop.f32.mrb[0].mxu0
      %v2897 = vadd.f32 0.0, %v2896
      %v2898 = vpop.f32.mrb[0].mxu0
      %2899 = vmatprep.mubr.f32.mxu0 0.0
      %2900 = vmatmul.mubr.f32.gmra.mrb[0].mxu0 %v2735
      %v2901 = vpop.f32.mrb[0].mxu0
      %v2902 = vadd.f32 0.0, %v2901
      %v2903 = vpop.f32.mrb[0].mxu0
      %2904 = vmatprep.mubr.f32.mxu0 0.0
      %2905 = vmatmul.mubr.f32.gmra.mrb[0].mxu0 %v2737
      %v2906 = vpop.f32.mrb[0].mxu0
      %v2907 = vadd.f32 0.0, %v2906
      %v2908 = vpop.f32.mrb[0].mxu0
      %2909 = vmatprep.mubr.f32.mxu0 0.0
      %2910 = vmatmul.mubr.f32.gmra.mrb[0].mxu0 %v2739
      %v2911 = vpop.f32.mrb[0].mxu0
      %v2912 = vadd.f32 0.0, %v2911
      %v2913 = vpop.f32.mrb[0].mxu0
      %2914 = vmatprep.mubr.f32.mxu0 0.0
      %2915 = vmatmul.mubr.f32.gmra.mrb[0].mxu0 %v2741
      %v2916 = vpop.f32.mrb[0].mxu0
      %v2917 = vadd.f32 0.0, %v2916
      %v2918 = vpop.f32.mrb[0].mxu0
      %2919 = vdwg.mxu0
      %v2920 = vmul.f32 %v2842, 0.35355338
      %v2921 = vmul.f32 %v2847, 0.35355338
      %v2922 = vmul.f32 %v2852, 0.35355338
      %v2923 = vmul.f32 %v2857, 0.35355338
      %v2924 = vmul.f32 %v2862, 0.35355338
      %v2925 = vmul.f32 %v2867, 0.35355338
      %v2926 = vmul.f32 %v2872, 0.35355338
      %v2927 = vmul.f32 %v2877, 0.35355338
      %v2928 = vmul.f32 %v2882, 0.35355338
      %v2929 = vmul.f32 %v2887, 0.35355338
      %v2930 = vmul.f32 %v2892, 0.35355338
      %v2931 = vmul.f32 %v2897, 0.35355338
      %v2932 = vmul.f32 %v2902, 0.35355338
      %v2933 = vmul.f32 %v2907, 0.35355338
      %v2934 = vmul.f32 %v2912, 0.35355338
      %v2935 = vmul.f32 %v2917, 0.35355338
      %v2936 = vadd.f32 %v2920, %v1264
      %v2937 = vadd.f32 %v2921, %v1264
      %v2938 = vadd.f32 %v2922, %v1264
      %v2939 = vadd.f32 %v2923, %v1264
      %v2940 = vadd.f32 %v2924, %v1264
      %v2941 = vadd.f32 %v2925, %v1264
      %v2942 = vadd.f32 %v2926, %v1264
      %v2943 = vadd.f32 %v2927, %v1264
      %v2944 = vadd.f32 %v2928, %v1264
      %v2945 = vadd.f32 %v2929, %v1264
      %v2946 = vadd.f32 %v2930, %v1264
      %v2947 = vadd.f32 %v2931, %v1264
      %v2948 = vadd.f32 %v2932, %v1264
      %v2949 = vadd.f32 %v2933, %v1264
      %v2950 = vadd.f32 %v2934, %v1264
      %v2951 = vadd.f32 %v2935, %v1264
      %2952 = vmax.xlane.f32.xlu0 %v2936
      %v2953 = vpop.xlane.xlu0 %2952
      %2954 = vmax.xlane.f32.xlu0 %v2937
      %v2955 = vpop.xlane.xlu0 %2954
      %2956 = vmax.xlane.f32.xlu0 %v2938
      %v2957 = vpop.xlane.xlu0 %2956
      %2958 = vmax.xlane.f32.xlu0 %v2939
      %v2959 = vpop.xlane.xlu0 %2958
      %2960 = vmax.xlane.f32.xlu0 %v2940
      %v2961 = vpop.xlane.xlu0 %2960
      %2962 = vmax.xlane.f32.xlu0 %v2941
      %v2963 = vpop.xlane.xlu0 %2962
      %2964 = vmax.xlane.f32.xlu0 %v2942
      %v2965 = vpop.xlane.xlu0 %2964
      %2966 = vmax.xlane.f32.xlu0 %v2943
      %v2967 = vpop.xlane.xlu0 %2966
      %2968 = vmax.xlane.f32.xlu0 %v2944
      %v2969 = vpop.xlane.xlu0 %2968
      %2970 = vmax.xlane.f32.xlu0 %v2945
      %v2971 = vpop.xlane.xlu0 %2970
      %2972 = vmax.xlane.f32.xlu0 %v2946
      %v2973 = vpop.xlane.xlu0 %2972
      %2974 = vmax.xlane.f32.xlu0 %v2947
      %v2975 = vpop.xlane.xlu0 %2974
      %2976 = vmax.xlane.f32.xlu0 %v2948
      %v2977 = vpop.xlane.xlu0 %2976
      %2978 = vmax.xlane.f32.xlu0 %v2949
      %v2979 = vpop.xlane.xlu0 %2978
      %2980 = vmax.xlane.f32.xlu0 %v2950
      %v2981 = vpop.xlane.xlu0 %2980
      %2982 = vmax.xlane.f32.xlu0 %v2951
      %v2983 = vpop.xlane.xlu0 %2982
      %v2984 = vsub.f32 %v2936, %v2953
      %v2985 = vsub.f32 %v2937, %v2955
      %v2986 = vsub.f32 %v2938, %v2957
      %v2987 = vsub.f32 %v2939, %v2959
      %v2988 = vsub.f32 %v2940, %v2961
      %v2989 = vsub.f32 %v2941, %v2963
      %v2990 = vsub.f32 %v2942, %v2965
      %v2991 = vsub.f32 %v2943, %v2967
      %v2992 = vsub.f32 %v2944, %v2969
      %v2993 = vsub.f32 %v2945, %v2971
      %v2994 = vsub.f32 %v2946, %v2973
      %v2995 = vsub.f32 %v2947, %v2975
      %v2996 = vsub.f32 %v2948, %v2977
      %v2997 = vsub.f32 %v2949, %v2979
      %v2998 = vsub.f32 %v2950, %v2981
      %v2999 = vsub.f32 %v2951, %v2983
      %v3000 = vmul.f32 %v2984, 1.442695
      %v3001 = vpow.pop %v3000
      %v3002 = vmul.f32 %v2985, 1.442695
      %v3003 = vpow.pop %v3002
      %v3004 = vmul.f32 %v2986, 1.442695
      %v3005 = vpow.pop %v3004
      %v3006 = vmul.f32 %v2987, 1.442695
      %v3007 = vpow.pop %v3006
      %v3008 = vmul.f32 %v2988, 1.442695
      %v3009 = vpow.pop %v3008
      %v3010 = vmul.f32 %v2989, 1.442695
      %v3011 = vpow.pop %v3010
      %v3012 = vmul.f32 %v2990, 1.442695
      %v3013 = vpow.pop %v3012
      %v3014 = vmul.f32 %v2991, 1.442695
      %v3015 = vpow.pop %v3014
      %v3016 = vmul.f32 %v2992, 1.442695
      %v3017 = vpow.pop %v3016
      %v3018 = vmul.f32 %v2993, 1.442695
      %v3019 = vpow.pop %v3018
      %v3020 = vmul.f32 %v2994, 1.442695
      %v3021 = vpow.pop %v3020
      %v3022 = vmul.f32 %v2995, 1.442695
      %v3023 = vpow.pop %v3022
      %v3024 = vmul.f32 %v2996, 1.442695
      %v3025 = vpow.pop %v3024
      %v3026 = vmul.f32 %v2997, 1.442695
      %v3027 = vpow.pop %v3026
      %v3028 = vmul.f32 %v2998, 1.442695
      %v3029 = vpow.pop %v3028
      %v3030 = vmul.f32 %v2999, 1.442695
      %v3031 = vpow.pop %v3030
      %3032 = vadd.xlane.f32.xlu0 %v3001
      %v3033 = vpop.xlane.xlu0 %3032
      %3034 = vadd.xlane.f32.xlu0 %v3003
      %v3035 = vpop.xlane.xlu0 %3034
      %3036 = vadd.xlane.f32.xlu0 %v3005
      %v3037 = vpop.xlane.xlu0 %3036
      %3038 = vadd.xlane.f32.xlu0 %v3007
      %v3039 = vpop.xlane.xlu0 %3038
      %3040 = vadd.xlane.f32.xlu0 %v3009
      %v3041 = vpop.xlane.xlu0 %3040
      %3042 = vadd.xlane.f32.xlu0 %v3011
      %v3043 = vpop.xlane.xlu0 %3042
      %3044 = vadd.xlane.f32.xlu0 %v3013
      %v3045 = vpop.xlane.xlu0 %3044
      %3046 = vadd.xlane.f32.xlu0 %v3015
      %v3047 = vpop.xlane.xlu0 %3046
      %3048 = vadd.xlane.f32.xlu0 %v3017
      %v3049 = vpop.xlane.xlu0 %3048
      %3050 = vadd.xlane.f32.xlu0 %v3019
      %v3051 = vpop.xlane.xlu0 %3050
      %3052 = vadd.xlane.f32.xlu0 %v3021
      %v3053 = vpop.xlane.xlu0 %3052
      %3054 = vadd.xlane.f32.xlu0 %v3023
      %v3055 = vpop.xlane.xlu0 %3054
      %3056 = vadd.xlane.f32.xlu0 %v3025
      %v3057 = vpop.xlane.xlu0 %3056
      %3058 = vadd.xlane.f32.xlu0 %v3027
      %v3059 = vpop.xlane.xlu0 %3058
      %3060 = vadd.xlane.f32.xlu0 %v3029
      %v3061 = vpop.xlane.xlu0 %3060
      %3062 = vadd.xlane.f32.xlu0 %v3031
      %v3063 = vpop.xlane.xlu0 %3062
      %v3064 = vrcp.pop %v3033
      %v3065 = vrcp.pop %v3035
      %v3066 = vrcp.pop %v3037
      %v3067 = vrcp.pop %v3039
      %v3068 = vrcp.pop %v3041
      %v3069 = vrcp.pop %v3043
      %v3070 = vrcp.pop %v3045
      %v3071 = vrcp.pop %v3047
      %v3072 = vrcp.pop %v3049
      %v3073 = vrcp.pop %v3051
      %v3074 = vrcp.pop %v3053
      %v3075 = vrcp.pop %v3055
      %v3076 = vrcp.pop %v3057
      %v3077 = vrcp.pop %v3059
      %v3078 = vrcp.pop %v3061
      %v3079 = vrcp.pop %v3063
      %v3080 = vmul.f32 %v3001, %v3064
      %v3081 = vmul.f32 %v3003, %v3065
      %v3082 = vmul.f32 %v3005, %v3066
      %v3083 = vmul.f32 %v3007, %v3067
      %v3084 = vmul.f32 %v3009, %v3068
      %v3085 = vmul.f32 %v3011, %v3069
      %v3086 = vmul.f32 %v3013, %v3070
      %v3087 = vmul.f32 %v3015, %v3071
      %v3088 = vmul.f32 %v3017, %v3072
      %v3089 = vmul.f32 %v3019, %v3073
      %v3090 = vmul.f32 %v3021, %v3074
      %v3091 = vmul.f32 %v3023, %v3075
      %v3092 = vmul.f32 %v3025, %v3076
      %v3093 = vmul.f32 %v3027, %v3077
      %v3094 = vmul.f32 %v3029, %v3078
      %v3095 = vmul.f32 %v3031, %v3079
      %3096 = vrot.lane.b32.xlu0 %v908, 48
      %v3097 = vpop.permute.xlu0 %3096
      %3098 = vrot.lane.b32.xlu0 %v913, 48
      %v3099 = vpop.permute.xlu0 %3098
      %3100 = vrot.lane.b32.xlu0 %v918, 48
      %v3101 = vpop.permute.xlu0 %3100
      %3102 = vrot.lane.b32.xlu0 %v923, 48
      %v3103 = vpop.permute.xlu0 %3102
      %3104 = vrot.lane.b32.xlu0 %v928, 48
      %v3105 = vpop.permute.xlu0 %3104
      %3106 = vrot.lane.b32.xlu0 %v933, 48
      %v3107 = vpop.permute.xlu0 %3106
      %3108 = vrot.lane.b32.xlu0 %v938, 48
      %v3109 = vpop.permute.xlu0 %3108
      %3110 = vrot.lane.b32.xlu0 %v943, 48
      %v3111 = vpop.permute.xlu0 %3110
      %3112 = vrot.lane.b32.xlu0 %v948, 48
      %v3113 = vpop.permute.xlu0 %3112
      %3114 = vrot.lane.b32.xlu0 %v953, 48
      %v3115 = vpop.permute.xlu0 %3114
      %3116 = vrot.lane.b32.xlu0 %v958, 48
      %v3117 = vpop.permute.xlu0 %3116
      %3118 = vrot.lane.b32.xlu0 %v963, 48
      %v3119 = vpop.permute.xlu0 %3118
      %3120 = vrot.lane.b32.xlu0 %v968, 48
      %v3121 = vpop.permute.xlu0 %3120
      %3122 = vrot.lane.b32.xlu0 %v973, 48
      %v3123 = vpop.permute.xlu0 %3122
      %3124 = vrot.lane.b32.xlu0 %v978, 48
      %v3125 = vpop.permute.xlu0 %3124
      %3126 = vrot.lane.b32.xlu0 %v983, 48
      %v3127 = vpop.permute.xlu0 %3126
      %3144 = vmatprep.subr.mxu0 0.0
      %3145 = vmatpush1.msra.mxu0 %v3097
      %3146 = vmatprep.subr.mxu0 0.0
      %3147 = vmatpush1.msra.mxu0 %v3099
      %3148 = vmatprep.subr.mxu0 0.0
      %3149 = vmatpush1.msra.mxu0 %v3101
      %3150 = vmatprep.subr.mxu0 0.0
      %3151 = vmatpush1.msra.mxu0 %v3103
      %3152 = vmatprep.subr.mxu0 0.0
      %3153 = vmatpush1.msra.mxu0 %v3105
      %3154 = vmatprep.subr.mxu0 0.0
      %3155 = vmatpush1.msra.mxu0 %v3107
      %3156 = vmatprep.subr.mxu0 0.0
      %3157 = vmatpush1.msra.mxu0 %v3109
      %3158 = vmatprep.subr.mxu0 0.0
      %3159 = vmatpush1.msra.mxu0 %v3111
      %3160 = vmatprep.subr.mxu0 0.0
      %3161 = vmatpush1.msra.mxu0 %v3113
      %3162 = vmatprep.subr.mxu0 0.0
      %3163 = vmatpush1.msra.mxu0 %v3115
      %3164 = vmatprep.subr.mxu0 0.0
      %3165 = vmatpush1.msra.mxu0 %v3117
      %3166 = vmatprep.subr.mxu0 0.0
      %3167 = vmatpush1.msra.mxu0 %v3119
      %3168 = vmatprep.subr.mxu0 0.0
      %3169 = vmatpush1.msra.mxu0 %v3121
      %3170 = vmatprep.subr.mxu0 0.0
      %3171 = vmatpush1.msra.mxu0 %v3123
      %3172 = vmatprep.subr.mxu0 0.0
      %3173 = vmatpush1.msra.mxu0 %v3125
      %3174 = vmatprep.subr.mxu0 0.0
      %3175 = vmatpush1.msra.mxu0 %v3127
      %3176 = vmatprep.subr.mxu0 0.0
      %3177 = vmatpush1.msra.mxu0 0.0
      %3178 = vmatprep.subr.mxu0 0.0
      %3179 = vmatpush1.msra.mxu0 0.0
      %3180 = vmatprep.subr.mxu0 0.0
      %3181 = vmatpush1.msra.mxu0 0.0
      %3182 = vmatprep.subr.mxu0 0.0
      %3183 = vmatpush1.msra.mxu0 0.0
      %3184 = vmatprep.subr.mxu0 0.0
      %3185 = vmatpush1.msra.mxu0 0.0
      %3186 = vmatprep.subr.mxu0 0.0
      %3187 = vmatpush1.msra.mxu0 0.0
      %3188 = vmatprep.subr.mxu0 0.0
      %3189 = vmatpush1.msra.mxu0 0.0
      %3190 = vmatprep.subr.mxu0 0.0
      %3191 = vmatpush1.msra.mxu0 0.0
      %3192 = vmatprep.subr.mxu0 0.0
      %3193 = vmatpush1.msra.mxu0 0.0
      %3194 = vmatprep.subr.mxu0 0.0
      %3195 = vmatpush1.msra.mxu0 0.0
      %3196 = vmatprep.subr.mxu0 0.0
      %3197 = vmatpush1.msra.mxu0 0.0
      %3198 = vmatprep.subr.mxu0 0.0
      %3199 = vmatpush1.msra.mxu0 0.0
      %3200 = vmatprep.subr.mxu0 0.0
      %3201 = vmatpush1.msra.mxu0 0.0
      %3202 = vmatprep.subr.mxu0 0.0
      %3203 = vmatpush1.msra.mxu0 0.0
      %3204 = vmatprep.subr.mxu0 0.0
      %3205 = vmatpush1.msra.mxu0 0.0
      %3206 = vmatprep.subr.mxu0 0.0
      %3207 = vmatpush1.msra.mxu0 0.0
      %3208 = vmatprep.mubr.f32.mxu0 0.0
      %3209 = vmatmul.mubr.f32.gmra.mrb[0].mxu0 %v3080
      %v3210 = vpop.f32.mrb[0].mxu0
      %v3211 = vadd.f32 0.0, %v3210
      %v3212 = vpop.f32.mrb[0].mxu0
      %3213 = vmatprep.mubr.f32.mxu0 0.0
      %3214 = vmatmul.mubr.f32.gmra.mrb[0].mxu0 %v3081
      %v3215 = vpop.f32.mrb[0].mxu0
      %v3216 = vadd.f32 0.0, %v3215
      %v3217 = vpop.f32.mrb[0].mxu0
      %3218 = vmatprep.mubr.f32.mxu0 0.0
      %3219 = vmatmul.mubr.f32.gmra.mrb[0].mxu0 %v3082
      %v3220 = vpop.f32.mrb[0].mxu0
      %v3221 = vadd.f32 0.0, %v3220
      %v3222 = vpop.f32.mrb[0].mxu0
      %3223 = vmatprep.mubr.f32.mxu0 0.0
      %3224 = vmatmul.mubr.f32.gmra.mrb[0].mxu0 %v3083
      %v3225 = vpop.f32.mrb[0].mxu0
      %v3226 = vadd.f32 0.0, %v3225
      %v3227 = vpop.f32.mrb[0].mxu0
      %3228 = vmatprep.mubr.f32.mxu0 0.0
      %3229 = vmatmul.mubr.f32.gmra.mrb[0].mxu0 %v3084
      %v3230 = vpop.f32.mrb[0].mxu0
      %v3231 = vadd.f32 0.0, %v3230
      %v3232 = vpop.f32.mrb[0].mxu0
      %3233 = vmatprep.mubr.f32.mxu0 0.0
      %3234 = vmatmul.mubr.f32.gmra.mrb[0].mxu0 %v3085
      %v3235 = vpop.f32.mrb[0].mxu0
      %v3236 = vadd.f32 0.0, %v3235
      %v3237 = vpop.f32.mrb[0].mxu0
      %3238 = vmatprep.mubr.f32.mxu0 0.0
      %3239 = vmatmul.mubr.f32.gmra.mrb[0].mxu0 %v3086
      %v3240 = vpop.f32.mrb[0].mxu0
      %v3241 = vadd.f32 0.0, %v3240
      %v3242 = vpop.f32.mrb[0].mxu0
      %3243 = vmatprep.mubr.f32.mxu0 0.0
      %3244 = vmatmul.mubr.f32.gmra.mrb[0].mxu0 %v3087
      %v3245 = vpop.f32.mrb[0].mxu0
      %v3246 = vadd.f32 0.0, %v3245
      %v3247 = vpop.f32.mrb[0].mxu0
      %3248 = vmatprep.mubr.f32.mxu0 0.0
      %3249 = vmatmul.mubr.f32.gmra.mrb[0].mxu0 %v3088
      %v3250 = vpop.f32.mrb[0].mxu0
      %v3251 = vadd.f32 0.0, %v3250
      %v3252 = vpop.f32.mrb[0].mxu0
      %3253 = vmatprep.mubr.f32.mxu0 0.0
      %3254 = vmatmul.mubr.f32.gmra.mrb[0].mxu0 %v3089
      %v3255 = vpop.f32.mrb[0].mxu0
      %v3256 = vadd.f32 0.0, %v3255
      %v3257 = vpop.f32.mrb[0].mxu0
      %3258 = vmatprep.mubr.f32.mxu0 0.0
      %3259 = vmatmul.mubr.f32.gmra.mrb[0].mxu0 %v3090
      %v3260 = vpop.f32.mrb[0].mxu0
      %v3261 = vadd.f32 0.0, %v3260
      %v3262 = vpop.f32.mrb[0].mxu0
      %3263 = vmatprep.mubr.f32.mxu0 0.0
      %3264 = vmatmul.mubr.f32.gmra.mrb[0].mxu0 %v3091
      %v3265 = vpop.f32.mrb[0].mxu0
      %v3266 = vadd.f32 0.0, %v3265
      %v3267 = vpop.f32.mrb[0].mxu0
      %3268 = vmatprep.mubr.f32.mxu0 0.0
      %3269 = vmatmul.mubr.f32.gmra.mrb[0].mxu0 %v3092
      %v3270 = vpop.f32.mrb[0].mxu0
      %v3271 = vadd.f32 0.0, %v3270
      %v3272 = vpop.f32.mrb[0].mxu0
      %3273 = vmatprep.mubr.f32.mxu0 0.0
      %3274 = vmatmul.mubr.f32.gmra.mrb[0].mxu0 %v3093
      %v3275 = vpop.f32.mrb[0].mxu0
      %v3276 = vadd.f32 0.0, %v3275
      %v3277 = vpop.f32.mrb[0].mxu0
      %3278 = vmatprep.mubr.f32.mxu0 0.0
      %3279 = vmatmul.mubr.f32.gmra.mrb[0].mxu0 %v3094
      %v3280 = vpop.f32.mrb[0].mxu0
      %v3281 = vadd.f32 0.0, %v3280
      %v3282 = vpop.f32.mrb[0].mxu0
      %3283 = vmatprep.mubr.f32.mxu0 0.0
      %3284 = vmatmul.mubr.f32.gmra.mrb[0].mxu0 %v3095
      %v3285 = vpop.f32.mrb[0].mxu0
      %v3286 = vadd.f32 0.0, %v3285
      %v3287 = vpop.f32.mrb[0].mxu0
      %3288 = vdwg.mxu0
      %v3290 = vsel %vm1034, %v3211, 0
      %v3293 = vsel %vm1034, %v3216, 0
      %v3296 = vsel %vm1034, %v3221, 0
      %v3299 = vsel %vm1034, %v3226, 0
      %v3302 = vsel %vm1034, %v3231, 0
      %v3305 = vsel %vm1034, %v3236, 0
      %v3308 = vsel %vm1034, %v3241, 0
      %v3311 = vsel %vm1034, %v3246, 0
      %v3314 = vsel %vm1034, %v3251, 0
      %v3317 = vsel %vm1034, %v3256, 0
      %v3320 = vsel %vm1034, %v3261, 0
      %v3323 = vsel %vm1034, %v3266, 0
      %v3326 = vsel %vm1034, %v3271, 0
      %v3329 = vsel %vm1034, %v3276, 0
      %v3332 = vsel %vm1034, %v3281, 0
      %v3335 = vsel %vm1034, %v3286, 0
      %3337 = vmatprep.subr.mxu0 0.0
      %3338 = vmatpush1.msra.mxu0 %v765
      %3339 = vmatprep.subr.mxu0 0.0
      %3340 = vmatpush1.msra.mxu0 0.0
      %3341 = vmatprep.subr.mxu0 0.0
      %3342 = vmatpush1.msra.mxu0 0.0
      %3343 = vmatprep.subr.mxu0 0.0
      %3344 = vmatpush1.msra.mxu0 0.0
      %3345 = vmatprep.subr.mxu0 0.0
      %3346 = vmatpush1.msra.mxu0 0.0
      %3347 = vmatprep.subr.mxu0 0.0
      %3348 = vmatpush1.msra.mxu0 0.0
      %3349 = vmatprep.subr.mxu0 0.0
      %3350 = vmatpush1.msra.mxu0 0.0
      %3351 = vmatprep.subr.mxu0 0.0
      %3352 = vmatpush1.msra.mxu0 0.0
      %3353 = vmatprep.subr.mxu0 0.0
      %3354 = vmatpush1.msra.mxu0 0.0
      %3355 = vmatprep.subr.mxu0 0.0
      %3356 = vmatpush1.msra.mxu0 0.0
      %3357 = vmatprep.subr.mxu0 0.0
      %3358 = vmatpush1.msra.mxu0 0.0
      %3359 = vmatprep.subr.mxu0 0.0
      %3360 = vmatpush1.msra.mxu0 0.0
      %3361 = vmatprep.subr.mxu0 0.0
      %3362 = vmatpush1.msra.mxu0 0.0
      %3363 = vmatprep.subr.mxu0 0.0
      %3364 = vmatpush1.msra.mxu0 0.0
      %3365 = vmatprep.subr.mxu0 0.0
      %3366 = vmatpush1.msra.mxu0 0.0
      %3367 = vmatprep.subr.mxu0 0.0
      %3368 = vmatpush1.msra.mxu0 0.0
      %3369 = vmatprep.subr.mxu0 0.0
      %3370 = vmatpush1.msra.mxu0 0.0
      %3371 = vmatprep.subr.mxu0 0.0
      %3372 = vmatpush1.msra.mxu0 0.0
      %3373 = vmatprep.subr.mxu0 0.0
      %3374 = vmatpush1.msra.mxu0 0.0
      %3375 = vmatprep.subr.mxu0 0.0
      %3376 = vmatpush1.msra.mxu0 0.0
      %3377 = vmatprep.subr.mxu0 0.0
      %3378 = vmatpush1.msra.mxu0 0.0
      %3379 = vmatprep.subr.mxu0 0.0
      %3380 = vmatpush1.msra.mxu0 0.0
      %3381 = vmatprep.subr.mxu0 0.0
      %3382 = vmatpush1.msra.mxu0 0.0
      %3383 = vmatprep.subr.mxu0 0.0
      %3384 = vmatpush1.msra.mxu0 0.0
      %3385 = vmatprep.subr.mxu0 0.0
      %3386 = vmatpush1.msra.mxu0 0.0
      %3387 = vmatprep.subr.mxu0 0.0
      %3388 = vmatpush1.msra.mxu0 0.0
      %3389 = vmatprep.subr.mxu0 0.0
      %3390 = vmatpush1.msra.mxu0 0.0
      %3391 = vmatprep.subr.mxu0 0.0
      %3392 = vmatpush1.msra.mxu0 0.0
      %3393 = vmatprep.subr.mxu0 0.0
      %3394 = vmatpush1.msra.mxu0 0.0
      %3395 = vmatprep.subr.mxu0 0.0
      %3396 = vmatpush1.msra.mxu0 0.0
      %3397 = vmatprep.subr.mxu0 0.0
      %3398 = vmatpush1.msra.mxu0 0.0
      %3399 = vmatprep.subr.mxu0 0.0
      %3400 = vmatpush1.msra.mxu0 0.0
      %3401 = vmatprep.mubr.f32.mxu0 0.0
      %3402 = vmatmul.mubr.f32.gmra.mrb[0].mxu0 %v3290
      %v3403 = vpop.f32.mrb[0].mxu0
      %v3404 = vadd.f32 0.0, %v3403
      %v3405 = vpop.f32.mrb[0].mxu0
      %3406 = vmatprep.mubr.f32.mxu0 0.0
      %3407 = vmatmul.mubr.f32.gmra.mrb[0].mxu0 %v3293
      %v3408 = vpop.f32.mrb[0].mxu0
      %v3409 = vadd.f32 0.0, %v3408
      %v3410 = vpop.f32.mrb[0].mxu0
      %3411 = vmatprep.mubr.f32.mxu0 0.0
      %3412 = vmatmul.mubr.f32.gmra.mrb[0].mxu0 %v3296
      %v3413 = vpop.f32.mrb[0].mxu0
      %v3414 = vadd.f32 0.0, %v3413
      %v3415 = vpop.f32.mrb[0].mxu0
      %3416 = vmatprep.mubr.f32.mxu0 0.0
      %3417 = vmatmul.mubr.f32.gmra.mrb[0].mxu0 %v3299
      %v3418 = vpop.f32.mrb[0].mxu0
      %v3419 = vadd.f32 0.0, %v3418
      %v3420 = vpop.f32.mrb[0].mxu0
      %3421 = vmatprep.mubr.f32.mxu0 0.0
      %3422 = vmatmul.mubr.f32.gmra.mrb[0].mxu0 %v3302
      %v3423 = vpop.f32.mrb[0].mxu0
      %v3424 = vadd.f32 0.0, %v3423
      %v3425 = vpop.f32.mrb[0].mxu0
      %3426 = vmatprep.mubr.f32.mxu0 0.0
      %3427 = vmatmul.mubr.f32.gmra.mrb[0].mxu0 %v3305
      %v3428 = vpop.f32.mrb[0].mxu0
      %v3429 = vadd.f32 0.0, %v3428
      %v3430 = vpop.f32.mrb[0].mxu0
      %3431 = vmatprep.mubr.f32.mxu0 0.0
      %3432 = vmatmul.mubr.f32.gmra.mrb[0].mxu0 %v3308
      %v3433 = vpop.f32.mrb[0].mxu0
      %v3434 = vadd.f32 0.0, %v3433
      %v3435 = vpop.f32.mrb[0].mxu0
      %3436 = vmatprep.mubr.f32.mxu0 0.0
      %3437 = vmatmul.mubr.f32.gmra.mrb[0].mxu0 %v3311
      %v3438 = vpop.f32.mrb[0].mxu0
      %v3439 = vadd.f32 0.0, %v3438
      %v3440 = vpop.f32.mrb[0].mxu0
      %3441 = vmatprep.mubr.f32.mxu0 0.0
      %3442 = vmatmul.mubr.f32.gmra.mrb[0].mxu0 %v3314
      %v3443 = vpop.f32.mrb[0].mxu0
      %v3444 = vadd.f32 0.0, %v3443
      %v3445 = vpop.f32.mrb[0].mxu0
      %3446 = vmatprep.mubr.f32.mxu0 0.0
      %3447 = vmatmul.mubr.f32.gmra.mrb[0].mxu0 %v3317
      %v3448 = vpop.f32.mrb[0].mxu0
      %v3449 = vadd.f32 0.0, %v3448
      %v3450 = vpop.f32.mrb[0].mxu0
      %3451 = vmatprep.mubr.f32.mxu0 0.0
      %3452 = vmatmul.mubr.f32.gmra.mrb[0].mxu0 %v3320
      %v3453 = vpop.f32.mrb[0].mxu0
      %v3454 = vadd.f32 0.0, %v3453
      %v3455 = vpop.f32.mrb[0].mxu0
      %3456 = vmatprep.mubr.f32.mxu0 0.0
      %3457 = vmatmul.mubr.f32.gmra.mrb[0].mxu0 %v3323
      %v3458 = vpop.f32.mrb[0].mxu0
      %v3459 = vadd.f32 0.0, %v3458
      %v3460 = vpop.f32.mrb[0].mxu0
      %3461 = vmatprep.mubr.f32.mxu0 0.0
      %3462 = vmatmul.mubr.f32.gmra.mrb[0].mxu0 %v3326
      %v3463 = vpop.f32.mrb[0].mxu0
      %v3464 = vadd.f32 0.0, %v3463
      %v3465 = vpop.f32.mrb[0].mxu0
      %3466 = vmatprep.mubr.f32.mxu0 0.0
      %3467 = vmatmul.mubr.f32.gmra.mrb[0].mxu0 %v3329
      %v3468 = vpop.f32.mrb[0].mxu0
      %v3469 = vadd.f32 0.0, %v3468
      %v3470 = vpop.f32.mrb[0].mxu0
      %3471 = vmatprep.mubr.f32.mxu0 0.0
      %3472 = vmatmul.mubr.f32.gmra.mrb[0].mxu0 %v3332
      %v3473 = vpop.f32.mrb[0].mxu0
      %v3474 = vadd.f32 0.0, %v3473
      %v3475 = vpop.f32.mrb[0].mxu0
      %3476 = vmatprep.mubr.f32.mxu0 0.0
      %3477 = vmatmul.mubr.f32.gmra.mrb[0].mxu0 %v3335
      %v3478 = vpop.f32.mrb[0].mxu0
      %v3479 = vadd.f32 0.0, %v3478
      %v3480 = vpop.f32.mrb[0].mxu0
      %3481 = vdwg.mxu0
      %v3482 = vadd.f32 %v2569, %v3404
      %v3483 = vadd.f32 %v2574, %v3409
      %v3484 = vadd.f32 %v2579, %v3414
      %v3485 = vadd.f32 %v2584, %v3419
      %v3486 = vadd.f32 %v2589, %v3424
      %v3487 = vadd.f32 %v2594, %v3429
      %v3488 = vadd.f32 %v2599, %v3434
      %v3489 = vadd.f32 %v2604, %v3439
      %v3490 = vadd.f32 %v2609, %v3444
      %v3491 = vadd.f32 %v2614, %v3449
      %v3492 = vadd.f32 %v2619, %v3454
      %v3493 = vadd.f32 %v2624, %v3459
      %v3494 = vadd.f32 %v2629, %v3464
      %v3495 = vadd.f32 %v2634, %v3469
      %v3496 = vadd.f32 %v2639, %v3474
      %v3497 = vadd.f32 %v2644, %v3479
      %3498 = vrot.lane.b32.xlu0 %v908, 104
      %v3499 = vpop.permute.xlu0 %3498
      %3500 = vrot.lane.b32.xlu0 %v913, 104
      %v3501 = vpop.permute.xlu0 %3500
      %3502 = vrot.lane.b32.xlu0 %v918, 104
      %v3503 = vpop.permute.xlu0 %3502
      %3504 = vrot.lane.b32.xlu0 %v923, 104
      %v3505 = vpop.permute.xlu0 %3504
      %3506 = vrot.lane.b32.xlu0 %v928, 104
      %v3507 = vpop.permute.xlu0 %3506
      %3508 = vrot.lane.b32.xlu0 %v933, 104
      %v3509 = vpop.permute.xlu0 %3508
      %3510 = vrot.lane.b32.xlu0 %v938, 104
      %v3511 = vpop.permute.xlu0 %3510
      %3512 = vrot.lane.b32.xlu0 %v943, 104
      %v3513 = vpop.permute.xlu0 %3512
      %3514 = vrot.lane.b32.xlu0 %v948, 104
      %v3515 = vpop.permute.xlu0 %3514
      %3516 = vrot.lane.b32.xlu0 %v953, 104
      %v3517 = vpop.permute.xlu0 %3516
      %3518 = vrot.lane.b32.xlu0 %v958, 104
      %v3519 = vpop.permute.xlu0 %3518
      %3520 = vrot.lane.b32.xlu0 %v963, 104
      %v3521 = vpop.permute.xlu0 %3520
      %3522 = vrot.lane.b32.xlu0 %v968, 104
      %v3523 = vpop.permute.xlu0 %3522
      %3524 = vrot.lane.b32.xlu0 %v973, 104
      %v3525 = vpop.permute.xlu0 %3524
      %3526 = vrot.lane.b32.xlu0 %v978, 104
      %v3527 = vpop.permute.xlu0 %3526
      %3528 = vrot.lane.b32.xlu0 %v983, 104
      %v3529 = vpop.permute.xlu0 %3528
      %3530 = vrot.lane.b32.xlu0 %v908, 72
      %v3531 = vpop.permute.xlu0 %3530
      %3532 = vrot.lane.b32.xlu0 %v913, 72
      %v3533 = vpop.permute.xlu0 %3532
      %3534 = vrot.lane.b32.xlu0 %v918, 72
      %v3535 = vpop.permute.xlu0 %3534
      %3536 = vrot.lane.b32.xlu0 %v923, 72
      %v3537 = vpop.permute.xlu0 %3536
      %3538 = vrot.lane.b32.xlu0 %v928, 72
      %v3539 = vpop.permute.xlu0 %3538
      %3540 = vrot.lane.b32.xlu0 %v933, 72
      %v3541 = vpop.permute.xlu0 %3540
      %3542 = vrot.lane.b32.xlu0 %v938, 72
      %v3543 = vpop.permute.xlu0 %3542
      %3544 = vrot.lane.b32.xlu0 %v943, 72
      %v3545 = vpop.permute.xlu0 %3544
      %3546 = vrot.lane.b32.xlu0 %v948, 72
      %v3547 = vpop.permute.xlu0 %3546
      %3548 = vrot.lane.b32.xlu0 %v953, 72
      %v3549 = vpop.permute.xlu0 %3548
      %3550 = vrot.lane.b32.xlu0 %v958, 72
      %v3551 = vpop.permute.xlu0 %3550
      %3552 = vrot.lane.b32.xlu0 %v963, 72
      %v3553 = vpop.permute.xlu0 %3552
      %3554 = vrot.lane.b32.xlu0 %v968, 72
      %v3555 = vpop.permute.xlu0 %3554
      %3556 = vrot.lane.b32.xlu0 %v973, 72
      %v3557 = vpop.permute.xlu0 %3556
      %3558 = vrot.lane.b32.xlu0 %v978, 72
      %v3559 = vpop.permute.xlu0 %3558
      %3560 = vrot.lane.b32.xlu0 %v983, 72
      %v3561 = vpop.permute.xlu0 %3560
      %v3562 = vsel %vm1034, %v3499, 0
      %v3564 = vsel %vm1034, %v3501, 0
      %v3566 = vsel %vm1034, %v3503, 0
      %v3568 = vsel %vm1034, %v3505, 0
      %v3570 = vsel %vm1034, %v3507, 0
      %v3572 = vsel %vm1034, %v3509, 0
      %v3574 = vsel %vm1034, %v3511, 0
      %v3576 = vsel %vm1034, %v3513, 0
      %v3578 = vsel %vm1034, %v3515, 0
      %v3580 = vsel %vm1034, %v3517, 0
      %v3582 = vsel %vm1034, %v3519, 0
      %v3584 = vsel %vm1034, %v3521, 0
      %v3586 = vsel %vm1034, %v3523, 0
      %v3588 = vsel %vm1034, %v3525, 0
      %v3590 = vsel %vm1034, %v3527, 0
      %v3592 = vsel %vm1034, %v3529, 0
      %v3594 = vsel %vm1034, %v3531, 0
      %v3596 = vsel %vm1034, %v3533, 0
      %v3598 = vsel %vm1034, %v3535, 0
      %v3600 = vsel %vm1034, %v3537, 0
      %v3602 = vsel %vm1034, %v3539, 0
      %v3604 = vsel %vm1034, %v3541, 0
      %v3606 = vsel %vm1034, %v3543, 0
      %v3608 = vsel %vm1034, %v3545, 0
      %v3610 = vsel %vm1034, %v3547, 0
      %v3612 = vsel %vm1034, %v3549, 0
      %v3614 = vsel %vm1034, %v3551, 0
      %v3616 = vsel %vm1034, %v3553, 0
      %v3618 = vsel %vm1034, %v3555, 0
      %v3620 = vsel %vm1034, %v3557, 0
      %v3622 = vsel %vm1034, %v3559, 0
      %v3624 = vsel %vm1034, %v3561, 0
      %3626 = vmatprep.subr.mxu0 0.0
      %3627 = vmatpush1.xpose.msra.mxu0 %v3594
      %3628 = vmatprep.subr.mxu0 0.0
      %3629 = vmatpush1.xpose.msra.mxu0 %v3596
      %3630 = vmatprep.subr.mxu0 0.0
      %3631 = vmatpush1.xpose.msra.mxu0 %v3598
      %3632 = vmatprep.subr.mxu0 0.0
      %3633 = vmatpush1.xpose.msra.mxu0 %v3600
      %3634 = vmatprep.subr.mxu0 0.0
      %3635 = vmatpush1.xpose.msra.mxu0 %v3602
      %3636 = vmatprep.subr.mxu0 0.0
      %3637 = vmatpush1.xpose.msra.mxu0 %v3604
      %3638 = vmatprep.subr.mxu0 0.0
      %3639 = vmatpush1.xpose.msra.mxu0 %v3606
      %3640 = vmatprep.subr.mxu0 0.0
      %3641 = vmatpush1.xpose.msra.mxu0 %v3608
      %3642 = vmatprep.subr.mxu0 0.0
      %3643 = vmatpush1.xpose.msra.mxu0 %v3610
      %3644 = vmatprep.subr.mxu0 0.0
      %3645 = vmatpush1.xpose.msra.mxu0 %v3612
      %3646 = vmatprep.subr.mxu0 0.0
      %3647 = vmatpush1.xpose.msra.mxu0 %v3614
      %3648 = vmatprep.subr.mxu0 0.0
      %3649 = vmatpush1.xpose.msra.mxu0 %v3616
      %3650 = vmatprep.subr.mxu0 0.0
      %3651 = vmatpush1.xpose.msra.mxu0 %v3618
      %3652 = vmatprep.subr.mxu0 0.0
      %3653 = vmatpush1.xpose.msra.mxu0 %v3620
      %3654 = vmatprep.subr.mxu0 0.0
      %3655 = vmatpush1.xpose.msra.mxu0 %v3622
      %3656 = vmatprep.subr.mxu0 0.0
      %3657 = vmatpush1.xpose.msra.mxu0 %v3624
      %3658 = vmatprep.subr.mxu0 0.0
      %3659 = vmatpush1.xpose.msra.mxu0 0.0
      %3660 = vmatprep.subr.mxu0 0.0
      %3661 = vmatpush1.xpose.msra.mxu0 0.0
      %3662 = vmatprep.subr.mxu0 0.0
      %3663 = vmatpush1.xpose.msra.mxu0 0.0
      %3664 = vmatprep.subr.mxu0 0.0
      %3665 = vmatpush1.xpose.msra.mxu0 0.0
      %3666 = vmatprep.subr.mxu0 0.0
      %3667 = vmatpush1.xpose.msra.mxu0 0.0
      %3668 = vmatprep.subr.mxu0 0.0
      %3669 = vmatpush1.xpose.msra.mxu0 0.0
      %3670 = vmatprep.subr.mxu0 0.0
      %3671 = vmatpush1.xpose.msra.mxu0 0.0
      %3672 = vmatprep.subr.mxu0 0.0
      %3673 = vmatpush1.xpose.msra.mxu0 0.0
      %3674 = vmatprep.subr.mxu0 0.0
      %3675 = vmatpush1.xpose.msra.mxu0 0.0
      %3676 = vmatprep.subr.mxu0 0.0
      %3677 = vmatpush1.xpose.msra.mxu0 0.0
      %3678 = vmatprep.subr.mxu0 0.0
      %3679 = vmatpush1.xpose.msra.mxu0 0.0
      %3680 = vmatprep.subr.mxu0 0.0
      %3681 = vmatpush1.xpose.msra.mxu0 0.0
      %3682 = vmatprep.subr.mxu0 0.0
      %3683 = vmatpush1.xpose.msra.mxu0 0.0
      %3684 = vmatprep.subr.mxu0 0.0
      %3685 = vmatpush1.xpose.msra.mxu0 0.0
      %3686 = vmatprep.subr.mxu0 0.0
      %3687 = vmatpush1.xpose.msra.mxu0 0.0
      %3688 = vmatprep.subr.mxu0 0.0
      %3689 = vmatpush1.xpose.msra.mxu0 0.0
      %3690 = vmatprep.mubr.f32.mxu0 0.0
      %3691 = vmatmul.mubr.f32.gmra.mrb[0].mxu0 %v3562
      %v3692 = vpop.f32.mrb[0].mxu0
      %v3693 = vadd.f32 0.0, %v3692
      %v3694 = vpop.f32.mrb[0].mxu0
      %3695 = vmatprep.mubr.f32.mxu0 0.0
      %3696 = vmatmul.mubr.f32.gmra.mrb[0].mxu0 %v3564
      %v3697 = vpop.f32.mrb[0].mxu0
      %v3698 = vadd.f32 0.0, %v3697
      %v3699 = vpop.f32.mrb[0].mxu0
      %3700 = vmatprep.mubr.f32.mxu0 0.0
      %3701 = vmatmul.mubr.f32.gmra.mrb[0].mxu0 %v3566
      %v3702 = vpop.f32.mrb[0].mxu0
      %v3703 = vadd.f32 0.0, %v3702
      %v3704 = vpop.f32.mrb[0].mxu0
      %3705 = vmatprep.mubr.f32.mxu0 0.0
      %3706 = vmatmul.mubr.f32.gmra.mrb[0].mxu0 %v3568
      %v3707 = vpop.f32.mrb[0].mxu0
      %v3708 = vadd.f32 0.0, %v3707
      %v3709 = vpop.f32.mrb[0].mxu0
      %3710 = vmatprep.mubr.f32.mxu0 0.0
      %3711 = vmatmul.mubr.f32.gmra.mrb[0].mxu0 %v3570
      %v3712 = vpop.f32.mrb[0].mxu0
      %v3713 = vadd.f32 0.0, %v3712
      %v3714 = vpop.f32.mrb[0].mxu0
      %3715 = vmatprep.mubr.f32.mxu0 0.0
      %3716 = vmatmul.mubr.f32.gmra.mrb[0].mxu0 %v3572
      %v3717 = vpop.f32.mrb[0].mxu0
      %v3718 = vadd.f32 0.0, %v3717
      %v3719 = vpop.f32.mrb[0].mxu0
      %3720 = vmatprep.mubr.f32.mxu0 0.0
      %3721 = vmatmul.mubr.f32.gmra.mrb[0].mxu0 %v3574
      %v3722 = vpop.f32.mrb[0].mxu0
      %v3723 = vadd.f32 0.0, %v3722
      %v3724 = vpop.f32.mrb[0].mxu0
      %3725 = vmatprep.mubr.f32.mxu0 0.0
      %3726 = vmatmul.mubr.f32.gmra.mrb[0].mxu0 %v3576
      %v3727 = vpop.f32.mrb[0].mxu0
      %v3728 = vadd.f32 0.0, %v3727
      %v3729 = vpop.f32.mrb[0].mxu0
      %3730 = vmatprep.mubr.f32.mxu0 0.0
      %3731 = vmatmul.mubr.f32.gmra.mrb[0].mxu0 %v3578
      %v3732 = vpop.f32.mrb[0].mxu0
      %v3733 = vadd.f32 0.0, %v3732
      %v3734 = vpop.f32.mrb[0].mxu0
      %3735 = vmatprep.mubr.f32.mxu0 0.0
      %3736 = vmatmul.mubr.f32.gmra.mrb[0].mxu0 %v3580
      %v3737 = vpop.f32.mrb[0].mxu0
      %v3738 = vadd.f32 0.0, %v3737
      %v3739 = vpop.f32.mrb[0].mxu0
      %3740 = vmatprep.mubr.f32.mxu0 0.0
      %3741 = vmatmul.mubr.f32.gmra.mrb[0].mxu0 %v3582
      %v3742 = vpop.f32.mrb[0].mxu0
      %v3743 = vadd.f32 0.0, %v3742
      %v3744 = vpop.f32.mrb[0].mxu0
      %3745 = vmatprep.mubr.f32.mxu0 0.0
      %3746 = vmatmul.mubr.f32.gmra.mrb[0].mxu0 %v3584
      %v3747 = vpop.f32.mrb[0].mxu0
      %v3748 = vadd.f32 0.0, %v3747
      %v3749 = vpop.f32.mrb[0].mxu0
      %3750 = vmatprep.mubr.f32.mxu0 0.0
      %3751 = vmatmul.mubr.f32.gmra.mrb[0].mxu0 %v3586
      %v3752 = vpop.f32.mrb[0].mxu0
      %v3753 = vadd.f32 0.0, %v3752
      %v3754 = vpop.f32.mrb[0].mxu0
      %3755 = vmatprep.mubr.f32.mxu0 0.0
      %3756 = vmatmul.mubr.f32.gmra.mrb[0].mxu0 %v3588
      %v3757 = vpop.f32.mrb[0].mxu0
      %v3758 = vadd.f32 0.0, %v3757
      %v3759 = vpop.f32.mrb[0].mxu0
      %3760 = vmatprep.mubr.f32.mxu0 0.0
      %3761 = vmatmul.mubr.f32.gmra.mrb[0].mxu0 %v3590
      %v3762 = vpop.f32.mrb[0].mxu0
      %v3763 = vadd.f32 0.0, %v3762
      %v3764 = vpop.f32.mrb[0].mxu0
      %3765 = vmatprep.mubr.f32.mxu0 0.0
      %3766 = vmatmul.mubr.f32.gmra.mrb[0].mxu0 %v3592
      %v3767 = vpop.f32.mrb[0].mxu0
      %v3768 = vadd.f32 0.0, %v3767
      %v3769 = vpop.f32.mrb[0].mxu0
      %3770 = vdwg.mxu0
      %v3771 = vmul.f32 %v3693, 0.35355338
      %v3772 = vmul.f32 %v3698, 0.35355338
      %v3773 = vmul.f32 %v3703, 0.35355338
      %v3774 = vmul.f32 %v3708, 0.35355338
      %v3775 = vmul.f32 %v3713, 0.35355338
      %v3776 = vmul.f32 %v3718, 0.35355338
      %v3777 = vmul.f32 %v3723, 0.35355338
      %v3778 = vmul.f32 %v3728, 0.35355338
      %v3779 = vmul.f32 %v3733, 0.35355338
      %v3780 = vmul.f32 %v3738, 0.35355338
      %v3781 = vmul.f32 %v3743, 0.35355338
      %v3782 = vmul.f32 %v3748, 0.35355338
      %v3783 = vmul.f32 %v3753, 0.35355338
      %v3784 = vmul.f32 %v3758, 0.35355338
      %v3785 = vmul.f32 %v3763, 0.35355338
      %v3786 = vmul.f32 %v3768, 0.35355338
      %v3787 = vadd.f32 %v3771, %v1264
      %v3788 = vadd.f32 %v3772, %v1264
      %v3789 = vadd.f32 %v3773, %v1264
      %v3790 = vadd.f32 %v3774, %v1264
      %v3791 = vadd.f32 %v3775, %v1264
      %v3792 = vadd.f32 %v3776, %v1264
      %v3793 = vadd.f32 %v3777, %v1264
      %v3794 = vadd.f32 %v3778, %v1264
      %v3795 = vadd.f32 %v3779, %v1264
      %v3796 = vadd.f32 %v3780, %v1264
      %v3797 = vadd.f32 %v3781, %v1264
      %v3798 = vadd.f32 %v3782, %v1264
      %v3799 = vadd.f32 %v3783, %v1264
      %v3800 = vadd.f32 %v3784, %v1264
      %v3801 = vadd.f32 %v3785, %v1264
      %v3802 = vadd.f32 %v3786, %v1264
      %3803 = vmax.xlane.f32.xlu0 %v3787
      %v3804 = vpop.xlane.xlu0 %3803
      %3805 = vmax.xlane.f32.xlu0 %v3788
      %v3806 = vpop.xlane.xlu0 %3805
      %3807 = vmax.xlane.f32.xlu0 %v3789
      %v3808 = vpop.xlane.xlu0 %3807
      %3809 = vmax.xlane.f32.xlu0 %v3790
      %v3810 = vpop.xlane.xlu0 %3809
      %3811 = vmax.xlane.f32.xlu0 %v3791
      %v3812 = vpop.xlane.xlu0 %3811
      %3813 = vmax.xlane.f32.xlu0 %v3792
      %v3814 = vpop.xlane.xlu0 %3813
      %3815 = vmax.xlane.f32.xlu0 %v3793
      %v3816 = vpop.xlane.xlu0 %3815
      %3817 = vmax.xlane.f32.xlu0 %v3794
      %v3818 = vpop.xlane.xlu0 %3817
      %3819 = vmax.xlane.f32.xlu0 %v3795
      %v3820 = vpop.xlane.xlu0 %3819
      %3821 = vmax.xlane.f32.xlu0 %v3796
      %v3822 = vpop.xlane.xlu0 %3821
      %3823 = vmax.xlane.f32.xlu0 %v3797
      %v3824 = vpop.xlane.xlu0 %3823
      %3825 = vmax.xlane.f32.xlu0 %v3798
      %v3826 = vpop.xlane.xlu0 %3825
      %3827 = vmax.xlane.f32.xlu0 %v3799
      %v3828 = vpop.xlane.xlu0 %3827
      %3829 = vmax.xlane.f32.xlu0 %v3800
      %v3830 = vpop.xlane.xlu0 %3829
      %3831 = vmax.xlane.f32.xlu0 %v3801
      %v3832 = vpop.xlane.xlu0 %3831
      %3833 = vmax.xlane.f32.xlu0 %v3802
      %v3834 = vpop.xlane.xlu0 %3833
      %v3835 = vsub.f32 %v3787, %v3804
      %v3836 = vsub.f32 %v3788, %v3806
      %v3837 = vsub.f32 %v3789, %v3808
      %v3838 = vsub.f32 %v3790, %v3810
      %v3839 = vsub.f32 %v3791, %v3812
      %v3840 = vsub.f32 %v3792, %v3814
      %v3841 = vsub.f32 %v3793, %v3816
      %v3842 = vsub.f32 %v3794, %v3818
      %v3843 = vsub.f32 %v3795, %v3820
      %v3844 = vsub.f32 %v3796, %v3822
      %v3845 = vsub.f32 %v3797, %v3824
      %v3846 = vsub.f32 %v3798, %v3826
      %v3847 = vsub.f32 %v3799, %v3828
      %v3848 = vsub.f32 %v3800, %v3830
      %v3849 = vsub.f32 %v3801, %v3832
      %v3850 = vsub.f32 %v3802, %v3834
      %v3851 = vmul.f32 %v3835, 1.442695
      %v3852 = vpow.pop %v3851
      %v3853 = vmul.f32 %v3836, 1.442695
      %v3854 = vpow.pop %v3853
      %v3855 = vmul.f32 %v3837, 1.442695
      %v3856 = vpow.pop %v3855
      %v3857 = vmul.f32 %v3838, 1.442695
      %v3858 = vpow.pop %v3857
      %v3859 = vmul.f32 %v3839, 1.442695
      %v3860 = vpow.pop %v3859
      %v3861 = vmul.f32 %v3840, 1.442695
      %v3862 = vpow.pop %v3861
      %v3863 = vmul.f32 %v3841, 1.442695
      %v3864 = vpow.pop %v3863
      %v3865 = vmul.f32 %v3842, 1.442695
      %v3866 = vpow.pop %v3865
      %v3867 = vmul.f32 %v3843, 1.442695
      %v3868 = vpow.pop %v3867
      %v3869 = vmul.f32 %v3844, 1.442695
      %v3870 = vpow.pop %v3869
      %v3871 = vmul.f32 %v3845, 1.442695
      %v3872 = vpow.pop %v3871
      %v3873 = vmul.f32 %v3846, 1.442695
      %v3874 = vpow.pop %v3873
      %v3875 = vmul.f32 %v3847, 1.442695
      %v3876 = vpow.pop %v3875
      %v3877 = vmul.f32 %v3848, 1.442695
      %v3878 = vpow.pop %v3877
      %v3879 = vmul.f32 %v3849, 1.442695
      %v3880 = vpow.pop %v3879
      %v3881 = vmul.f32 %v3850, 1.442695
      %v3882 = vpow.pop %v3881
      %3883 = vadd.xlane.f32.xlu0 %v3852
      %v3884 = vpop.xlane.xlu0 %3883
      %3885 = vadd.xlane.f32.xlu0 %v3854
      %v3886 = vpop.xlane.xlu0 %3885
      %3887 = vadd.xlane.f32.xlu0 %v3856
      %v3888 = vpop.xlane.xlu0 %3887
      %3889 = vadd.xlane.f32.xlu0 %v3858
      %v3890 = vpop.xlane.xlu0 %3889
      %3891 = vadd.xlane.f32.xlu0 %v3860
      %v3892 = vpop.xlane.xlu0 %3891
      %3893 = vadd.xlane.f32.xlu0 %v3862
      %v3894 = vpop.xlane.xlu0 %3893
      %3895 = vadd.xlane.f32.xlu0 %v3864
      %v3896 = vpop.xlane.xlu0 %3895
      %3897 = vadd.xlane.f32.xlu0 %v3866
      %v3898 = vpop.xlane.xlu0 %3897
      %3899 = vadd.xlane.f32.xlu0 %v3868
      %v3900 = vpop.xlane.xlu0 %3899
      %3901 = vadd.xlane.f32.xlu0 %v3870
      %v3902 = vpop.xlane.xlu0 %3901
      %3903 = vadd.xlane.f32.xlu0 %v3872
      %v3904 = vpop.xlane.xlu0 %3903
      %3905 = vadd.xlane.f32.xlu0 %v3874
      %v3906 = vpop.xlane.xlu0 %3905
      %3907 = vadd.xlane.f32.xlu0 %v3876
      %v3908 = vpop.xlane.xlu0 %3907
      %3909 = vadd.xlane.f32.xlu0 %v3878
      %v3910 = vpop.xlane.xlu0 %3909
      %3911 = vadd.xlane.f32.xlu0 %v3880
      %v3912 = vpop.xlane.xlu0 %3911
      %3913 = vadd.xlane.f32.xlu0 %v3882
      %v3914 = vpop.xlane.xlu0 %3913
      %v3915 = vrcp.pop %v3884
      %v3916 = vrcp.pop %v3886
      %v3917 = vrcp.pop %v3888
      %v3918 = vrcp.pop %v3890
      %v3919 = vrcp.pop %v3892
      %v3920 = vrcp.pop %v3894
      %v3921 = vrcp.pop %v3896
      %v3922 = vrcp.pop %v3898
      %v3923 = vrcp.pop %v3900
      %v3924 = vrcp.pop %v3902
      %v3925 = vrcp.pop %v3904
      %v3926 = vrcp.pop %v3906
      %v3927 = vrcp.pop %v3908
      %v3928 = vrcp.pop %v3910
      %v3929 = vrcp.pop %v3912
      %v3930 = vrcp.pop %v3914
      %v3931 = vmul.f32 %v3852, %v3915
      %v3932 = vmul.f32 %v3854, %v3916
      %v3933 = vmul.f32 %v3856, %v3917
      %v3934 = vmul.f32 %v3858, %v3918
      %v3935 = vmul.f32 %v3860, %v3919
      %v3936 = vmul.f32 %v3862, %v3920
      %v3937 = vmul.f32 %v3864, %v3921
      %v3938 = vmul.f32 %v3866, %v3922
      %v3939 = vmul.f32 %v3868, %v3923
      %v3940 = vmul.f32 %v3870, %v3924
      %v3941 = vmul.f32 %v3872, %v3925
      %v3942 = vmul.f32 %v3874, %v3926
      %v3943 = vmul.f32 %v3876, %v3927
      %v3944 = vmul.f32 %v3878, %v3928
      %v3945 = vmul.f32 %v3880, %v3929
      %v3946 = vmul.f32 %v3882, %v3930
      %3947 = vrot.lane.b32.xlu0 %v908, 40
      %v3948 = vpop.permute.xlu0 %3947
      %3949 = vrot.lane.b32.xlu0 %v913, 40
      %v3950 = vpop.permute.xlu0 %3949
      %3951 = vrot.lane.b32.xlu0 %v918, 40
      %v3952 = vpop.permute.xlu0 %3951
      %3953 = vrot.lane.b32.xlu0 %v923, 40
      %v3954 = vpop.permute.xlu0 %3953
      %3955 = vrot.lane.b32.xlu0 %v928, 40
      %v3956 = vpop.permute.xlu0 %3955
      %3957 = vrot.lane.b32.xlu0 %v933, 40
      %v3958 = vpop.permute.xlu0 %3957
      %3959 = vrot.lane.b32.xlu0 %v938, 40
      %v3960 = vpop.permute.xlu0 %3959
      %3961 = vrot.lane.b32.xlu0 %v943, 40
      %v3962 = vpop.permute.xlu0 %3961
      %3963 = vrot.lane.b32.xlu0 %v948, 40
      %v3964 = vpop.permute.xlu0 %3963
      %3965 = vrot.lane.b32.xlu0 %v953, 40
      %v3966 = vpop.permute.xlu0 %3965
      %3967 = vrot.lane.b32.xlu0 %v958, 40
      %v3968 = vpop.permute.xlu0 %3967
      %3969 = vrot.lane.b32.xlu0 %v963, 40
      %v3970 = vpop.permute.xlu0 %3969
      %3971 = vrot.lane.b32.xlu0 %v968, 40
      %v3972 = vpop.permute.xlu0 %3971
      %3973 = vrot.lane.b32.xlu0 %v973, 40
      %v3974 = vpop.permute.xlu0 %3973
      %3975 = vrot.lane.b32.xlu0 %v978, 40
      %v3976 = vpop.permute.xlu0 %3975
      %3977 = vrot.lane.b32.xlu0 %v983, 40
      %v3978 = vpop.permute.xlu0 %3977
      %3995 = vmatprep.subr.mxu0 0.0
      %3996 = vmatpush1.msra.mxu0 %v3948
      %3997 = vmatprep.subr.mxu0 0.0
      %3998 = vmatpush1.msra.mxu0 %v3950
      %3999 = vmatprep.subr.mxu0 0.0
      %4000 = vmatpush1.msra.mxu0 %v3952
      %4001 = vmatprep.subr.mxu0 0.0
      %4002 = vmatpush1.msra.mxu0 %v3954
      %4003 = vmatprep.subr.mxu0 0.0
      %4004 = vmatpush1.msra.mxu0 %v3956
      %4005 = vmatprep.subr.mxu0 0.0
      %4006 = vmatpush1.msra.mxu0 %v3958
      %4007 = vmatprep.subr.mxu0 0.0
      %4008 = vmatpush1.msra.mxu0 %v3960
      %4009 = vmatprep.subr.mxu0 0.0
      %4010 = vmatpush1.msra.mxu0 %v3962
      %4011 = vmatprep.subr.mxu0 0.0
      %4012 = vmatpush1.msra.mxu0 %v3964
      %4013 = vmatprep.subr.mxu0 0.0
      %4014 = vmatpush1.msra.mxu0 %v3966
      %4015 = vmatprep.subr.mxu0 0.0
      %4016 = vmatpush1.msra.mxu0 %v3968
      %4017 = vmatprep.subr.mxu0 0.0
      %4018 = vmatpush1.msra.mxu0 %v3970
      %4019 = vmatprep.subr.mxu0 0.0
      %4020 = vmatpush1.msra.mxu0 %v3972
      %4021 = vmatprep.subr.mxu0 0.0
      %4022 = vmatpush1.msra.mxu0 %v3974
      %4023 = vmatprep.subr.mxu0 0.0
      %4024 = vmatpush1.msra.mxu0 %v3976
      %4025 = vmatprep.subr.mxu0 0.0
      %4026 = vmatpush1.msra.mxu0 %v3978
      %4027 = vmatprep.subr.mxu0 0.0
      %4028 = vmatpush1.msra.mxu0 0.0
      %4029 = vmatprep.subr.mxu0 0.0
      %4030 = vmatpush1.msra.mxu0 0.0
      %4031 = vmatprep.subr.mxu0 0.0
      %4032 = vmatpush1.msra.mxu0 0.0
      %4033 = vmatprep.subr.mxu0 0.0
      %4034 = vmatpush1.msra.mxu0 0.0
      %4035 = vmatprep.subr.mxu0 0.0
      %4036 = vmatpush1.msra.mxu0 0.0
      %4037 = vmatprep.subr.mxu0 0.0
      %4038 = vmatpush1.msra.mxu0 0.0
      %4039 = vmatprep.subr.mxu0 0.0
      %4040 = vmatpush1.msra.mxu0 0.0
      %4041 = vmatprep.subr.mxu0 0.0
      %4042 = vmatpush1.msra.mxu0 0.0
      %4043 = vmatprep.subr.mxu0 0.0
      %4044 = vmatpush1.msra.mxu0 0.0
      %4045 = vmatprep.subr.mxu0 0.0
      %4046 = vmatpush1.msra.mxu0 0.0
      %4047 = vmatprep.subr.mxu0 0.0
      %4048 = vmatpush1.msra.mxu0 0.0
      %4049 = vmatprep.subr.mxu0 0.0
      %4050 = vmatpush1.msra.mxu0 0.0
      %4051 = vmatprep.subr.mxu0 0.0
      %4052 = vmatpush1.msra.mxu0 0.0
      %4053 = vmatprep.subr.mxu0 0.0
      %4054 = vmatpush1.msra.mxu0 0.0
      %4055 = vmatprep.subr.mxu0 0.0
      %4056 = vmatpush1.msra.mxu0 0.0
      %4057 = vmatprep.subr.mxu0 0.0
      %4058 = vmatpush1.msra.mxu0 0.0
      %4059 = vmatprep.mubr.f32.mxu0 0.0
      %4060 = vmatmul.mubr.f32.gmra.mrb[0].mxu0 %v3931
      %v4061 = vpop.f32.mrb[0].mxu0
      %v4062 = vadd.f32 0.0, %v4061
      %v4063 = vpop.f32.mrb[0].mxu0
      %4064 = vmatprep.mubr.f32.mxu0 0.0
      %4065 = vmatmul.mubr.f32.gmra.mrb[0].mxu0 %v3932
      %v4066 = vpop.f32.mrb[0].mxu0
      %v4067 = vadd.f32 0.0, %v4066
      %v4068 = vpop.f32.mrb[0].mxu0
      %4069 = vmatprep.mubr.f32.mxu0 0.0
      %4070 = vmatmul.mubr.f32.gmra.mrb[0].mxu0 %v3933
      %v4071 = vpop.f32.mrb[0].mxu0
      %v4072 = vadd.f32 0.0, %v4071
      %v4073 = vpop.f32.mrb[0].mxu0
      %4074 = vmatprep.mubr.f32.mxu0 0.0
      %4075 = vmatmul.mubr.f32.gmra.mrb[0].mxu0 %v3934
      %v4076 = vpop.f32.mrb[0].mxu0
      %v4077 = vadd.f32 0.0, %v4076
      %v4078 = vpop.f32.mrb[0].mxu0
      %4079 = vmatprep.mubr.f32.mxu0 0.0
      %4080 = vmatmul.mubr.f32.gmra.mrb[0].mxu0 %v3935
      %v4081 = vpop.f32.mrb[0].mxu0
      %v4082 = vadd.f32 0.0, %v4081
      %v4083 = vpop.f32.mrb[0].mxu0
      %4084 = vmatprep.mubr.f32.mxu0 0.0
      %4085 = vmatmul.mubr.f32.gmra.mrb[0].mxu0 %v3936
      %v4086 = vpop.f32.mrb[0].mxu0
      %v4087 = vadd.f32 0.0, %v4086
      %v4088 = vpop.f32.mrb[0].mxu0
      %4089 = vmatprep.mubr.f32.mxu0 0.0
      %4090 = vmatmul.mubr.f32.gmra.mrb[0].mxu0 %v3937
      %v4091 = vpop.f32.mrb[0].mxu0
      %v4092 = vadd.f32 0.0, %v4091
      %v4093 = vpop.f32.mrb[0].mxu0
      %4094 = vmatprep.mubr.f32.mxu0 0.0
      %4095 = vmatmul.mubr.f32.gmra.mrb[0].mxu0 %v3938
      %v4096 = vpop.f32.mrb[0].mxu0
      %v4097 = vadd.f32 0.0, %v4096
      %v4098 = vpop.f32.mrb[0].mxu0
      %4099 = vmatprep.mubr.f32.mxu0 0.0
      %4100 = vmatmul.mubr.f32.gmra.mrb[0].mxu0 %v3939
      %v4101 = vpop.f32.mrb[0].mxu0
      %v4102 = vadd.f32 0.0, %v4101
      %v4103 = vpop.f32.mrb[0].mxu0
      %4104 = vmatprep.mubr.f32.mxu0 0.0
      %4105 = vmatmul.mubr.f32.gmra.mrb[0].mxu0 %v3940
      %v4106 = vpop.f32.mrb[0].mxu0
      %v4107 = vadd.f32 0.0, %v4106
      %v4108 = vpop.f32.mrb[0].mxu0
      %4109 = vmatprep.mubr.f32.mxu0 0.0
      %4110 = vmatmul.mubr.f32.gmra.mrb[0].mxu0 %v3941
      %v4111 = vpop.f32.mrb[0].mxu0
      %v4112 = vadd.f32 0.0, %v4111
      %v4113 = vpop.f32.mrb[0].mxu0
      %4114 = vmatprep.mubr.f32.mxu0 0.0
      %4115 = vmatmul.mubr.f32.gmra.mrb[0].mxu0 %v3942
      %v4116 = vpop.f32.mrb[0].mxu0
      %v4117 = vadd.f32 0.0, %v4116
      %v4118 = vpop.f32.mrb[0].mxu0
      %4119 = vmatprep.mubr.f32.mxu0 0.0
      %4120 = vmatmul.mubr.f32.gmra.mrb[0].mxu0 %v3943
      %v4121 = vpop.f32.mrb[0].mxu0
      %v4122 = vadd.f32 0.0, %v4121
      %v4123 = vpop.f32.mrb[0].mxu0
      %4124 = vmatprep.mubr.f32.mxu0 0.0
      %4125 = vmatmul.mubr.f32.gmra.mrb[0].mxu0 %v3944
      %v4126 = vpop.f32.mrb[0].mxu0
      %v4127 = vadd.f32 0.0, %v4126
      %v4128 = vpop.f32.mrb[0].mxu0
      %4129 = vmatprep.mubr.f32.mxu0 0.0
      %4130 = vmatmul.mubr.f32.gmra.mrb[0].mxu0 %v3945
      %v4131 = vpop.f32.mrb[0].mxu0
      %v4132 = vadd.f32 0.0, %v4131
      %v4133 = vpop.f32.mrb[0].mxu0
      %4134 = vmatprep.mubr.f32.mxu0 0.0
      %4135 = vmatmul.mubr.f32.gmra.mrb[0].mxu0 %v3946
      %v4136 = vpop.f32.mrb[0].mxu0
      %v4137 = vadd.f32 0.0, %v4136
      %v4138 = vpop.f32.mrb[0].mxu0
      %4139 = vdwg.mxu0
      %v4141 = vsel %vm1034, %v4062, 0
      %v4144 = vsel %vm1034, %v4067, 0
      %v4147 = vsel %vm1034, %v4072, 0
      %v4150 = vsel %vm1034, %v4077, 0
      %v4153 = vsel %vm1034, %v4082, 0
      %v4156 = vsel %vm1034, %v4087, 0
      %v4159 = vsel %vm1034, %v4092, 0
      %v4162 = vsel %vm1034, %v4097, 0
      %v4165 = vsel %vm1034, %v4102, 0
      %v4168 = vsel %vm1034, %v4107, 0
      %v4171 = vsel %vm1034, %v4112, 0
      %v4174 = vsel %vm1034, %v4117, 0
      %v4177 = vsel %vm1034, %v4122, 0
      %v4180 = vsel %vm1034, %v4127, 0
      %v4183 = vsel %vm1034, %v4132, 0
      %v4186 = vsel %vm1034, %v4137, 0
      %4188 = vmatprep.subr.mxu0 0.0
      %4189 = vmatpush1.msra.mxu0 %v766
      %4190 = vmatprep.subr.mxu0 0.0
      %4191 = vmatpush1.msra.mxu0 0.0
      %4192 = vmatprep.subr.mxu0 0.0
      %4193 = vmatpush1.msra.mxu0 0.0
      %4194 = vmatprep.subr.mxu0 0.0
      %4195 = vmatpush1.msra.mxu0 0.0
      %4196 = vmatprep.subr.mxu0 0.0
      %4197 = vmatpush1.msra.mxu0 0.0
      %4198 = vmatprep.subr.mxu0 0.0
      %4199 = vmatpush1.msra.mxu0 0.0
      %4200 = vmatprep.subr.mxu0 0.0
      %4201 = vmatpush1.msra.mxu0 0.0
      %4202 = vmatprep.subr.mxu0 0.0
      %4203 = vmatpush1.msra.mxu0 0.0
      %4204 = vmatprep.subr.mxu0 0.0
      %4205 = vmatpush1.msra.mxu0 0.0
      %4206 = vmatprep.subr.mxu0 0.0
      %4207 = vmatpush1.msra.mxu0 0.0
      %4208 = vmatprep.subr.mxu0 0.0
      %4209 = vmatpush1.msra.mxu0 0.0
      %4210 = vmatprep.subr.mxu0 0.0
      %4211 = vmatpush1.msra.mxu0 0.0
      %4212 = vmatprep.subr.mxu0 0.0
      %4213 = vmatpush1.msra.mxu0 0.0
      %4214 = vmatprep.subr.mxu0 0.0
      %4215 = vmatpush1.msra.mxu0 0.0
      %4216 = vmatprep.subr.mxu0 0.0
      %4217 = vmatpush1.msra.mxu0 0.0
      %4218 = vmatprep.subr.mxu0 0.0
      %4219 = vmatpush1.msra.mxu0 0.0
      %4220 = vmatprep.subr.mxu0 0.0
      %4221 = vmatpush1.msra.mxu0 0.0
      %4222 = vmatprep.subr.mxu0 0.0
      %4223 = vmatpush1.msra.mxu0 0.0
      %4224 = vmatprep.subr.mxu0 0.0
      %4225 = vmatpush1.msra.mxu0 0.0
      %4226 = vmatprep.subr.mxu0 0.0
      %4227 = vmatpush1.msra.mxu0 0.0
      %4228 = vmatprep.subr.mxu0 0.0
      %4229 = vmatpush1.msra.mxu0 0.0
      %4230 = vmatprep.subr.mxu0 0.0
      %4231 = vmatpush1.msra.mxu0 0.0
      %4232 = vmatprep.subr.mxu0 0.0
      %4233 = vmatpush1.msra.mxu0 0.0
      %4234 = vmatprep.subr.mxu0 0.0
      %4235 = vmatpush1.msra.mxu0 0.0
      %4236 = vmatprep.subr.mxu0 0.0
      %4237 = vmatpush1.msra.mxu0 0.0
      %4238 = vmatprep.subr.mxu0 0.0
      %4239 = vmatpush1.msra.mxu0 0.0
      %4240 = vmatprep.subr.mxu0 0.0
      %4241 = vmatpush1.msra.mxu0 0.0
      %4242 = vmatprep.subr.mxu0 0.0
      %4243 = vmatpush1.msra.mxu0 0.0
      %4244 = vmatprep.subr.mxu0 0.0
      %4245 = vmatpush1.msra.mxu0 0.0
      %4246 = vmatprep.subr.mxu0 0.0
      %4247 = vmatpush1.msra.mxu0 0.0
      %4248 = vmatprep.subr.mxu0 0.0
      %4249 = vmatpush1.msra.mxu0 0.0
      %4250 = vmatprep.subr.mxu0 0.0
      %4251 = vmatpush1.msra.mxu0 0.0
      %4252 = vmatprep.mubr.f32.mxu0 0.0
      %4253 = vmatmul.mubr.f32.gmra.mrb[0].mxu0 %v4141
      %v4254 = vpop.f32.mrb[0].mxu0
      %v4255 = vadd.f32 0.0, %v4254
      %v4256 = vpop.f32.mrb[0].mxu0
      %4257 = vmatprep.mubr.f32.mxu0 0.0
      %4258 = vmatmul.mubr.f32.gmra.mrb[0].mxu0 %v4144
      %v4259 = vpop.f32.mrb[0].mxu0
      %v4260 = vadd.f32 0.0, %v4259
      %v4261 = vpop.f32.mrb[0].mxu0
      %4262 = vmatprep.mubr.f32.mxu0 0.0
      %4263 = vmatmul.mubr.f32.gmra.mrb[0].mxu0 %v4147
      %v4264 = vpop.f32.mrb[0].mxu0
      %v4265 = vadd.f32 0.0, %v4264
      %v4266 = vpop.f32.mrb[0].mxu0
      %4267 = vmatprep.mubr.f32.mxu0 0.0
      %4268 = vmatmul.mubr.f32.gmra.mrb[0].mxu0 %v4150
      %v4269 = vpop.f32.mrb[0].mxu0
      %v4270 = vadd.f32 0.0, %v4269
      %v4271 = vpop.f32.mrb[0].mxu0
      %4272 = vmatprep.mubr.f32.mxu0 0.0
      %4273 = vmatmul.mubr.f32.gmra.mrb[0].mxu0 %v4153
      %v4274 = vpop.f32.mrb[0].mxu0
      %v4275 = vadd.f32 0.0, %v4274
      %v4276 = vpop.f32.mrb[0].mxu0
      %4277 = vmatprep.mubr.f32.mxu0 0.0
      %4278 = vmatmul.mubr.f32.gmra.mrb[0].mxu0 %v4156
      %v4279 = vpop.f32.mrb[0].mxu0
      %v4280 = vadd.f32 0.0, %v4279
      %v4281 = vpop.f32.mrb[0].mxu0
      %4282 = vmatprep.mubr.f32.mxu0 0.0
      %4283 = vmatmul.mubr.f32.gmra.mrb[0].mxu0 %v4159
      %v4284 = vpop.f32.mrb[0].mxu0
      %v4285 = vadd.f32 0.0, %v4284
      %v4286 = vpop.f32.mrb[0].mxu0
      %4287 = vmatprep.mubr.f32.mxu0 0.0
      %4288 = vmatmul.mubr.f32.gmra.mrb[0].mxu0 %v4162
      %v4289 = vpop.f32.mrb[0].mxu0
      %v4290 = vadd.f32 0.0, %v4289
      %v4291 = vpop.f32.mrb[0].mxu0
      %4292 = vmatprep.mubr.f32.mxu0 0.0
      %4293 = vmatmul.mubr.f32.gmra.mrb[0].mxu0 %v4165
      %v4294 = vpop.f32.mrb[0].mxu0
      %v4295 = vadd.f32 0.0, %v4294
      %v4296 = vpop.f32.mrb[0].mxu0
      %4297 = vmatprep.mubr.f32.mxu0 0.0
      %4298 = vmatmul.mubr.f32.gmra.mrb[0].mxu0 %v4168
      %v4299 = vpop.f32.mrb[0].mxu0
      %v4300 = vadd.f32 0.0, %v4299
      %v4301 = vpop.f32.mrb[0].mxu0
      %4302 = vmatprep.mubr.f32.mxu0 0.0
      %4303 = vmatmul.mubr.f32.gmra.mrb[0].mxu0 %v4171
      %v4304 = vpop.f32.mrb[0].mxu0
      %v4305 = vadd.f32 0.0, %v4304
      %v4306 = vpop.f32.mrb[0].mxu0
      %4307 = vmatprep.mubr.f32.mxu0 0.0
      %4308 = vmatmul.mubr.f32.gmra.mrb[0].mxu0 %v4174
      %v4309 = vpop.f32.mrb[0].mxu0
      %v4310 = vadd.f32 0.0, %v4309
      %v4311 = vpop.f32.mrb[0].mxu0
      %4312 = vmatprep.mubr.f32.mxu0 0.0
      %4313 = vmatmul.mubr.f32.gmra.mrb[0].mxu0 %v4177
      %v4314 = vpop.f32.mrb[0].mxu0
      %v4315 = vadd.f32 0.0, %v4314
      %v4316 = vpop.f32.mrb[0].mxu0
      %4317 = vmatprep.mubr.f32.mxu0 0.0
      %4318 = vmatmul.mubr.f32.gmra.mrb[0].mxu0 %v4180
      %v4319 = vpop.f32.mrb[0].mxu0
      %v4320 = vadd.f32 0.0, %v4319
      %v4321 = vpop.f32.mrb[0].mxu0
      %4322 = vmatprep.mubr.f32.mxu0 0.0
      %4323 = vmatmul.mubr.f32.gmra.mrb[0].mxu0 %v4183
      %v4324 = vpop.f32.mrb[0].mxu0
      %v4325 = vadd.f32 0.0, %v4324
      %v4326 = vpop.f32.mrb[0].mxu0
      %4327 = vmatprep.mubr.f32.mxu0 0.0
      %4328 = vmatmul.mubr.f32.gmra.mrb[0].mxu0 %v4186
      %v4329 = vpop.f32.mrb[0].mxu0
      %v4330 = vadd.f32 0.0, %v4329
      %v4331 = vpop.f32.mrb[0].mxu0
      %4332 = vdwg.mxu0
      %v4333 = vadd.f32 %v3482, %v4255
      %v4334 = vadd.f32 %v3483, %v4260
      %v4335 = vadd.f32 %v3484, %v4265
      %v4336 = vadd.f32 %v3485, %v4270
      %v4337 = vadd.f32 %v3486, %v4275
      %v4338 = vadd.f32 %v3487, %v4280
      %v4339 = vadd.f32 %v3488, %v4285
      %v4340 = vadd.f32 %v3489, %v4290
      %v4341 = vadd.f32 %v3490, %v4295
      %v4342 = vadd.f32 %v3491, %v4300
      %v4343 = vadd.f32 %v3492, %v4305
      %v4344 = vadd.f32 %v3493, %v4310
      %v4345 = vadd.f32 %v3494, %v4315
      %v4346 = vadd.f32 %v3495, %v4320
      %v4347 = vadd.f32 %v3496, %v4325
      %v4348 = vadd.f32 %v3497, %v4330
      %v4350 = vlaneseq
      %v4351 = vshrl.u32 %v4350, 7
      %v4352 = vsub.s32 0, %v4351
      %v4353 = vrot.slane %v767, %v4352
      %v4355 = vadd.f32 %v4333, %v4353
      %v4356 = vadd.f32 %v4334, %v4353
      %v4357 = vadd.f32 %v4335, %v4353
      %v4358 = vadd.f32 %v4336, %v4353
      %v4359 = vadd.f32 %v4337, %v4353
      %v4360 = vadd.f32 %v4338, %v4353
      %v4361 = vadd.f32 %v4339, %v4353
      %v4362 = vadd.f32 %v4340, %v4353
      %v4363 = vadd.f32 %v4341, %v4353
      %v4364 = vadd.f32 %v4342, %v4353
      %v4365 = vadd.f32 %v4343, %v4353
      %v4366 = vadd.f32 %v4344, %v4353
      %v4367 = vadd.f32 %v4345, %v4353
      %v4368 = vadd.f32 %v4346, %v4353
      %v4369 = vadd.f32 %v4347, %v4353
      %v4370 = vadd.f32 %v4348, %v4353
      %v4371 = vadd.f32 %v741, %v4355
      %v4372 = vadd.f32 %v742, %v4356
      %v4373 = vadd.f32 %v743, %v4357
      %v4374 = vadd.f32 %v744, %v4358
      %v4375 = vadd.f32 %v745, %v4359
      %v4376 = vadd.f32 %v746, %v4360
      %v4377 = vadd.f32 %v747, %v4361
      %v4378 = vadd.f32 %v748, %v4362
      %v4379 = vadd.f32 %v749, %v4363
      %v4380 = vadd.f32 %v750, %v4364
      %v4381 = vadd.f32 %v751, %v4365
      %v4382 = vadd.f32 %v752, %v4366
      %v4383 = vadd.f32 %v753, %v4367
      %v4384 = vadd.f32 %v754, %v4368
      %v4385 = vadd.f32 %v755, %v4369
      %v4386 = vadd.f32 %v756, %v4370
      %v4387 = vsel %vm792, %v4371, 0.0
      %4388 = vadd.xlane.f32.xlu0 %v4387
      %v4389 = vpop.xlane.xlu0 %4388
      %v4390 = vsel %vm792, %v4372, 0.0
      %4391 = vadd.xlane.f32.xlu0 %v4390
      %v4392 = vpop.xlane.xlu0 %4391
      %v4393 = vsel %vm792, %v4373, 0.0
      %4394 = vadd.xlane.f32.xlu0 %v4393
      %v4395 = vpop.xlane.xlu0 %4394
      %v4396 = vsel %vm792, %v4374, 0.0
      %4397 = vadd.xlane.f32.xlu0 %v4396
      %v4398 = vpop.xlane.xlu0 %4397
      %v4399 = vsel %vm792, %v4375, 0.0
      %4400 = vadd.xlane.f32.xlu0 %v4399
      %v4401 = vpop.xlane.xlu0 %4400
      %v4402 = vsel %vm792, %v4376, 0.0
      %4403 = vadd.xlane.f32.xlu0 %v4402
      %v4404 = vpop.xlane.xlu0 %4403
      %v4405 = vsel %vm792, %v4377, 0.0
      %4406 = vadd.xlane.f32.xlu0 %v4405
      %v4407 = vpop.xlane.xlu0 %4406
      %v4408 = vsel %vm792, %v4378, 0.0
      %4409 = vadd.xlane.f32.xlu0 %v4408
      %v4410 = vpop.xlane.xlu0 %4409
      %v4411 = vsel %vm792, %v4379, 0.0
      %4412 = vadd.xlane.f32.xlu0 %v4411
      %v4413 = vpop.xlane.xlu0 %4412
      %v4414 = vsel %vm792, %v4380, 0.0
      %4415 = vadd.xlane.f32.xlu0 %v4414
      %v4416 = vpop.xlane.xlu0 %4415
      %v4417 = vsel %vm792, %v4381, 0.0
      %4418 = vadd.xlane.f32.xlu0 %v4417
      %v4419 = vpop.xlane.xlu0 %4418
      %v4420 = vsel %vm792, %v4382, 0.0
      %4421 = vadd.xlane.f32.xlu0 %v4420
      %v4422 = vpop.xlane.xlu0 %4421
      %v4423 = vsel %vm792, %v4383, 0.0
      %4424 = vadd.xlane.f32.xlu0 %v4423
      %v4425 = vpop.xlane.xlu0 %4424
      %v4426 = vsel %vm792, %v4384, 0.0
      %4427 = vadd.xlane.f32.xlu0 %v4426
      %v4428 = vpop.xlane.xlu0 %4427
      %v4429 = vsel %vm792, %v4385, 0.0
      %4430 = vadd.xlane.f32.xlu0 %v4429
      %v4431 = vpop.xlane.xlu0 %4430
      %v4432 = vsel %vm792, %v4386, 0.0
      %4433 = vadd.xlane.f32.xlu0 %v4432
      %v4434 = vpop.xlane.xlu0 %4433
      %v4435 = vrcp.pop 32.0
      %v4436 = vmul.f32 %v4389, %v4435
      %v4437 = vmul.f32 %v4392, %v4435
      %v4438 = vmul.f32 %v4395, %v4435
      %v4439 = vmul.f32 %v4398, %v4435
      %v4440 = vmul.f32 %v4401, %v4435
      %v4441 = vmul.f32 %v4404, %v4435
      %v4442 = vmul.f32 %v4407, %v4435
      %v4443 = vmul.f32 %v4410, %v4435
      %v4444 = vmul.f32 %v4413, %v4435
      %v4445 = vmul.f32 %v4416, %v4435
      %v4446 = vmul.f32 %v4419, %v4435
      %v4447 = vmul.f32 %v4422, %v4435
      %v4448 = vmul.f32 %v4425, %v4435
      %v4449 = vmul.f32 %v4428, %v4435
      %v4450 = vmul.f32 %v4431, %v4435
      %v4451 = vmul.f32 %v4434, %v4435
      %v4452 = vsub.f32 %v4371, %v4436
      %v4453 = vsub.f32 %v4372, %v4437
      %v4454 = vsub.f32 %v4373, %v4438
      %v4455 = vsub.f32 %v4374, %v4439
      %v4456 = vsub.f32 %v4375, %v4440
      %v4457 = vsub.f32 %v4376, %v4441
      %v4458 = vsub.f32 %v4377, %v4442
      %v4459 = vsub.f32 %v4378, %v4443
      %v4460 = vsub.f32 %v4379, %v4444
      %v4461 = vsub.f32 %v4380, %v4445
      %v4462 = vsub.f32 %v4381, %v4446
      %v4463 = vsub.f32 %v4382, %v4447
      %v4464 = vsub.f32 %v4383, %v4448
      %v4465 = vsub.f32 %v4384, %v4449
      %v4466 = vsub.f32 %v4385, %v4450
      %v4467 = vsub.f32 %v4386, %v4451
      %v4468 = vmul.f32 %v4452, %v4452
      %v4469 = vmul.f32 %v4453, %v4453
      %v4470 = vmul.f32 %v4454, %v4454
      %v4471 = vmul.f32 %v4455, %v4455
      %v4472 = vmul.f32 %v4456, %v4456
      %v4473 = vmul.f32 %v4457, %v4457
      %v4474 = vmul.f32 %v4458, %v4458
      %v4475 = vmul.f32 %v4459, %v4459
      %v4476 = vmul.f32 %v4460, %v4460
      %v4477 = vmul.f32 %v4461, %v4461
      %v4478 = vmul.f32 %v4462, %v4462
      %v4479 = vmul.f32 %v4463, %v4463
      %v4480 = vmul.f32 %v4464, %v4464
      %v4481 = vmul.f32 %v4465, %v4465
      %v4482 = vmul.f32 %v4466, %v4466
      %v4483 = vmul.f32 %v4467, %v4467
      %v4484 = vsel %vm792, %v4468, 0.0
      %4485 = vadd.xlane.f32.xlu0 %v4484
      %v4486 = vpop.xlane.xlu0 %4485
      %v4487 = vsel %vm792, %v4469, 0.0
      %4488 = vadd.xlane.f32.xlu0 %v4487
      %v4489 = vpop.xlane.xlu0 %4488
      %v4490 = vsel %vm792, %v4470, 0.0
      %4491 = vadd.xlane.f32.xlu0 %v4490
      %v4492 = vpop.xlane.xlu0 %4491
      %v4493 = vsel %vm792, %v4471, 0.0
      %4494 = vadd.xlane.f32.xlu0 %v4493
      %v4495 = vpop.xlane.xlu0 %4494
      %v4496 = vsel %vm792, %v4472, 0.0
      %4497 = vadd.xlane.f32.xlu0 %v4496
      %v4498 = vpop.xlane.xlu0 %4497
      %v4499 = vsel %vm792, %v4473, 0.0
      %4500 = vadd.xlane.f32.xlu0 %v4499
      %v4501 = vpop.xlane.xlu0 %4500
      %v4502 = vsel %vm792, %v4474, 0.0
      %4503 = vadd.xlane.f32.xlu0 %v4502
      %v4504 = vpop.xlane.xlu0 %4503
      %v4505 = vsel %vm792, %v4475, 0.0
      %4506 = vadd.xlane.f32.xlu0 %v4505
      %v4507 = vpop.xlane.xlu0 %4506
      %v4508 = vsel %vm792, %v4476, 0.0
      %4509 = vadd.xlane.f32.xlu0 %v4508
      %v4510 = vpop.xlane.xlu0 %4509
      %v4511 = vsel %vm792, %v4477, 0.0
      %4512 = vadd.xlane.f32.xlu0 %v4511
      %v4513 = vpop.xlane.xlu0 %4512
      %v4514 = vsel %vm792, %v4478, 0.0
      %4515 = vadd.xlane.f32.xlu0 %v4514
      %v4516 = vpop.xlane.xlu0 %4515
      %v4517 = vsel %vm792, %v4479, 0.0
      %4518 = vadd.xlane.f32.xlu0 %v4517
      %v4519 = vpop.xlane.xlu0 %4518
      %v4520 = vsel %vm792, %v4480, 0.0
      %4521 = vadd.xlane.f32.xlu0 %v4520
      %v4522 = vpop.xlane.xlu0 %4521
      %v4523 = vsel %vm792, %v4481, 0.0
      %4524 = vadd.xlane.f32.xlu0 %v4523
      %v4525 = vpop.xlane.xlu0 %4524
      %v4526 = vsel %vm792, %v4482, 0.0
      %4527 = vadd.xlane.f32.xlu0 %v4526
      %v4528 = vpop.xlane.xlu0 %4527
      %v4529 = vsel %vm792, %v4483, 0.0
      %4530 = vadd.xlane.f32.xlu0 %v4529
      %v4531 = vpop.xlane.xlu0 %4530
      %v4532 = vmul.f32 %v4486, %v4435
      %v4533 = vmul.f32 %v4489, %v4435
      %v4534 = vmul.f32 %v4492, %v4435
      %v4535 = vmul.f32 %v4495, %v4435
      %v4536 = vmul.f32 %v4498, %v4435
      %v4537 = vmul.f32 %v4501, %v4435
      %v4538 = vmul.f32 %v4504, %v4435
      %v4539 = vmul.f32 %v4507, %v4435
      %v4540 = vmul.f32 %v4510, %v4435
      %v4541 = vmul.f32 %v4513, %v4435
      %v4542 = vmul.f32 %v4516, %v4435
      %v4543 = vmul.f32 %v4519, %v4435
      %v4544 = vmul.f32 %v4522, %v4435
      %v4545 = vmul.f32 %v4525, %v4435
      %v4546 = vmul.f32 %v4528, %v4435
      %v4547 = vmul.f32 %v4531, %v4435
      %v4548 = vadd.f32 %v4532, 1e-05
      %v4549 = vadd.f32 %v4533, 1e-05
      %v4550 = vadd.f32 %v4534, 1e-05
      %v4551 = vadd.f32 %v4535, 1e-05
      %v4552 = vadd.f32 %v4536, 1e-05
      %v4553 = vadd.f32 %v4537, 1e-05
      %v4554 = vadd.f32 %v4538, 1e-05
      %v4555 = vadd.f32 %v4539, 1e-05
      %v4556 = vadd.f32 %v4540, 1e-05
      %v4557 = vadd.f32 %v4541, 1e-05
      %v4558 = vadd.f32 %v4542, 1e-05
      %v4559 = vadd.f32 %v4543, 1e-05
      %v4560 = vadd.f32 %v4544, 1e-05
      %v4561 = vadd.f32 %v4545, 1e-05
      %v4562 = vadd.f32 %v4546, 1e-05
      %v4563 = vadd.f32 %v4547, 1e-05
      %v4564 = vrsqrt.pop %v4548
      %v4565 = vrsqrt.pop %v4549
      %v4566 = vrsqrt.pop %v4550
      %v4567 = vrsqrt.pop %v4551
      %v4568 = vrsqrt.pop %v4552
      %v4569 = vrsqrt.pop %v4553
      %v4570 = vrsqrt.pop %v4554
      %v4571 = vrsqrt.pop %v4555
      %v4572 = vrsqrt.pop %v4556
      %v4573 = vrsqrt.pop %v4557
      %v4574 = vrsqrt.pop %v4558
      %v4575 = vrsqrt.pop %v4559
      %v4576 = vrsqrt.pop %v4560
      %v4577 = vrsqrt.pop %v4561
      %v4578 = vrsqrt.pop %v4562
      %v4579 = vrsqrt.pop %v4563
      %v4580 = vmul.f32 %v4452, %v4564
      %v4581 = vmul.f32 %v4453, %v4565
      %v4582 = vmul.f32 %v4454, %v4566
      %v4583 = vmul.f32 %v4455, %v4567
      %v4584 = vmul.f32 %v4456, %v4568
      %v4585 = vmul.f32 %v4457, %v4569
      %v4586 = vmul.f32 %v4458, %v4570
      %v4587 = vmul.f32 %v4459, %v4571
      %v4588 = vmul.f32 %v4460, %v4572
      %v4589 = vmul.f32 %v4461, %v4573
      %v4590 = vmul.f32 %v4462, %v4574
      %v4591 = vmul.f32 %v4463, %v4575
      %v4592 = vmul.f32 %v4464, %v4576
      %v4593 = vmul.f32 %v4465, %v4577
      %v4594 = vmul.f32 %v4466, %v4578
      %v4595 = vmul.f32 %v4467, %v4579
      %v4597 = vlaneseq
      %v4598 = vshrl.u32 %v4597, 7
      %v4599 = vsub.s32 0, %v4598
      %v4600 = vrot.slane %v768, %v4599
      %v4602 = vmul.f32 %v4580, %v4600
      %v4603 = vmul.f32 %v4581, %v4600
      %v4604 = vmul.f32 %v4582, %v4600
      %v4605 = vmul.f32 %v4583, %v4600
      %v4606 = vmul.f32 %v4584, %v4600
      %v4607 = vmul.f32 %v4585, %v4600
      %v4608 = vmul.f32 %v4586, %v4600
      %v4609 = vmul.f32 %v4587, %v4600
      %v4610 = vmul.f32 %v4588, %v4600
      %v4611 = vmul.f32 %v4589, %v4600
      %v4612 = vmul.f32 %v4590, %v4600
      %v4613 = vmul.f32 %v4591, %v4600
      %v4614 = vmul.f32 %v4592, %v4600
      %v4615 = vmul.f32 %v4593, %v4600
      %v4616 = vmul.f32 %v4594, %v4600
      %v4617 = vmul.f32 %v4595, %v4600
      %v4619 = vlaneseq
      %v4620 = vshrl.u32 %v4619, 7
      %v4621 = vsub.s32 0, %v4620
      %v4622 = vrot.slane %v769, %v4621
      %v4624 = vadd.f32 %v4602, %v4622
      %v4625 = vadd.f32 %v4603, %v4622
      %v4626 = vadd.f32 %v4604, %v4622
      %v4627 = vadd.f32 %v4605, %v4622
      %v4628 = vadd.f32 %v4606, %v4622
      %v4629 = vadd.f32 %v4607, %v4622
      %v4630 = vadd.f32 %v4608, %v4622
      %v4631 = vadd.f32 %v4609, %v4622
      %v4632 = vadd.f32 %v4610, %v4622
      %v4633 = vadd.f32 %v4611, %v4622
      %v4634 = vadd.f32 %v4612, %v4622
      %v4635 = vadd.f32 %v4613, %v4622
      %v4636 = vadd.f32 %v4614, %v4622
      %v4637 = vadd.f32 %v4615, %v4622
      %v4638 = vadd.f32 %v4616, %v4622
      %v4639 = vadd.f32 %v4617, %v4622
      %v4641 = vlaneseq
      %v4642 = vshrl.u32 %v4641, 7
      %v4643 = vsub.s32 0, %v4642
      %v4644 = vrot.slane %v774, %v4643
      %v4647 = vsel %vm792, %v4624, 0
      %v4650 = vsel %vm792, %v4625, 0
      %v4653 = vsel %vm792, %v4626, 0
      %v4656 = vsel %vm792, %v4627, 0
      %v4659 = vsel %vm792, %v4628, 0
      %v4662 = vsel %vm792, %v4629, 0
      %v4665 = vsel %vm792, %v4630, 0
      %v4668 = vsel %vm792, %v4631, 0
      %v4671 = vsel %vm792, %v4632, 0
      %v4674 = vsel %vm792, %v4633, 0
      %v4677 = vsel %vm792, %v4634, 0
      %v4680 = vsel %vm792, %v4635, 0
      %v4683 = vsel %vm792, %v4636, 0
      %v4686 = vsel %vm792, %v4637, 0
      %v4689 = vsel %vm792, %v4638, 0
      %v4692 = vsel %vm792, %v4639, 0
      %4694 = vmatprep.subr.mxu0 0.0
      %4695 = vmatpush1.msra.mxu0 %v770
      %4696 = vmatprep.subr.mxu0 0.0
      %4697 = vmatpush1.msra.mxu0 %v771
      %4698 = vmatprep.subr.mxu0 0.0
      %4699 = vmatpush1.msra.mxu0 %v772
      %4700 = vmatprep.subr.mxu0 0.0
      %4701 = vmatpush1.msra.mxu0 %v773
      %4702 = vmatprep.subr.mxu0 0.0
      %4703 = vmatpush1.msra.mxu0 0.0
      %4704 = vmatprep.subr.mxu0 0.0
      %4705 = vmatpush1.msra.mxu0 0.0
      %4706 = vmatprep.subr.mxu0 0.0
      %4707 = vmatpush1.msra.mxu0 0.0
      %4708 = vmatprep.subr.mxu0 0.0
      %4709 = vmatpush1.msra.mxu0 0.0
      %4710 = vmatprep.subr.mxu0 0.0
      %4711 = vmatpush1.msra.mxu0 0.0
      %4712 = vmatprep.subr.mxu0 0.0
      %4713 = vmatpush1.msra.mxu0 0.0
      %4714 = vmatprep.subr.mxu0 0.0
      %4715 = vmatpush1.msra.mxu0 0.0
      %4716 = vmatprep.subr.mxu0 0.0
      %4717 = vmatpush1.msra.mxu0 0.0
      %4718 = vmatprep.subr.mxu0 0.0
      %4719 = vmatpush1.msra.mxu0 0.0
      %4720 = vmatprep.subr.mxu0 0.0
      %4721 = vmatpush1.msra.mxu0 0.0
      %4722 = vmatprep.subr.mxu0 0.0
      %4723 = vmatpush1.msra.mxu0 0.0
      %4724 = vmatprep.subr.mxu0 0.0
      %4725 = vmatpush1.msra.mxu0 0.0
      %4726 = vmatprep.subr.mxu0 0.0
      %4727 = vmatpush1.msra.mxu0 0.0
      %4728 = vmatprep.subr.mxu0 0.0
      %4729 = vmatpush1.msra.mxu0 0.0
      %4730 = vmatprep.subr.mxu0 0.0
      %4731 = vmatpush1.msra.mxu0 0.0
      %4732 = vmatprep.subr.mxu0 0.0
      %4733 = vmatpush1.msra.mxu0 0.0
      %4734 = vmatprep.subr.mxu0 0.0
      %4735 = vmatpush1.msra.mxu0 0.0
      %4736 = vmatprep.subr.mxu0 0.0
      %4737 = vmatpush1.msra.mxu0 0.0
      %4738 = vmatprep.subr.mxu0 0.0
      %4739 = vmatpush1.msra.mxu0 0.0
      %4740 = vmatprep.subr.mxu0 0.0
      %4741 = vmatpush1.msra.mxu0 0.0
      %4742 = vmatprep.subr.mxu0 0.0
      %4743 = vmatpush1.msra.mxu0 0.0
      %4744 = vmatprep.subr.mxu0 0.0
      %4745 = vmatpush1.msra.mxu0 0.0
      %4746 = vmatprep.subr.mxu0 0.0
      %4747 = vmatpush1.msra.mxu0 0.0
      %4748 = vmatprep.subr.mxu0 0.0
      %4749 = vmatpush1.msra.mxu0 0.0
      %4750 = vmatprep.subr.mxu0 0.0
      %4751 = vmatpush1.msra.mxu0 0.0
      %4752 = vmatprep.subr.mxu0 0.0
      %4753 = vmatpush1.msra.mxu0 0.0
      %4754 = vmatprep.subr.mxu0 0.0
      %4755 = vmatpush1.msra.mxu0 0.0
      %4756 = vmatprep.subr.mxu0 0.0
      %4757 = vmatpush1.msra.mxu0 0.0
      %4758 = vmatprep.mubr.f32.mxu0 0.0
      %4759 = vmatmul.mubr.f32.gmra.mrb[0].mxu0 %v4647
      %v4760 = vpop.f32.mrb[0].mxu0
      %v4761 = vadd.f32 %v4644, %v4760
      %v4762 = vpop.f32.mrb[0].mxu0
      %4763 = vmatprep.mubr.f32.mxu0 0.0
      %4764 = vmatmul.mubr.f32.gmra.mrb[0].mxu0 %v4650
      %v4765 = vpop.f32.mrb[0].mxu0
      %v4766 = vadd.f32 %v4644, %v4765
      %v4767 = vpop.f32.mrb[0].mxu0
      %4768 = vmatprep.mubr.f32.mxu0 0.0
      %4769 = vmatmul.mubr.f32.gmra.mrb[0].mxu0 %v4653
      %v4770 = vpop.f32.mrb[0].mxu0
      %v4771 = vadd.f32 %v4644, %v4770
      %v4772 = vpop.f32.mrb[0].mxu0
      %4773 = vmatprep.mubr.f32.mxu0 0.0
      %4774 = vmatmul.mubr.f32.gmra.mrb[0].mxu0 %v4656
      %v4775 = vpop.f32.mrb[0].mxu0
      %v4776 = vadd.f32 %v4644, %v4775
      %v4777 = vpop.f32.mrb[0].mxu0
      %4778 = vmatprep.mubr.f32.mxu0 0.0
      %4779 = vmatmul.mubr.f32.gmra.mrb[0].mxu0 %v4659
      %v4780 = vpop.f32.mrb[0].mxu0
      %v4781 = vadd.f32 %v4644, %v4780
      %v4782 = vpop.f32.mrb[0].mxu0
      %4783 = vmatprep.mubr.f32.mxu0 0.0
      %4784 = vmatmul.mubr.f32.gmra.mrb[0].mxu0 %v4662
      %v4785 = vpop.f32.mrb[0].mxu0
      %v4786 = vadd.f32 %v4644, %v4785
      %v4787 = vpop.f32.mrb[0].mxu0
      %4788 = vmatprep.mubr.f32.mxu0 0.0
      %4789 = vmatmul.mubr.f32.gmra.mrb[0].mxu0 %v4665
      %v4790 = vpop.f32.mrb[0].mxu0
      %v4791 = vadd.f32 %v4644, %v4790
      %v4792 = vpop.f32.mrb[0].mxu0
      %4793 = vmatprep.mubr.f32.mxu0 0.0
      %4794 = vmatmul.mubr.f32.gmra.mrb[0].mxu0 %v4668
      %v4795 = vpop.f32.mrb[0].mxu0
      %v4796 = vadd.f32 %v4644, %v4795
      %v4797 = vpop.f32.mrb[0].mxu0
      %4798 = vmatprep.mubr.f32.mxu0 0.0
      %4799 = vmatmul.mubr.f32.gmra.mrb[0].mxu0 %v4671
      %v4800 = vpop.f32.mrb[0].mxu0
      %v4801 = vadd.f32 %v4644, %v4800
      %v4802 = vpop.f32.mrb[0].mxu0
      %4803 = vmatprep.mubr.f32.mxu0 0.0
      %4804 = vmatmul.mubr.f32.gmra.mrb[0].mxu0 %v4674
      %v4805 = vpop.f32.mrb[0].mxu0
      %v4806 = vadd.f32 %v4644, %v4805
      %v4807 = vpop.f32.mrb[0].mxu0
      %4808 = vmatprep.mubr.f32.mxu0 0.0
      %4809 = vmatmul.mubr.f32.gmra.mrb[0].mxu0 %v4677
      %v4810 = vpop.f32.mrb[0].mxu0
      %v4811 = vadd.f32 %v4644, %v4810
      %v4812 = vpop.f32.mrb[0].mxu0
      %4813 = vmatprep.mubr.f32.mxu0 0.0
      %4814 = vmatmul.mubr.f32.gmra.mrb[0].mxu0 %v4680
      %v4815 = vpop.f32.mrb[0].mxu0
      %v4816 = vadd.f32 %v4644, %v4815
      %v4817 = vpop.f32.mrb[0].mxu0
      %4818 = vmatprep.mubr.f32.mxu0 0.0
      %4819 = vmatmul.mubr.f32.gmra.mrb[0].mxu0 %v4683
      %v4820 = vpop.f32.mrb[0].mxu0
      %v4821 = vadd.f32 %v4644, %v4820
      %v4822 = vpop.f32.mrb[0].mxu0
      %4823 = vmatprep.mubr.f32.mxu0 0.0
      %4824 = vmatmul.mubr.f32.gmra.mrb[0].mxu0 %v4686
      %v4825 = vpop.f32.mrb[0].mxu0
      %v4826 = vadd.f32 %v4644, %v4825
      %v4827 = vpop.f32.mrb[0].mxu0
      %4828 = vmatprep.mubr.f32.mxu0 0.0
      %4829 = vmatmul.mubr.f32.gmra.mrb[0].mxu0 %v4689
      %v4830 = vpop.f32.mrb[0].mxu0
      %v4831 = vadd.f32 %v4644, %v4830
      %v4832 = vpop.f32.mrb[0].mxu0
      %4833 = vmatprep.mubr.f32.mxu0 0.0
      %4834 = vmatmul.mubr.f32.gmra.mrb[0].mxu0 %v4692
      %v4835 = vpop.f32.mrb[0].mxu0
      %v4836 = vadd.f32 %v4644, %v4835
      %v4837 = vpop.f32.mrb[0].mxu0
      %4838 = vdwg.mxu0
      %v4839 = vmax.f32 %v4761, 0.0
      %v4840 = vmax.f32 %v4766, 0.0
      %v4841 = vmax.f32 %v4771, 0.0
      %v4842 = vmax.f32 %v4776, 0.0
      %v4843 = vmax.f32 %v4781, 0.0
      %v4844 = vmax.f32 %v4786, 0.0
      %v4845 = vmax.f32 %v4791, 0.0
      %v4846 = vmax.f32 %v4796, 0.0
      %v4847 = vmax.f32 %v4801, 0.0
      %v4848 = vmax.f32 %v4806, 0.0
      %v4849 = vmax.f32 %v4811, 0.0
      %v4850 = vmax.f32 %v4816, 0.0
      %v4851 = vmax.f32 %v4821, 0.0
      %v4852 = vmax.f32 %v4826, 0.0
      %v4853 = vmax.f32 %v4831, 0.0
      %v4854 = vmax.f32 %v4836, 0.0
      %v4856 = vlaneseq
      %v4857 = vshrl.u32 %v4856, 7
      %v4858 = vsub.s32 0, %v4857
      %v4859 = vrot.slane %v783, %v4858
      %vm4861 = vcmask 523264
      %v4863 = vsel %vm4861, %v4839, 0
      %v4866 = vsel %vm4861, %v4840, 0
      %v4869 = vsel %vm4861, %v4841, 0
      %v4872 = vsel %vm4861, %v4842, 0
      %v4875 = vsel %vm4861, %v4843, 0
      %v4878 = vsel %vm4861, %v4844, 0
      %v4881 = vsel %vm4861, %v4845, 0
      %v4884 = vsel %vm4861, %v4846, 0
      %v4887 = vsel %vm4861, %v4847, 0
      %v4890 = vsel %vm4861, %v4848, 0
      %v4893 = vsel %vm4861, %v4849, 0
      %v4896 = vsel %vm4861, %v4850, 0
      %v4899 = vsel %vm4861, %v4851, 0
      %v4902 = vsel %vm4861, %v4852, 0
      %v4905 = vsel %vm4861, %v4853, 0
      %v4908 = vsel %vm4861, %v4854, 0
      %4910 = vmatprep.subr.mxu0 0.0
      %4911 = vmatpush1.msra.mxu0 %v775
      %4912 = vmatprep.subr.mxu0 0.0
      %4913 = vmatpush1.msra.mxu0 %v776
      %4914 = vmatprep.subr.mxu0 0.0
      %4915 = vmatpush1.msra.mxu0 %v777
      %4916 = vmatprep.subr.mxu0 0.0
      %4917 = vmatpush1.msra.mxu0 %v778
      %4918 = vmatprep.subr.mxu0 0.0
      %4919 = vmatpush1.msra.mxu0 %v779
      %4920 = vmatprep.subr.mxu0 0.0
      %4921 = vmatpush1.msra.mxu0 %v780
      %4922 = vmatprep.subr.mxu0 0.0
      %4923 = vmatpush1.msra.mxu0 %v781
      %4924 = vmatprep.subr.mxu0 0.0
      %4925 = vmatpush1.msra.mxu0 %v782
      %4926 = vmatprep.subr.mxu0 0.0
      %4927 = vmatpush1.msra.mxu0 0.0
      %4928 = vmatprep.subr.mxu0 0.0
      %4929 = vmatpush1.msra.mxu0 0.0
      %4930 = vmatprep.subr.mxu0 0.0
      %4931 = vmatpush1.msra.mxu0 0.0
      %4932 = vmatprep.subr.mxu0 0.0
      %4933 = vmatpush1.msra.mxu0 0.0
      %4934 = vmatprep.subr.mxu0 0.0
      %4935 = vmatpush1.msra.mxu0 0.0
      %4936 = vmatprep.subr.mxu0 0.0
      %4937 = vmatpush1.msra.mxu0 0.0
      %4938 = vmatprep.subr.mxu0 0.0
      %4939 = vmatpush1.msra.mxu0 0.0
      %4940 = vmatprep.subr.mxu0 0.0
      %4941 = vmatpush1.msra.mxu0 0.0
      %4942 = vmatprep.subr.mxu0 0.0
      %4943 = vmatpush1.msra.mxu0 0.0
      %4944 = vmatprep.subr.mxu0 0.0
      %4945 = vmatpush1.msra.mxu0 0.0
      %4946 = vmatprep.subr.mxu0 0.0
      %4947 = vmatpush1.msra.mxu0 0.0
      %4948 = vmatprep.subr.mxu0 0.0
      %4949 = vmatpush1.msra.mxu0 0.0
      %4950 = vmatprep.subr.mxu0 0.0
      %4951 = vmatpush1.msra.mxu0 0.0
      %4952 = vmatprep.subr.mxu0 0.0
      %4953 = vmatpush1.msra.mxu0 0.0
      %4954 = vmatprep.subr.mxu0 0.0
      %4955 = vmatpush1.msra.mxu0 0.0
      %4956 = vmatprep.subr.mxu0 0.0
      %4957 = vmatpush1.msra.mxu0 0.0
      %4958 = vmatprep.subr.mxu0 0.0
      %4959 = vmatpush1.msra.mxu0 0.0
      %4960 = vmatprep.subr.mxu0 0.0
      %4961 = vmatpush1.msra.mxu0 0.0
      %4962 = vmatprep.subr.mxu0 0.0
      %4963 = vmatpush1.msra.mxu0 0.0
      %4964 = vmatprep.subr.mxu0 0.0
      %4965 = vmatpush1.msra.mxu0 0.0
      %4966 = vmatprep.subr.mxu0 0.0
      %4967 = vmatpush1.msra.mxu0 0.0
      %4968 = vmatprep.subr.mxu0 0.0
      %4969 = vmatpush1.msra.mxu0 0.0
      %4970 = vmatprep.subr.mxu0 0.0
      %4971 = vmatpush1.msra.mxu0 0.0
      %4972 = vmatprep.subr.mxu0 0.0
      %4973 = vmatpush1.msra.mxu0 0.0
      %4974 = vmatprep.mubr.f32.mxu0 0.0
      %4975 = vmatmul.mubr.f32.gmra.mrb[0].mxu0 %v4863
      %v4976 = vpop.f32.mrb[0].mxu0
      %v4977 = vadd.f32 %v4859, %v4976
      %v4978 = vpop.f32.mrb[0].mxu0
      %4979 = vmatprep.mubr.f32.mxu0 0.0
      %4980 = vmatmul.mubr.f32.gmra.mrb[0].mxu0 %v4866
      %v4981 = vpop.f32.mrb[0].mxu0
      %v4982 = vadd.f32 %v4859, %v4981
      %v4983 = vpop.f32.mrb[0].mxu0
      %4984 = vmatprep.mubr.f32.mxu0 0.0
      %4985 = vmatmul.mubr.f32.gmra.mrb[0].mxu0 %v4869
      %v4986 = vpop.f32.mrb[0].mxu0
      %v4987 = vadd.f32 %v4859, %v4986
      %v4988 = vpop.f32.mrb[0].mxu0
      %4989 = vmatprep.mubr.f32.mxu0 0.0
      %4990 = vmatmul.mubr.f32.gmra.mrb[0].mxu0 %v4872
      %v4991 = vpop.f32.mrb[0].mxu0
      %v4992 = vadd.f32 %v4859, %v4991
      %v4993 = vpop.f32.mrb[0].mxu0
      %4994 = vmatprep.mubr.f32.mxu0 0.0
      %4995 = vmatmul.mubr.f32.gmra.mrb[0].mxu0 %v4875
      %v4996 = vpop.f32.mrb[0].mxu0
      %v4997 = vadd.f32 %v4859, %v4996
      %v4998 = vpop.f32.mrb[0].mxu0
      %4999 = vmatprep.mubr.f32.mxu0 0.0
      %5000 = vmatmul.mubr.f32.gmra.mrb[0].mxu0 %v4878
      %v5001 = vpop.f32.mrb[0].mxu0
      %v5002 = vadd.f32 %v4859, %v5001
      %v5003 = vpop.f32.mrb[0].mxu0
      %5004 = vmatprep.mubr.f32.mxu0 0.0
      %5005 = vmatmul.mubr.f32.gmra.mrb[0].mxu0 %v4881
      %v5006 = vpop.f32.mrb[0].mxu0
      %v5007 = vadd.f32 %v4859, %v5006
      %v5008 = vpop.f32.mrb[0].mxu0
      %5009 = vmatprep.mubr.f32.mxu0 0.0
      %5010 = vmatmul.mubr.f32.gmra.mrb[0].mxu0 %v4884
      %v5011 = vpop.f32.mrb[0].mxu0
      %v5012 = vadd.f32 %v4859, %v5011
      %v5013 = vpop.f32.mrb[0].mxu0
      %5014 = vmatprep.mubr.f32.mxu0 0.0
      %5015 = vmatmul.mubr.f32.gmra.mrb[0].mxu0 %v4887
      %v5016 = vpop.f32.mrb[0].mxu0
      %v5017 = vadd.f32 %v4859, %v5016
      %v5018 = vpop.f32.mrb[0].mxu0
      %5019 = vmatprep.mubr.f32.mxu0 0.0
      %5020 = vmatmul.mubr.f32.gmra.mrb[0].mxu0 %v4890
      %v5021 = vpop.f32.mrb[0].mxu0
      %v5022 = vadd.f32 %v4859, %v5021
      %v5023 = vpop.f32.mrb[0].mxu0
      %5024 = vmatprep.mubr.f32.mxu0 0.0
      %5025 = vmatmul.mubr.f32.gmra.mrb[0].mxu0 %v4893
      %v5026 = vpop.f32.mrb[0].mxu0
      %v5027 = vadd.f32 %v4859, %v5026
      %v5028 = vpop.f32.mrb[0].mxu0
      %5029 = vmatprep.mubr.f32.mxu0 0.0
      %5030 = vmatmul.mubr.f32.gmra.mrb[0].mxu0 %v4896
      %v5031 = vpop.f32.mrb[0].mxu0
      %v5032 = vadd.f32 %v4859, %v5031
      %v5033 = vpop.f32.mrb[0].mxu0
      %5034 = vmatprep.mubr.f32.mxu0 0.0
      %5035 = vmatmul.mubr.f32.gmra.mrb[0].mxu0 %v4899
      %v5036 = vpop.f32.mrb[0].mxu0
      %v5037 = vadd.f32 %v4859, %v5036
      %v5038 = vpop.f32.mrb[0].mxu0
      %5039 = vmatprep.mubr.f32.mxu0 0.0
      %5040 = vmatmul.mubr.f32.gmra.mrb[0].mxu0 %v4902
      %v5041 = vpop.f32.mrb[0].mxu0
      %v5042 = vadd.f32 %v4859, %v5041
      %v5043 = vpop.f32.mrb[0].mxu0
      %5044 = vmatprep.mubr.f32.mxu0 0.0
      %5045 = vmatmul.mubr.f32.gmra.mrb[0].mxu0 %v4905
      %v5046 = vpop.f32.mrb[0].mxu0
      %v5047 = vadd.f32 %v4859, %v5046
      %v5048 = vpop.f32.mrb[0].mxu0
      %5049 = vmatprep.mubr.f32.mxu0 0.0
      %5050 = vmatmul.mubr.f32.gmra.mrb[0].mxu0 %v4908
      %v5051 = vpop.f32.mrb[0].mxu0
      %v5052 = vadd.f32 %v4859, %v5051
      %v5053 = vpop.f32.mrb[0].mxu0
      %5054 = vdwg.mxu0
      %v5055 = vadd.f32 %v4624, %v4977
      %v5056 = vadd.f32 %v4625, %v4982
      %v5057 = vadd.f32 %v4626, %v4987
      %v5058 = vadd.f32 %v4627, %v4992
      %v5059 = vadd.f32 %v4628, %v4997
      %v5060 = vadd.f32 %v4629, %v5002
      %v5061 = vadd.f32 %v4630, %v5007
      %v5062 = vadd.f32 %v4631, %v5012
      %v5063 = vadd.f32 %v4632, %v5017
      %v5064 = vadd.f32 %v4633, %v5022
      %v5065 = vadd.f32 %v4634, %v5027
      %v5066 = vadd.f32 %v4635, %v5032
      %v5067 = vadd.f32 %v4636, %v5037
      %v5068 = vadd.f32 %v4637, %v5042
      %v5069 = vadd.f32 %v4638, %v5047
      %v5070 = vadd.f32 %v4639, %v5052
      %v5071 = vsel %vm792, %v5055, 0.0
      %5072 = vadd.xlane.f32.xlu0 %v5071
      %v5073 = vpop.xlane.xlu0 %5072
      %v5074 = vsel %vm792, %v5056, 0.0
      %5075 = vadd.xlane.f32.xlu0 %v5074
      %v5076 = vpop.xlane.xlu0 %5075
      %v5077 = vsel %vm792, %v5057, 0.0
      %5078 = vadd.xlane.f32.xlu0 %v5077
      %v5079 = vpop.xlane.xlu0 %5078
      %v5080 = vsel %vm792, %v5058, 0.0
      %5081 = vadd.xlane.f32.xlu0 %v5080
      %v5082 = vpop.xlane.xlu0 %5081
      %v5083 = vsel %vm792, %v5059, 0.0
      %5084 = vadd.xlane.f32.xlu0 %v5083
      %v5085 = vpop.xlane.xlu0 %5084
      %v5086 = vsel %vm792, %v5060, 0.0
      %5087 = vadd.xlane.f32.xlu0 %v5086
      %v5088 = vpop.xlane.xlu0 %5087
      %v5089 = vsel %vm792, %v5061, 0.0
      %5090 = vadd.xlane.f32.xlu0 %v5089
      %v5091 = vpop.xlane.xlu0 %5090
      %v5092 = vsel %vm792, %v5062, 0.0
      %5093 = vadd.xlane.f32.xlu0 %v5092
      %v5094 = vpop.xlane.xlu0 %5093
      %v5095 = vsel %vm792, %v5063, 0.0
      %5096 = vadd.xlane.f32.xlu0 %v5095
      %v5097 = vpop.xlane.xlu0 %5096
      %v5098 = vsel %vm792, %v5064, 0.0
      %5099 = vadd.xlane.f32.xlu0 %v5098
      %v5100 = vpop.xlane.xlu0 %5099
      %v5101 = vsel %vm792, %v5065, 0.0
      %5102 = vadd.xlane.f32.xlu0 %v5101
      %v5103 = vpop.xlane.xlu0 %5102
      %v5104 = vsel %vm792, %v5066, 0.0
      %5105 = vadd.xlane.f32.xlu0 %v5104
      %v5106 = vpop.xlane.xlu0 %5105
      %v5107 = vsel %vm792, %v5067, 0.0
      %5108 = vadd.xlane.f32.xlu0 %v5107
      %v5109 = vpop.xlane.xlu0 %5108
      %v5110 = vsel %vm792, %v5068, 0.0
      %5111 = vadd.xlane.f32.xlu0 %v5110
      %v5112 = vpop.xlane.xlu0 %5111
      %v5113 = vsel %vm792, %v5069, 0.0
      %5114 = vadd.xlane.f32.xlu0 %v5113
      %v5115 = vpop.xlane.xlu0 %5114
      %v5116 = vsel %vm792, %v5070, 0.0
      %5117 = vadd.xlane.f32.xlu0 %v5116
      %v5118 = vpop.xlane.xlu0 %5117
      %v5119 = vmul.f32 %v5073, %v4435
      %v5120 = vmul.f32 %v5076, %v4435
      %v5121 = vmul.f32 %v5079, %v4435
      %v5122 = vmul.f32 %v5082, %v4435
      %v5123 = vmul.f32 %v5085, %v4435
      %v5124 = vmul.f32 %v5088, %v4435
      %v5125 = vmul.f32 %v5091, %v4435
      %v5126 = vmul.f32 %v5094, %v4435
      %v5127 = vmul.f32 %v5097, %v4435
      %v5128 = vmul.f32 %v5100, %v4435
      %v5129 = vmul.f32 %v5103, %v4435
      %v5130 = vmul.f32 %v5106, %v4435
      %v5131 = vmul.f32 %v5109, %v4435
      %v5132 = vmul.f32 %v5112, %v4435
      %v5133 = vmul.f32 %v5115, %v4435
      %v5134 = vmul.f32 %v5118, %v4435
      %v5135 = vsub.f32 %v5055, %v5119
      %v5136 = vsub.f32 %v5056, %v5120
      %v5137 = vsub.f32 %v5057, %v5121
      %v5138 = vsub.f32 %v5058, %v5122
      %v5139 = vsub.f32 %v5059, %v5123
      %v5140 = vsub.f32 %v5060, %v5124
      %v5141 = vsub.f32 %v5061, %v5125
      %v5142 = vsub.f32 %v5062, %v5126
      %v5143 = vsub.f32 %v5063, %v5127
      %v5144 = vsub.f32 %v5064, %v5128
      %v5145 = vsub.f32 %v5065, %v5129
      %v5146 = vsub.f32 %v5066, %v5130
      %v5147 = vsub.f32 %v5067, %v5131
      %v5148 = vsub.f32 %v5068, %v5132
      %v5149 = vsub.f32 %v5069, %v5133
      %v5150 = vsub.f32 %v5070, %v5134
      %v5151 = vmul.f32 %v5135, %v5135
      %v5152 = vmul.f32 %v5136, %v5136
      %v5153 = vmul.f32 %v5137, %v5137
      %v5154 = vmul.f32 %v5138, %v5138
      %v5155 = vmul.f32 %v5139, %v5139
      %v5156 = vmul.f32 %v5140, %v5140
      %v5157 = vmul.f32 %v5141, %v5141
      %v5158 = vmul.f32 %v5142, %v5142
      %v5159 = vmul.f32 %v5143, %v5143
      %v5160 = vmul.f32 %v5144, %v5144
      %v5161 = vmul.f32 %v5145, %v5145
      %v5162 = vmul.f32 %v5146, %v5146
      %v5163 = vmul.f32 %v5147, %v5147
      %v5164 = vmul.f32 %v5148, %v5148
      %v5165 = vmul.f32 %v5149, %v5149
      %v5166 = vmul.f32 %v5150, %v5150
      %v5167 = vsel %vm792, %v5151, 0.0
      %5168 = vadd.xlane.f32.xlu0 %v5167
      %v5169 = vpop.xlane.xlu0 %5168
      %v5170 = vsel %vm792, %v5152, 0.0
      %5171 = vadd.xlane.f32.xlu0 %v5170
      %v5172 = vpop.xlane.xlu0 %5171
      %v5173 = vsel %vm792, %v5153, 0.0
      %5174 = vadd.xlane.f32.xlu0 %v5173
      %v5175 = vpop.xlane.xlu0 %5174
      %v5176 = vsel %vm792, %v5154, 0.0
      %5177 = vadd.xlane.f32.xlu0 %v5176
      %v5178 = vpop.xlane.xlu0 %5177
      %v5179 = vsel %vm792, %v5155, 0.0
      %5180 = vadd.xlane.f32.xlu0 %v5179
      %v5181 = vpop.xlane.xlu0 %5180
      %v5182 = vsel %vm792, %v5156, 0.0
      %5183 = vadd.xlane.f32.xlu0 %v5182
      %v5184 = vpop.xlane.xlu0 %5183
      %v5185 = vsel %vm792, %v5157, 0.0
      %5186 = vadd.xlane.f32.xlu0 %v5185
      %v5187 = vpop.xlane.xlu0 %5186
      %v5188 = vsel %vm792, %v5158, 0.0
      %5189 = vadd.xlane.f32.xlu0 %v5188
      %v5190 = vpop.xlane.xlu0 %5189
      %v5191 = vsel %vm792, %v5159, 0.0
      %5192 = vadd.xlane.f32.xlu0 %v5191
      %v5193 = vpop.xlane.xlu0 %5192
      %v5194 = vsel %vm792, %v5160, 0.0
      %5195 = vadd.xlane.f32.xlu0 %v5194
      %v5196 = vpop.xlane.xlu0 %5195
      %v5197 = vsel %vm792, %v5161, 0.0
      %5198 = vadd.xlane.f32.xlu0 %v5197
      %v5199 = vpop.xlane.xlu0 %5198
      %v5200 = vsel %vm792, %v5162, 0.0
      %5201 = vadd.xlane.f32.xlu0 %v5200
      %v5202 = vpop.xlane.xlu0 %5201
      %v5203 = vsel %vm792, %v5163, 0.0
      %5204 = vadd.xlane.f32.xlu0 %v5203
      %v5205 = vpop.xlane.xlu0 %5204
      %v5206 = vsel %vm792, %v5164, 0.0
      %5207 = vadd.xlane.f32.xlu0 %v5206
      %v5208 = vpop.xlane.xlu0 %5207
      %v5209 = vsel %vm792, %v5165, 0.0
      %5210 = vadd.xlane.f32.xlu0 %v5209
      %v5211 = vpop.xlane.xlu0 %5210
      %v5212 = vsel %vm792, %v5166, 0.0
      %5213 = vadd.xlane.f32.xlu0 %v5212
      %v5214 = vpop.xlane.xlu0 %5213
      %v5215 = vmul.f32 %v5169, %v4435
      %v5216 = vmul.f32 %v5172, %v4435
      %v5217 = vmul.f32 %v5175, %v4435
      %v5218 = vmul.f32 %v5178, %v4435
      %v5219 = vmul.f32 %v5181, %v4435
      %v5220 = vmul.f32 %v5184, %v4435
      %v5221 = vmul.f32 %v5187, %v4435
      %v5222 = vmul.f32 %v5190, %v4435
      %v5223 = vmul.f32 %v5193, %v4435
      %v5224 = vmul.f32 %v5196, %v4435
      %v5225 = vmul.f32 %v5199, %v4435
      %v5226 = vmul.f32 %v5202, %v4435
      %v5227 = vmul.f32 %v5205, %v4435
      %v5228 = vmul.f32 %v5208, %v4435
      %v5229 = vmul.f32 %v5211, %v4435
      %v5230 = vmul.f32 %v5214, %v4435
      %v5231 = vadd.f32 %v5215, 1e-05
      %v5232 = vadd.f32 %v5216, 1e-05
      %v5233 = vadd.f32 %v5217, 1e-05
      %v5234 = vadd.f32 %v5218, 1e-05
      %v5235 = vadd.f32 %v5219, 1e-05
      %v5236 = vadd.f32 %v5220, 1e-05
      %v5237 = vadd.f32 %v5221, 1e-05
      %v5238 = vadd.f32 %v5222, 1e-05
      %v5239 = vadd.f32 %v5223, 1e-05
      %v5240 = vadd.f32 %v5224, 1e-05
      %v5241 = vadd.f32 %v5225, 1e-05
      %v5242 = vadd.f32 %v5226, 1e-05
      %v5243 = vadd.f32 %v5227, 1e-05
      %v5244 = vadd.f32 %v5228, 1e-05
      %v5245 = vadd.f32 %v5229, 1e-05
      %v5246 = vadd.f32 %v5230, 1e-05
      %v5247 = vrsqrt.pop %v5231
      %v5248 = vrsqrt.pop %v5232
      %v5249 = vrsqrt.pop %v5233
      %v5250 = vrsqrt.pop %v5234
      %v5251 = vrsqrt.pop %v5235
      %v5252 = vrsqrt.pop %v5236
      %v5253 = vrsqrt.pop %v5237
      %v5254 = vrsqrt.pop %v5238
      %v5255 = vrsqrt.pop %v5239
      %v5256 = vrsqrt.pop %v5240
      %v5257 = vrsqrt.pop %v5241
      %v5258 = vrsqrt.pop %v5242
      %v5259 = vrsqrt.pop %v5243
      %v5260 = vrsqrt.pop %v5244
      %v5261 = vrsqrt.pop %v5245
      %v5262 = vrsqrt.pop %v5246
      %v5263 = vmul.f32 %v5135, %v5247
      %v5264 = vmul.f32 %v5136, %v5248
      %v5265 = vmul.f32 %v5137, %v5249
      %v5266 = vmul.f32 %v5138, %v5250
      %v5267 = vmul.f32 %v5139, %v5251
      %v5268 = vmul.f32 %v5140, %v5252
      %v5269 = vmul.f32 %v5141, %v5253
      %v5270 = vmul.f32 %v5142, %v5254
      %v5271 = vmul.f32 %v5143, %v5255
      %v5272 = vmul.f32 %v5144, %v5256
      %v5273 = vmul.f32 %v5145, %v5257
      %v5274 = vmul.f32 %v5146, %v5258
      %v5275 = vmul.f32 %v5147, %v5259
      %v5276 = vmul.f32 %v5148, %v5260
      %v5277 = vmul.f32 %v5149, %v5261
      %v5278 = vmul.f32 %v5150, %v5262
      %v5280 = vlaneseq
      %v5281 = vshrl.u32 %v5280, 7
      %v5282 = vsub.s32 0, %v5281
      %v5283 = vrot.slane %v784, %v5282
      %v5285 = vmul.f32 %v5263, %v5283
      %v5286 = vmul.f32 %v5264, %v5283
      %v5287 = vmul.f32 %v5265, %v5283
      %v5288 = vmul.f32 %v5266, %v5283
      %v5289 = vmul.f32 %v5267, %v5283
      %v5290 = vmul.f32 %v5268, %v5283
      %v5291 = vmul.f32 %v5269, %v5283
      %v5292 = vmul.f32 %v5270, %v5283
      %v5293 = vmul.f32 %v5271, %v5283
      %v5294 = vmul.f32 %v5272, %v5283
      %v5295 = vmul.f32 %v5273, %v5283
      %v5296 = vmul.f32 %v5274, %v5283
      %v5297 = vmul.f32 %v5275, %v5283
      %v5298 = vmul.f32 %v5276, %v5283
      %v5299 = vmul.f32 %v5277, %v5283
      %v5300 = vmul.f32 %v5278, %v5283
      %v5302 = vlaneseq
      %v5303 = vshrl.u32 %v5302, 7
      %v5304 = vsub.s32 0, %v5303
      %v5305 = vrot.slane %v785, %v5304
      %v5307 = vadd.f32 %v5285, %v5305
      %v5308 = vadd.f32 %v5286, %v5305
      %v5309 = vadd.f32 %v5287, %v5305
      %v5310 = vadd.f32 %v5288, %v5305
      %v5311 = vadd.f32 %v5289, %v5305
      %v5312 = vadd.f32 %v5290, %v5305
      %v5313 = vadd.f32 %v5291, %v5305
      %v5314 = vadd.f32 %v5292, %v5305
      %v5315 = vadd.f32 %v5293, %v5305
      %v5316 = vadd.f32 %v5294, %v5305
      %v5317 = vadd.f32 %v5295, %v5305
      %v5318 = vadd.f32 %v5296, %v5305
      %v5319 = vadd.f32 %v5297, %v5305
      %v5320 = vadd.f32 %v5298, %v5305
      %v5321 = vadd.f32 %v5299, %v5305
      %v5322 = vadd.f32 %v5300, %v5305
      %5323 = vst.msk [vmem:[%s582] sm:$0xff] %vm792, %v5307
      %5324 = vst.msk [vmem:[%s582 + $0x8] sm:$0xff] %vm792, %v5308
      %5325 = vst.msk [vmem:[%s582 + $0x10] sm:$0xff] %vm792, %v5309
      %5326 = vst.msk [vmem:[%s582 + $0x18] sm:$0xff] %vm792, %v5310
      %5327 = vst.msk [vmem:[%s582 + $0x20] sm:$0xff] %vm792, %v5311
      %5328 = vst.msk [vmem:[%s582 + $0x28] sm:$0xff] %vm792, %v5312
      %5329 = vst.msk [vmem:[%s582 + $0x30] sm:$0xff] %vm792, %v5313
      %5330 = vst.msk [vmem:[%s582 + $0x38] sm:$0xff] %vm792, %v5314
      %5331 = vst.msk [vmem:[%s582 + $0x40] sm:$0xff] %vm792, %v5315
      %5332 = vst.msk [vmem:[%s582 + $0x48] sm:$0xff] %vm792, %v5316
      %5333 = vst.msk [vmem:[%s582 + $0x50] sm:$0xff] %vm792, %v5317
      %5334 = vst.msk [vmem:[%s582 + $0x58] sm:$0xff] %vm792, %v5318
      %5335 = vst.msk [vmem:[%s582 + $0x60] sm:$0xff] %vm792, %v5319
      %5336 = vst.msk [vmem:[%s582 + $0x68] sm:$0xff] %vm792, %v5320
      %5337 = vst.msk [vmem:[%s582 + $0x70] sm:$0xff] %vm792, %v5321
      %5338 = vst.msk [vmem:[%s582 + $0x78] sm:$0xff] %vm792, %v5322
      %p5339 = scmp.lt.s32.totalorder %s28, 1
      %s5340 = scalar_select %p5339, %s28, 1
      %s5341 = smul.addr %s5340, 16
      %s5342 = smul.addr %s5341, 8
      %s5343 = scalar_lea.vmem %s17, %s5342
      // Predicated region
      $region89: #{tpu_custom_call.1} parent=87 // pred_check
        %p5344 = pneg %p418
      $region90: #{tpu_custom_call.1} parent=87 // pred_check_branch
        %5346 = sbr.rel (%p5344) target = $region92
      $region91: #{tpu_custom_call.1} parent=87 // pred_region
        _
      $region92: #{tpu_custom_call.1} parent=87 // pred_fallthru
        _
    $region88: #{tpu_custom_call.1} parent=5 // pred_fallthru
      _
    %p5347 = scmp.le.s32.totalorder 2, %s23
    // Predicated region
    $region93: #{tpu_custom_call.1} parent=5 // pred_check
      %p5348 = pneg %p5347
    $region94: #{tpu_custom_call.1} parent=5 // pred_check_branch
      %5350 = sbr.rel (%p5348) target = $region96
    $region95: #{tpu_custom_call.1} parent=5 // pred_region
      %s5351 = ssub.s32 %s23, 2
      // Predicated region
      $region97: #{tpu_custom_call.1} parent=95 // pred_check
        %p5352 = pneg %p424
      $region98: #{tpu_custom_call.1} parent=95 // pred_check_branch
        %5354 = sbr.rel (%p5352) target = $region100
      $region99: #{tpu_custom_call.1} parent=95 // pred_region
        %p5355 = scmp.lt.s32.totalorder %s29, 1
        %s5356 = scalar_select %p5355, %s29, 1
        %s5357 = smul.addr %s5356, 16
        %s5358 = smul.addr %s5357, 8
        %s5359 = scalar_lea.vmem %s17, %s5358
      $region100: #{tpu_custom_call.1} parent=95 // pred_fallthru
        _
    $region96: #{tpu_custom_call.1} parent=5 // pred_fallthru
      _
  $region6: #{tpu_custom_call.1} parent=0 // loop_footer
    %s27 = sadd.s32 1, %s23
  $region7: #{tpu_custom_call.1} parent=0 // loop_footer_branch
    %22 = sbr.rel target = $region3
  $region8: #{tpu_custom_call.1} parent=0 // loop_exit
    _

</llo_original>
